<compile_context>
chip_gen: v6e
topology: v6e:2x2x1
jax: 0.10.0
libtpu: 0.0.40
codegen_flags: <defaults>
</compile_context>

<pallas_src>
import math
from functools import partial

import jax
import jax.numpy as jnp
from jax.experimental import pallas as pl
from jax.experimental.pallas import tpu as pltpu

NEG_INF = -1e9
LN_EPS = 1e-5                       # nn.LayerNorm default
MATMUL_DTYPE = jnp.bfloat16         # MXU operand dtype (weights stored, activations cast)
VMEM_LIMIT = 32 * 1024 * 1024       # explicit scoped-VMEM budget (fits v5e/v6e/v7x)


def _mosaic(dimension_semantics):
    return pltpu.CompilerParams(dimension_semantics=dimension_semantics,
                                vmem_limit_bytes=VMEM_LIMIT)


def _row_tile(M, cap=256):
    """Row tile for (M, D) kernels: multiple-of-8 tile giving >=2 'parallel' grid
    steps (megacore / v7x) when M splits cleanly; capped for VMEM at large M."""
    if M > cap:
        return cap                  # partial last block is masked by Pallas
    if M % 16 == 0:
        return M // 2
    return M


def _round_up(n, m):
    return (n + m - 1) // m * m


# ----------------------------------------------------------------------------
# Fused multi-head-attention block:  LayerNorm(q_x + MHA(q_x, kv_x, kv_x))
# ----------------------------------------------------------------------------
def _mha_block_kernel(qx_ref, kvx_ref, win_ref, bin_ref, wout_ref, bout_ref,
                      mask_ref, kp_ref, g_ref, b_ref, o_ref, attn_sc,
                      *, nhead, eps, fused_qkv):
    D = qx_ref.shape[2]
    dh = D // nhead
    scale = 1.0 / math.sqrt(dh)

    qx = qx_ref[0].astype(jnp.float32)                     # (Lq, D) — also the residual
    win = win_ref[...]                                     # (D, 3D) bf16
    bin_ = bin_ref[0]                                      # (3D,)   f32

    if fused_qkv:
        # self-attention: single fused (Lq, D) x (D, 3D) projection
        qkv = jnp.dot(qx.astype(win.dtype), win,
                      preferred_element_type=jnp.float32) + bin_
        q, k, v = qkv[:, :D], qkv[:, D:2 * D], qkv[:, 2 * D:]
    else:
        kvx = kvx_ref[0]
        q = jnp.dot(qx.astype(win.dtype), win[:, :D],
                    preferred_element_type=jnp.float32) + bin_[:D]
        kv = jnp.dot(kvx.astype(win.dtype), win[:, D:],
                     preferred_element_type=jnp.float32) + bin_[D:]
        k, v = kv[:, :D], kv[:, D:]

    # additive bias built in-kernel: shared (Lq, Lk) mask + per-batch (1, Lk) padding bias
    bias = mask_ref[...] + kp_ref[0]

    for h in range(nhead):                                 # static unroll over heads
        sl = slice(h * dh, (h + 1) * dh)
        qh = (q[:, sl] * scale).astype(win.dtype)
        kh = k[:, sl].astype(win.dtype)
        vh = v[:, sl].astype(win.dtype)
        s = jnp.dot(qh, kh.T, preferred_element_type=jnp.float32) + bias
        s = s - jnp.max(s, axis=-1, keepdims=True)
        p = jnp.exp(s)                                                       # EUP
        p = p * pl.reciprocal(jnp.sum(p, axis=-1, keepdims=True), approx=True)
        attn_sc[:, sl] = jnp.dot(p.astype(win.dtype), vh,
                                 preferred_element_type=jnp.float32)

    wout = wout_ref[...]                                   # (D, D) bf16
    proj = jnp.dot(attn_sc[...].astype(wout.dtype), wout,
                   preferred_element_type=jnp.float32) + bout_ref[0]

    x = qx + proj                                          # residual add (f32, VPU)
    mean = jnp.mean(x, axis=-1, keepdims=True)
    var = jnp.mean(jnp.square(x - mean), axis=-1, keepdims=True)
    y = (x - mean) * jax.lax.rsqrt(var + eps)
    o_ref[0] = (y * g_ref[0] + b_ref[0]).astype(o_ref.dtype)


def mha_block(p, q_x, kv_x, nhead, attn_mask, key_padding_mask, ln_g, ln_b,
              eps=LN_EPS):
    """One pallas_call: LayerNorm(q_x + MultiheadAttention(q_x, kv_x, kv_x)).

    q_x: (B, Lq, D)  (query input, also the residual)
    kv_x: (B, Lk, D)
    attn_mask: additive float (Lq, Lk) or None
    key_padding_mask: bool (B, Lk), True = masked, or None
    """
    B, Lq, D = q_x.shape
    Lk = kv_x.shape[1]
    fused_qkv = q_x is kv_x

    mask = (jnp.zeros((Lq, Lk), jnp.float32) if attn_mask is None
            else attn_mask.astype(jnp.float32))
    if key_padding_mask is None:
        kp_bias = jnp.zeros((B, 1, Lk), jnp.float32)
    else:
        kp_bias = jnp.where(key_padding_mask, NEG_INF, 0.0).astype(jnp.float32)
        kp_bias = kp_bias.reshape(B, 1, Lk)

    return pl.pallas_call(
        partial(_mha_block_kernel, nhead=nhead, eps=eps, fused_qkv=fused_qkv),
        out_shape=jax.ShapeDtypeStruct((B, Lq, D), jnp.float32),
        grid=(B,),
        in_specs=[
            pl.BlockSpec((1, Lq, D), lambda b: (b, 0, 0)),      # query / residual
            pl.BlockSpec((1, Lk, D), lambda b: (b, 0, 0)),      # key/value input
            pl.BlockSpec((D, 3 * D), lambda b: (0, 0)),         # in_proj weight (bf16)
            pl.BlockSpec((1, 3 * D), lambda b: (0, 0)),         # in_proj bias
            pl.BlockSpec((D, D), lambda b: (0, 0)),             # out_proj weight (bf16)
            pl.BlockSpec((1, D), lambda b: (0, 0)),             # out_proj bias
            pl.BlockSpec((Lq, Lk), lambda b: (0, 0)),           # shared additive mask
            pl.BlockSpec((1, 1, Lk), lambda b: (b, 0, 0)),      # per-batch key-padding bias
            pl.BlockSpec((1, D), lambda b: (0, 0)),             # LayerNorm gamma
            pl.BlockSpec((1, D), lambda b: (0, 0)),             # LayerNorm beta
        ],
        out_specs=pl.BlockSpec((1, Lq, D), lambda b: (b, 0, 0)),
        scratch_shapes=[pltpu.VMEM((Lq, D), jnp.float32)],      # concatenated heads
        compiler_params=_mosaic(("parallel",)),
    )(q_x, kv_x, p["in_w"], p["in_b"].reshape(1, 3 * D),
      p["out_w"], p["out_b"].reshape(1, D),
      mask, kp_bias, ln_g.reshape(1, D), ln_b.reshape(1, D))


# ----------------------------------------------------------------------------
# Fused feed-forward block:  LayerNorm(x + Linear2(ReLU(Linear1(x))))
# ----------------------------------------------------------------------------
def _ffn_block_kernel(x_ref, w1_ref, b1_ref, w2_ref, b2_ref, g_ref, b_ref,
                      o_ref, *, eps):
    x = x_ref[...].astype(jnp.float32)                     # (tm, D) — residual
    w1 = w1_ref[...]
    h = jnp.dot(x.astype(w1.dtype), w1,
                preferred_element_type=jnp.float32) + b1_ref[0]
    h = jnp.maximum(h, 0.0)                                # ReLU (f32, VPU)
    w2 = w2_ref[...]
    y = jnp.dot(h.astype(w2.dtype), w2,
                preferred_element_type=jnp.float32) + b2_ref[0]
    z = x + y                                              # residual add
    mean = jnp.mean(z, axis=-1, keepdims=True)
    var = jnp.mean(jnp.square(z - mean), axis=-1, keepdims=True)
    n = (z - mean) * jax.lax.rsqrt(var + eps)
    o_ref[...] = (n * g_ref[0] + b_ref[0]).astype(o_ref.dtype)


def ffn_block(x, w1, b1, w2, b2, g, b, eps=LN_EPS):
    M, D = x.shape
    F = w1.shape[1]
    tm = _row_tile(M)
    return pl.pallas_call(
        partial(_ffn_block_kernel, eps=eps),
        out_shape=jax.ShapeDtypeStruct((M, D), jnp.float32),
        grid=(pl.cdiv(M, tm),),
        in_specs=[
            pl.BlockSpec((tm, D), lambda i: (i, 0)),
            pl.BlockSpec((D, F), lambda i: (0, 0)),
            pl.BlockSpec((1, F), lambda i: (0, 0)),
            pl.BlockSpec((F, D), lambda i: (0, 0)),
            pl.BlockSpec((1, D), lambda i: (0, 0)),
            pl.BlockSpec((1, D), lambda i: (0, 0)),
            pl.BlockSpec((1, D), lambda i: (0, 0)),
        ],
        out_specs=pl.BlockSpec((tm, D), lambda i: (i, 0)),
        compiler_params=_mosaic(("parallel",)),
    )(x, w1, b1.reshape(1, F), w2, b2.reshape(1, D),
      g.reshape(1, D), b.reshape(1, D))


# ----------------------------------------------------------------------------
# Plain LayerNorm (encoder-final norm) and fused LayerNorm+Linear (cls head)
# ----------------------------------------------------------------------------
def _layernorm_kernel(x_ref, g_ref, b_ref, o_ref, *, eps):
    x = x_ref[...].astype(jnp.float32)
    mean = jnp.mean(x, axis=-1, keepdims=True)
    var = jnp.mean(jnp.square(x - mean), axis=-1, keepdims=True)
    y = (x - mean) * jax.lax.rsqrt(var + eps)
    o_ref[...] = (y * g_ref[0] + b_ref[0]).astype(o_ref.dtype)


def layer_norm(x, g, b, eps=LN_EPS):
    M, D = x.shape
    tm = _row_tile(M)
    return pl.pallas_call(
        partial(_layernorm_kernel, eps=eps),
        out_shape=jax.ShapeDtypeStruct((M, D), jnp.float32),
        grid=(pl.cdiv(M, tm),),
        in_specs=[pl.BlockSpec((tm, D), lambda i: (i, 0)),
                  pl.BlockSpec((1, D), lambda i: (0, 0)),
                  pl.BlockSpec((1, D), lambda i: (0, 0))],
        out_specs=pl.BlockSpec((tm, D), lambda i: (i, 0)),
        compiler_params=_mosaic(("parallel",)),
    )(x, g.reshape(1, D), b.reshape(1, D))


def _ln_linear_kernel(x_ref, g_ref, b_ref, w_ref, bias_ref, o_ref, *, eps):
    x = x_ref[...].astype(jnp.float32)
    mean = jnp.mean(x, axis=-1, keepdims=True)
    var = jnp.mean(jnp.square(x - mean), axis=-1, keepdims=True)
    xn = (x - mean) * jax.lax.rsqrt(var + eps) * g_ref[0] + b_ref[0]
    w = w_ref[...]
    y = jnp.dot(xn.astype(w.dtype), w,
                preferred_element_type=jnp.float32) + bias_ref[0]
    o_ref[...] = y.astype(o_ref.dtype)


def ln_linear(x, g, b, w, bias, eps=LN_EPS, tn_cap=512):
    """Fused final LayerNorm + classification head. w's N dim is a multiple of 128
    (padded vocab) so all output blocks are lane-dense; tn<=512 keeps the weight
    tile inside the v7x 64 MiB VMEM budget."""
    M, D = x.shape
    N = w.shape[1]
    tm = _row_tile(M)
    tn = min(N, tn_cap)
    return pl.pallas_call(
        partial(_ln_linear_kernel, eps=eps),
        out_shape=jax.ShapeDtypeStruct((M, N), jnp.float32),
        grid=(pl.cdiv(M, tm), pl.cdiv(N, tn)),
        in_specs=[
            pl.BlockSpec((tm, D), lambda i, j: (i, 0)),
            pl.BlockSpec((1, D), lambda i, j: (0, 0)),
            pl.BlockSpec((1, D), lambda i, j: (0, 0)),
            pl.BlockSpec((D, tn), lambda i, j: (0, j)),
            pl.BlockSpec((1, tn), lambda i, j: (0, j)),
        ],
        out_specs=pl.BlockSpec((tm, tn), lambda i, j: (i, j)),
        compiler_params=_mosaic(("parallel", "parallel")),
    )(x, g.reshape(1, D), b.reshape(1, D), w, bias.reshape(1, N))


# ----------------------------------------------------------------------------
# Embedding + positional encoding (kept in XLA, per perf review)
# ----------------------------------------------------------------------------
def embed_and_pos(tokens, emb_table, pe, d_model):
    """TokenEmbedding * sqrt(d_model) + PositionalEncoding, batch-major output (B, L, D)."""
    L, B = tokens.shape
    x = jnp.take(emb_table, tokens.T, axis=0) * math.sqrt(d_model)   # (B, L, D)
    x = x + pe[None, :L, :]
    # TODO(synk): dropout after positional encoding omitted (eval-mode identity).
    return x.astype(jnp.float32)


# ----------------------------------------------------------------------------
# Transformer layers / full forward
# ----------------------------------------------------------------------------
def encoder_layer(p, x, nhead, src_mask, src_kpm):
    B, L, D = x.shape
    x = mha_block(p["self_attn"], x, x, nhead, src_mask, src_kpm,
                  p["norm1_g"], p["norm1_b"])
    x = ffn_block(x.reshape(B * L, D), p["lin1_w"], p["lin1_b"],
                  p["lin2_w"], p["lin2_b"], p["norm2_g"], p["norm2_b"])
    return x.reshape(B, L, D)


def decoder_layer(p, x, memory, nhead, tgt_mask, memory_mask, tgt_kpm, mem_kpm):
    B, L, D = x.shape
    x = mha_block(p["self_attn"], x, x, nhead, tgt_mask, tgt_kpm,
                  p["norm1_g"], p["norm1_b"])
    x = mha_block(p["cross_attn"], x, memory, nhead, memory_mask, mem_kpm,
                  p["norm2_g"], p["norm2_b"])
    x = ffn_block(x.reshape(B * L, D), p["lin1_w"], p["lin1_b"],
                  p["lin2_w"], p["lin2_b"], p["norm3_g"], p["norm3_b"])
    return x.reshape(B, L, D)


def translation_model_forward(params, cfg, src, tgt,
                              src_mask=None, tgt_mask=None, memory_mask=None,
                              src_key_padding_mask=None, tgt_key_padding_mask=None,
                              memory_key_padding_mask=None):
    d_model, nhead = cfg["d_model"], cfg["nhead"]

    src_x = embed_and_pos(src, params["src_emb"], params["pe"], d_model)   # (B, Ls, D)
    tgt_x = embed_and_pos(tgt, params["tgt_emb"], params["pe"], d_model)   # (B, Lt, D)
    B, Ls, D = src_x.shape
    Lt = tgt_x.shape[1]

    # Encoder stack + final LayerNorm (as in nn.Transformer / MyTransformer).
    memory = src_x
    for lp in params["enc_layers"]:
        memory = encoder_layer(lp, memory, nhead, src_mask, src_key_padding_mask)
    memory = layer_norm(memory.reshape(B * Ls, D),
                        params["enc_norm_g"], params["enc_norm_b"]).reshape(B, Ls, D)

    # Decoder stack; its final LayerNorm is fused into the classification head.
    out = tgt_x
    for lp in params["dec_layers"]:
        out = decoder_layer(lp, out, memory, nhead, tgt_mask, memory_mask,
                            tgt_key_padding_mask, memory_key_padding_mask)

    logits = ln_linear(out.reshape(B * Lt, D),
                       params["dec_norm_g"], params["dec_norm_b"],
                       params["cls_w"], params["cls_b"])                  # (B*Lt, Vpad)
    V = cfg["tgt_vocab"]
    return logits[:, :V].reshape(B, Lt, V).transpose(1, 0, 2)             # (Lt, B, V)


# ----------------------------------------------------------------------------
# Deterministic parameter init (xavier_uniform for >1-dim, as in _reset_parameters)
# ----------------------------------------------------------------------------
def xavier_uniform(key, shape, dtype=jnp.float32):
    fan_in, fan_out = shape
    limit = math.sqrt(6.0 / (fan_in + fan_out))
    return jax.random.uniform(key, shape, jnp.float32, -limit, limit).astype(dtype)


def init_mha(key, d):
    k1, k2 = jax.random.split(key)
    return {"in_w": xavier_uniform(k1, (d, 3 * d), MATMUL_DTYPE),
            "in_b": jnp.zeros((3 * d,), jnp.float32),
            "out_w": xavier_uniform(k2, (d, d), MATMUL_DTYPE),
            "out_b": jnp.zeros((d,), jnp.float32)}


def init_enc_layer(key, d, ff):
    ka, k1, k2 = jax.random.split(key, 3)
    return {"self_attn": init_mha(ka, d),
            "lin1_w": xavier_uniform(k1, (d, ff), MATMUL_DTYPE),
            "lin1_b": jnp.zeros((ff,), jnp.float32),
            "lin2_w": xavier_uniform(k2, (ff, d), MATMUL_DTYPE),
            "lin2_b": jnp.zeros((d,), jnp.float32),
            "norm1_g": jnp.ones((d,), jnp.float32), "norm1_b": jnp.zeros((d,), jnp.float32),
            "norm2_g": jnp.ones((d,), jnp.float32), "norm2_b": jnp.zeros((d,), jnp.float32)}


def init_dec_layer(key, d, ff):
    ka, kb, k1, k2 = jax.random.split(key, 4)
    return {"self_attn": init_mha(ka, d), "cross_attn": init_mha(kb, d),
            "lin1_w": xavier_uniform(k1, (d, ff), MATMUL_DTYPE),
            "lin1_b": jnp.zeros((ff,), jnp.float32),
            "lin2_w": xavier_uniform(k2, (ff, d), MATMUL_DTYPE),
            "lin2_b": jnp.zeros((d,), jnp.float32),
            "norm1_g": jnp.ones((d,), jnp.float32), "norm1_b": jnp.zeros((d,), jnp.float32),
            "norm2_g": jnp.ones((d,), jnp.float32), "norm2_b": jnp.zeros((d,), jnp.float32),
            "norm3_g": jnp.ones((d,), jnp.float32), "norm3_b": jnp.zeros((d,), jnp.float32)}


def make_positional_encoding(max_len, d):
    position = jnp.arange(max_len, dtype=jnp.float32)[:, None]
    div_term = jnp.exp(jnp.arange(0, d, 2, dtype=jnp.float32) * (-math.log(10000.0) / d))
    pe = jnp.zeros((max_len, d), jnp.float32)
    pe = pe.at[:, 0::2].set(jnp.sin(position * div_term))
    pe = pe.at[:, 1::2].set(jnp.cos(position * div_term))
    return pe


def init_params(key, cfg):
    d, ff = cfg["d_model"], cfg["dim_feedforward"]
    v_pad = _round_up(cfg["tgt_vocab"], 128)   # lane-dense classification head
    keys = jax.random.split(key, 4 + cfg["num_encoder_layers"] + cfg["num_decoder_layers"])
    cls_w = xavier_uniform(keys[2], (d, cfg["tgt_vocab"]))
    cls_w = jnp.pad(cls_w, ((0, 0), (0, v_pad - cfg["tgt_vocab"]))).astype(MATMUL_DTYPE)
    params = {
        "src_emb": xavier_uniform(keys[0], (cfg["src_vocab"], d)),
        "tgt_emb": xavier_uniform(keys[1], (cfg["tgt_vocab"], d)),
        "cls_w": cls_w,
        "cls_b": jnp.zeros((v_pad,), jnp.float32),
        "enc_layers": [init_enc_layer(keys[4 + i], d, ff)
                       for i in range(cfg["num_encoder_layers"])],
        "dec_layers": [init_dec_layer(keys[4 + cfg["num_encoder_layers"] + i], d, ff)
                       for i in range(cfg["num_decoder_layers"])],
        "enc_norm_g": jnp.ones((d,), jnp.float32), "enc_norm_b": jnp.zeros((d,), jnp.float32),
        "dec_norm_g": jnp.ones((d,), jnp.float32), "dec_norm_b": jnp.zeros((d,), jnp.float32),
        "pe": make_positional_encoding(cfg["max_len"], d),
    }
    return params


# ----------------------------------------------------------------------------
# Main
# ----------------------------------------------------------------------------
if __name__ == "__main__":
    cfg = dict(src_vocab=50, tgt_vocab=60, d_model=32, nhead=4,
               num_encoder_layers=2, num_decoder_layers=2,
               dim_feedforward=64, max_len=64)

    key = jax.random.PRNGKey(0)
    kp, ks, kt = jax.random.split(key, 3)
    params = init_params(kp, cfg)

    SRC_LEN, TGT_LEN, BATCH = 8, 6, 2
    src = jax.random.randint(ks, (SRC_LEN, BATCH), 0, cfg["src_vocab"], dtype=jnp.int32)
    tgt = jax.random.randint(kt, (TGT_LEN, BATCH), 0, cfg["tgt_vocab"], dtype=jnp.int32)

    # Causal mask for decoder self-attention (additive float mask, like
    # nn.Transformer.generate_square_subsequent_mask) and src key-padding mask.
    causal = jnp.where(jnp.triu(jnp.ones((TGT_LEN, TGT_LEN)), k=1) > 0,
                       NEG_INF, 0.0).astype(jnp.float32)
    src_kpm = jnp.zeros((BATCH, SRC_LEN), bool).at[1, SRC_LEN - 2:].set(True)

    @jax.jit
    def fwd(p, s, t, t_mask, kpm):
        return translation_model_forward(
            p, cfg, s, t,
            src_mask=None, tgt_mask=t_mask, memory_mask=None,
            src_key_padding_mask=kpm, tgt_key_padding_mask=None,
            memory_key_padding_mask=kpm)

    logits = jax.block_until_ready(fwd(params, src, tgt, causal, src_kpm))
    assert logits.shape == (TGT_LEN, BATCH, cfg["tgt_vocab"]), logits.shape
    assert bool(jnp.all(jnp.isfinite(logits)))
    print("KERNEL_OK")
</pallas_src>

<mosaic_0001>
module attributes {stable_mosaic.version = 11 : i64} {
  func.func @_mha_block_kernel(%arg0: i32, %arg1: memref<1x6x32xf32, #tpu.memory_space<vmem>>, %arg2: memref<1x6x32xf32, #tpu.memory_space<vmem>>, %arg3: memref<32x96xbf16, #tpu.memory_space<vmem>>, %arg4: memref<1x96xf32, #tpu.memory_space<vmem>>, %arg5: memref<32x32xbf16, #tpu.memory_space<vmem>>, %arg6: memref<1x32xf32, #tpu.memory_space<vmem>>, %arg7: memref<6x6xf32, #tpu.memory_space<vmem>>, %arg8: memref<1x1x6xf32, #tpu.memory_space<vmem>>, %arg9: memref<1x32xf32, #tpu.memory_space<vmem>>, %arg10: memref<1x32xf32, #tpu.memory_space<vmem>>, %arg11: memref<1x6x32xf32, #tpu.memory_space<vmem>>, %arg12: memref<6x32xf32, #tpu.memory_space<vmem>>) attributes {dimension_semantics = [#tpu.dimension_semantics<parallel>], iteration_bounds = array<i64: 2>, scalar_prefetch = 0 : i64, scratch_operands = 1 : i64, tpu.core_type = #tpu.core_type<tc>, window_params = [{transform_indices = @transform_0, window_bounds = array<i64: 1, 6, 32>}, {transform_indices = @transform_1, window_bounds = array<i64: 1, 6, 32>}, {pipeline_mode = #tpu.pipeline_mode<synchronous>, transform_indices = @transform_2, window_bounds = array<i64: 32, 96>}, {pipeline_mode = #tpu.pipeline_mode<synchronous>, transform_indices = @transform_3, window_bounds = array<i64: 1, 96>}, {pipeline_mode = #tpu.pipeline_mode<synchronous>, transform_indices = @transform_4, window_bounds = array<i64: 32, 32>}, {pipeline_mode = #tpu.pipeline_mode<synchronous>, transform_indices = @transform_5, window_bounds = array<i64: 1, 32>}, {pipeline_mode = #tpu.pipeline_mode<synchronous>, transform_indices = @transform_6, window_bounds = array<i64: 6, 6>}, {transform_indices = @transform_7, window_bounds = array<i64: 1, 1, 6>}, {pipeline_mode = #tpu.pipeline_mode<synchronous>, transform_indices = @transform_8, window_bounds = array<i64: 1, 32>}, {pipeline_mode = #tpu.pipeline_mode<synchronous>, transform_indices = @transform_9, window_bounds = array<i64: 1, 32>}, {transform_indices = @transform_10, window_bounds = array<i64: 1, 6, 32>}]} {
    %c0 = arith.constant 0 : index
    %c0_0 = arith.constant 0 : index
    %c0_1 = arith.constant 0 : index
    %0 = vector.load %arg1[%c0, %c0_0, %c0_1] : memref<1x6x32xf32, #tpu.memory_space<vmem>>, vector<1x6x32xf32>
    %1 = vector.shape_cast %0 : vector<1x6x32xf32> to vector<6x32xf32>
    %c0_2 = arith.constant 0 : index
    %c0_3 = arith.constant 0 : index
    %2 = vector.load %arg3[%c0_2, %c0_3] : memref<32x96xbf16, #tpu.memory_space<vmem>>, vector<32x96xbf16>
    %c0_4 = arith.constant 0 : index
    %c0_5 = arith.constant 0 : index
    %3 = vector.load %arg4[%c0_4, %c0_5] : memref<1x96xf32, #tpu.memory_space<vmem>>, vector<1x96xf32>
    %4 = vector.shape_cast %3 : vector<1x96xf32> to vector<96xf32>
    %5 = arith.truncf %1 : vector<6x32xf32> to vector<6x32xbf16>
    %cst = arith.constant dense<0.000000e+00> : vector<6x96xf32>
    %6 = tpu.matmul %5, %2, %cst {dimension_numbers = #tpu.dot_dimension_numbers<[1], [0], [0], [1], [0, 0, 1, 1], [], []>} : vector<6x32xbf16>, vector<32x96xbf16>, vector<6x96xf32> -> vector<6x96xf32>
    %7 = vector.shape_cast %4 : vector<96xf32> to vector<1x96xf32>
    %8 = vector.broadcast %7 : vector<1x96xf32> to vector<6x96xf32>
    %9 = arith.addf %6, %8 : vector<6x96xf32>
    %10 = vector.extract_strided_slice %9 {offsets = [0, 0], sizes = [6, 32], strides = [1, 1]} : vector<6x96xf32> to vector<6x32xf32>
    %11 = vector.extract_strided_slice %9 {offsets = [0, 32], sizes = [6, 32], strides = [1, 1]} : vector<6x96xf32> to vector<6x32xf32>
    %12 = vector.extract_strided_slice %9 {offsets = [0, 64], sizes = [6, 32], strides = [1, 1]} : vector<6x96xf32> to vector<6x32xf32>
    %c0_6 = arith.constant 0 : index
    %c0_7 = arith.constant 0 : index
    %13 = vector.load %arg7[%c0_6, %c0_7] : memref<6x6xf32, #tpu.memory_space<vmem>>, vector<6x6xf32>
    %c0_8 = arith.constant 0 : index
    %c0_9 = arith.constant 0 : index
    %c0_10 = arith.constant 0 : index
    %14 = vector.load %arg8[%c0_8, %c0_9, %c0_10] : memref<1x1x6xf32, #tpu.memory_space<vmem>>, vector<1x1x6xf32>
    %15 = vector.shape_cast %14 : vector<1x1x6xf32> to vector<1x6xf32>
    %16 = vector.broadcast %15 : vector<1x6xf32> to vector<6x6xf32>
    %17 = arith.addf %13, %16 : vector<6x6xf32>
    %18 = vector.extract_strided_slice %10 {offsets = [0, 0], sizes = [6, 8], strides = [1, 1]} : vector<6x32xf32> to vector<6x8xf32>
    %cst_11 = arith.constant 0.353553385 : f32
    %19 = vector.broadcast %cst_11 : f32 to vector<6x8xf32>
    %20 = arith.mulf %18, %19 : vector<6x8xf32>
    %21 = arith.truncf %20 : vector<6x8xf32> to vector<6x8xbf16>
    %22 = vector.extract_strided_slice %11 {offsets = [0, 0], sizes = [6, 8], strides = [1, 1]} : vector<6x32xf32> to vector<6x8xf32>
    %23 = arith.truncf %22 : vector<6x8xf32> to vector<6x8xbf16>
    %24 = vector.extract_strided_slice %12 {offsets = [0, 0], sizes = [6, 8], strides = [1, 1]} : vector<6x32xf32> to vector<6x8xf32>
    %25 = arith.truncf %24 : vector<6x8xf32> to vector<6x8xbf16>
    %26 = tpu.transpose %23, [1, 0] : vector<6x8xbf16> -> vector<8x6xbf16>
    %cst_12 = arith.constant dense<0.000000e+00> : vector<6x6xf32>
    %27 = tpu.matmul %21, %26, %cst_12 {dimension_numbers = #tpu.dot_dimension_numbers<[1], [0], [0], [1], [0, 0, 1, 1], [], []>} : vector<6x8xbf16>, vector<8x6xbf16>, vector<6x6xf32> -> vector<6x6xf32>
    %28 = arith.addf %27, %17 : vector<6x6xf32>
    %cst_13 = arith.constant dense<0xFF800000> : vector<6xf32>
    %29 = vector.multi_reduction <maximumf>, %28, %cst_13 [1] : vector<6x6xf32> to vector<6xf32>
    %30 = vector.shape_cast %29 : vector<6xf32> to vector<6x1xf32>
    %31 = vector.broadcast %30 : vector<6x1xf32> to vector<6x6xf32>
    %32 = arith.subf %28, %31 : vector<6x6xf32>
    %33 = math.exp %32 : vector<6x6xf32>
    %cst_14 = arith.constant dense<0.000000e+00> : vector<6xf32>
    %34 = vector.multi_reduction <add>, %33, %cst_14 [1] : vector<6x6xf32> to vector<6xf32>
    %35 = vector.shape_cast %34 : vector<6xf32> to vector<6x1xf32>
    %36 = tpu.reciprocal %35 {approx = true} : vector<6x1xf32> -> vector<6x1xf32>
    %37 = vector.broadcast %36 : vector<6x1xf32> to vector<6x6xf32>
    %38 = arith.mulf %33, %37 : vector<6x6xf32>
    %39 = arith.truncf %38 : vector<6x6xf32> to vector<6x6xbf16>
    %cst_15 = arith.constant dense<0.000000e+00> : vector<6x8xf32>
    %40 = tpu.matmul %39, %25, %cst_15 {dimension_numbers = #tpu.dot_dimension_numbers<[1], [0], [0], [1], [0, 0, 1, 1], [], []>} : vector<6x6xbf16>, vector<6x8xbf16>, vector<6x8xf32> -> vector<6x8xf32>
    %c0_16 = arith.constant 0 : index
    %c0_17 = arith.constant 0 : index
    %41 = vector.load %arg12[%c0_16, %c0_17] : memref<6x32xf32, #tpu.memory_space<vmem>>, vector<6x8xf32>
    tpu.vector_store %arg12[%c0_16, %c0_17], %40 {strides = array<i32>} : memref<6x32xf32, #tpu.memory_space<vmem>>, vector<6x8xf32>,
    %42 = vector.extract_strided_slice %10 {offsets = [0, 8], sizes = [6, 8], strides = [1, 1]} : vector<6x32xf32> to vector<6x8xf32>
    %cst_18 = arith.constant 0.353553385 : f32
    %43 = vector.broadcast %cst_18 : f32 to vector<6x8xf32>
    %44 = arith.mulf %42, %43 : vector<6x8xf32>
    %45 = arith.truncf %44 : vector<6x8xf32> to vector<6x8xbf16>
    %46 = vector.extract_strided_slice %11 {offsets = [0, 8], sizes = [6, 8], strides = [1, 1]} : vector<6x32xf32> to vector<6x8xf32>
    %47 = arith.truncf %46 : vector<6x8xf32> to vector<6x8xbf16>
    %48 = vector.extract_strided_slice %12 {offsets = [0, 8], sizes = [6, 8], strides = [1, 1]} : vector<6x32xf32> to vector<6x8xf32>
    %49 = arith.truncf %48 : vector<6x8xf32> to vector<6x8xbf16>
    %50 = tpu.transpose %47, [1, 0] : vector<6x8xbf16> -> vector<8x6xbf16>
    %cst_19 = arith.constant dense<0.000000e+00> : vector<6x6xf32>
    %51 = tpu.matmul %45, %50, %cst_19 {dimension_numbers = #tpu.dot_dimension_numbers<[1], [0], [0], [1], [0, 0, 1, 1], [], []>} : vector<6x8xbf16>, vector<8x6xbf16>, vector<6x6xf32> -> vector<6x6xf32>
    %52 = arith.addf %51, %17 : vector<6x6xf32>
    %cst_20 = arith.constant dense<0xFF800000> : vector<6xf32>
    %53 = vector.multi_reduction <maximumf>, %52, %cst_20 [1] : vector<6x6xf32> to vector<6xf32>
    %54 = vector.shape_cast %53 : vector<6xf32> to vector<6x1xf32>
    %55 = vector.broadcast %54 : vector<6x1xf32> to vector<6x6xf32>
    %56 = arith.subf %52, %55 : vector<6x6xf32>
    %57 = math.exp %56 : vector<6x6xf32>
    %cst_21 = arith.constant dense<0.000000e+00> : vector<6xf32>
    %58 = vector.multi_reduction <add>, %57, %cst_21 [1] : vector<6x6xf32> to vector<6xf32>
    %59 = vector.shape_cast %58 : vector<6xf32> to vector<6x1xf32>
    %60 = tpu.reciprocal %59 {approx = true} : vector<6x1xf32> -> vector<6x1xf32>
    %61 = vector.broadcast %60 : vector<6x1xf32> to vector<6x6xf32>
    %62 = arith.mulf %57, %61 : vector<6x6xf32>
    %63 = arith.truncf %62 : vector<6x6xf32> to vector<6x6xbf16>
    %cst_22 = arith.constant dense<0.000000e+00> : vector<6x8xf32>
    %64 = tpu.matmul %63, %49, %cst_22 {dimension_numbers = #tpu.dot_dimension_numbers<[1], [0], [0], [1], [0, 0, 1, 1], [], []>} : vector<6x6xbf16>, vector<6x8xbf16>, vector<6x8xf32> -> vector<6x8xf32>
    %c0_23 = arith.constant 0 : index
    %c8 = arith.constant 8 : index
    %65 = vector.load %arg12[%c0_23, %c8] : memref<6x32xf32, #tpu.memory_space<vmem>>, vector<6x8xf32>
    tpu.vector_store %arg12[%c0_23, %c8], %64 {strides = array<i32>} : memref<6x32xf32, #tpu.memory_space<vmem>>, vector<6x8xf32>,
    %66 = vector.extract_strided_slice %10 {offsets = [0, 16], sizes = [6, 8], strides = [1, 1]} : vector<6x32xf32> to vector<6x8xf32>
    %cst_24 = arith.constant 0.353553385 : f32
    %67 = vector.broadcast %cst_24 : f32 to vector<6x8xf32>
    %68 = arith.mulf %66, %67 : vector<6x8xf32>
    %69 = arith.truncf %68 : vector<6x8xf32> to vector<6x8xbf16>
    %70 = vector.extract_strided_slice %11 {offsets = [0, 16], sizes = [6, 8], strides = [1, 1]} : vector<6x32xf32> to vector<6x8xf32>
    %71 = arith.truncf %70 : vector<6x8xf32> to vector<6x8xbf16>
    %72 = vector.extract_strided_slice %12 {offsets = [0, 16], sizes = [6, 8], strides = [1, 1]} : vector<6x32xf32> to vector<6x8xf32>
    %73 = arith.truncf %72 : vector<6x8xf32> to vector<6x8xbf16>
    %74 = tpu.transpose %71, [1, 0] : vector<6x8xbf16> -> vector<8x6xbf16>
    %cst_25 = arith.constant dense<0.000000e+00> : vector<6x6xf32>
    %75 = tpu.matmul %69, %74, %cst_25 {dimension_numbers = #tpu.dot_dimension_numbers<[1], [0], [0], [1], [0, 0, 1, 1], [], []>} : vector<6x8xbf16>, vector<8x6xbf16>, vector<6x6xf32> -> vector<6x6xf32>
    %76 = arith.addf %75, %17 : vector<6x6xf32>
    %cst_26 = arith.constant dense<0xFF800000> : vector<6xf32>
    %77 = vector.multi_reduction <maximumf>, %76, %cst_26 [1] : vector<6x6xf32> to vector<6xf32>
    %78 = vector.shape_cast %77 : vector<6xf32> to vector<6x1xf32>
    %79 = vector.broadcast %78 : vector<6x1xf32> to vector<6x6xf32>
    %80 = arith.subf %76, %79 : vector<6x6xf32>
    %81 = math.exp %80 : vector<6x6xf32>
    %cst_27 = arith.constant dense<0.000000e+00> : vector<6xf32>
    %82 = vector.multi_reduction <add>, %81, %cst_27 [1] : vector<6x6xf32> to vector<6xf32>
    %83 = vector.shape_cast %82 : vector<6xf32> to vector<6x1xf32>
    %84 = tpu.reciprocal %83 {approx = true} : vector<6x1xf32> -> vector<6x1xf32>
    %85 = vector.broadcast %84 : vector<6x1xf32> to vector<6x6xf32>
    %86 = arith.mulf %81, %85 : vector<6x6xf32>
    %87 = arith.truncf %86 : vector<6x6xf32> to vector<6x6xbf16>
    %cst_28 = arith.constant dense<0.000000e+00> : vector<6x8xf32>
    %88 = tpu.matmul %87, %73, %cst_28 {dimension_numbers = #tpu.dot_dimension_numbers<[1], [0], [0], [1], [0, 0, 1, 1], [], []>} : vector<6x6xbf16>, vector<6x8xbf16>, vector<6x8xf32> -> vector<6x8xf32>
    %c0_29 = arith.constant 0 : index
    %c16 = arith.constant 16 : index
    %89 = vector.load %arg12[%c0_29, %c16] : memref<6x32xf32, #tpu.memory_space<vmem>>, vector<6x8xf32>
    tpu.vector_store %arg12[%c0_29, %c16], %88 {strides = array<i32>} : memref<6x32xf32, #tpu.memory_space<vmem>>, vector<6x8xf32>,
    %90 = vector.extract_strided_slice %10 {offsets = [0, 24], sizes = [6, 8], strides = [1, 1]} : vector<6x32xf32> to vector<6x8xf32>
    %cst_30 = arith.constant 0.353553385 : f32
    %91 = vector.broadcast %cst_30 : f32 to vector<6x8xf32>
    %92 = arith.mulf %90, %91 : vector<6x8xf32>
    %93 = arith.truncf %92 : vector<6x8xf32> to vector<6x8xbf16>
    %94 = vector.extract_strided_slice %11 {offsets = [0, 24], sizes = [6, 8], strides = [1, 1]} : vector<6x32xf32> to vector<6x8xf32>
    %95 = arith.truncf %94 : vector<6x8xf32> to vector<6x8xbf16>
    %96 = vector.extract_strided_slice %12 {offsets = [0, 24], sizes = [6, 8], strides = [1, 1]} : vector<6x32xf32> to vector<6x8xf32>
    %97 = arith.truncf %96 : vector<6x8xf32> to vector<6x8xbf16>
    %98 = tpu.transpose %95, [1, 0] : vector<6x8xbf16> -> vector<8x6xbf16>
    %cst_31 = arith.constant dense<0.000000e+00> : vector<6x6xf32>
    %99 = tpu.matmul %93, %98, %cst_31 {dimension_numbers = #tpu.dot_dimension_numbers<[1], [0], [0], [1], [0, 0, 1, 1], [], []>} : vector<6x8xbf16>, vector<8x6xbf16>, vector<6x6xf32> -> vector<6x6xf32>
    %100 = arith.addf %99, %17 : vector<6x6xf32>
    %cst_32 = arith.constant dense<0xFF800000> : vector<6xf32>
    %101 = vector.multi_reduction <maximumf>, %100, %cst_32 [1] : vector<6x6xf32> to vector<6xf32>
    %102 = vector.shape_cast %101 : vector<6xf32> to vector<6x1xf32>
    %103 = vector.broadcast %102 : vector<6x1xf32> to vector<6x6xf32>
    %104 = arith.subf %100, %103 : vector<6x6xf32>
    %105 = math.exp %104 : vector<6x6xf32>
    %cst_33 = arith.constant dense<0.000000e+00> : vector<6xf32>
    %106 = vector.multi_reduction <add>, %105, %cst_33 [1] : vector<6x6xf32> to vector<6xf32>
    %107 = vector.shape_cast %106 : vector<6xf32> to vector<6x1xf32>
    %108 = tpu.reciprocal %107 {approx = true} : vector<6x1xf32> -> vector<6x1xf32>
    %109 = vector.broadcast %108 : vector<6x1xf32> to vector<6x6xf32>
    %110 = arith.mulf %105, %109 : vector<6x6xf32>
    %111 = arith.truncf %110 : vector<6x6xf32> to vector<6x6xbf16>
    %cst_34 = arith.constant dense<0.000000e+00> : vector<6x8xf32>
    %112 = tpu.matmul %111, %97, %cst_34 {dimension_numbers = #tpu.dot_dimension_numbers<[1], [0], [0], [1], [0, 0, 1, 1], [], []>} : vector<6x6xbf16>, vector<6x8xbf16>, vector<6x8xf32> -> vector<6x8xf32>
    %c0_35 = arith.constant 0 : index
    %c24 = arith.constant 24 : index
    %113 = vector.load %arg12[%c0_35, %c24] : memref<6x32xf32, #tpu.memory_space<vmem>>, vector<6x8xf32>
    tpu.vector_store %arg12[%c0_35, %c24], %112 {strides = array<i32>} : memref<6x32xf32, #tpu.memory_space<vmem>>, vector<6x8xf32>,
    %c0_36 = arith.constant 0 : index
    %c0_37 = arith.constant 0 : index
    %114 = vector.load %arg5[%c0_36, %c0_37] : memref<32x32xbf16, #tpu.memory_space<vmem>>, vector<32x32xbf16>
    %c0_38 = arith.constant 0 : index
    %c0_39 = arith.constant 0 : index
    %115 = vector.load %arg12[%c0_38, %c0_39] : memref<6x32xf32, #tpu.memory_space<vmem>>, vector<6x32xf32>
    %116 = arith.truncf %115 : vector<6x32xf32> to vector<6x32xbf16>
    %cst_40 = arith.constant dense<0.000000e+00> : vector<6x32xf32>
    %117 = tpu.matmul %116, %114, %cst_40 {dimension_numbers = #tpu.dot_dimension_numbers<[1], [0], [0], [1], [0, 0, 1, 1], [], []>} : vector<6x32xbf16>, vector<32x32xbf16>, vector<6x32xf32> -> vector<6x32xf32>
    %c0_41 = arith.constant 0 : index
    %c0_42 = arith.constant 0 : index
    %118 = vector.load %arg6[%c0_41, %c0_42] : memref<1x32xf32, #tpu.memory_space<vmem>>, vector<1x32xf32>
    %119 = vector.shape_cast %118 : vector<1x32xf32> to vector<32xf32>
    %120 = vector.shape_cast %119 : vector<32xf32> to vector<1x32xf32>
    %121 = vector.broadcast %120 : vector<1x32xf32> to vector<6x32xf32>
    %122 = arith.addf %117, %121 : vector<6x32xf32>
    %123 = arith.addf %1, %122 : vector<6x32xf32>
    %cst_43 = arith.constant dense<0.000000e+00> : vector<6xf32>
    %124 = vector.multi_reduction <add>, %123, %cst_43 [1] : vector<6x32xf32> to vector<6xf32>
    %125 = vector.shape_cast %124 : vector<6xf32> to vector<6x1xf32>
    %cst_44 = arith.constant 3.200000e+01 : f32
    %126 = vector.broadcast %cst_44 : f32 to vector<6x1xf32>
    %127 = arith.divf %125, %126 : vector<6x1xf32>
    %128 = vector.broadcast %127 : vector<6x1xf32> to vector<6x32xf32>
    %129 = arith.subf %123, %128 : vector<6x32xf32>
    %130 = arith.mulf %129, %129 : vector<6x32xf32>
    %cst_45 = arith.constant dense<0.000000e+00> : vector<6xf32>
    %131 = vector.multi_reduction <add>, %130, %cst_45 [1] : vector<6x32xf32> to vector<6xf32>
    %132 = vector.shape_cast %131 : vector<6xf32> to vector<6x1xf32>
    %cst_46 = arith.constant 3.200000e+01 : f32
    %133 = vector.broadcast %cst_46 : f32 to vector<6x1xf32>
    %134 = arith.divf %132, %133 : vector<6x1xf32>
    %135 = vector.broadcast %127 : vector<6x1xf32> to vector<6x32xf32>
    %136 = arith.subf %123, %135 : vector<6x32xf32>
    %cst_47 = arith.constant 9.99999974E-6 : f32
    %137 = vector.broadcast %cst_47 : f32 to vector<6x1xf32>
    %138 = arith.addf %134, %137 : vector<6x1xf32>
    %139 = math.rsqrt %138 : vector<6x1xf32>
    %140 = vector.broadcast %139 : vector<6x1xf32> to vector<6x32xf32>
    %141 = arith.mulf %136, %140 : vector<6x32xf32>
    %c0_48 = arith.constant 0 : index
    %c0_49 = arith.constant 0 : index
    %142 = vector.load %arg9[%c0_48, %c0_49] : memref<1x32xf32, #tpu.memory_space<vmem>>, vector<1x32xf32>
    %143 = vector.shape_cast %142 : vector<1x32xf32> to vector<32xf32>
    %144 = vector.shape_cast %143 : vector<32xf32> to vector<1x32xf32>
    %145 = vector.broadcast %144 : vector<1x32xf32> to vector<6x32xf32>
    %146 = arith.mulf %141, %145 : vector<6x32xf32>
    %c0_50 = arith.constant 0 : index
    %c0_51 = arith.constant 0 : index
    %147 = vector.load %arg10[%c0_50, %c0_51] : memref<1x32xf32, #tpu.memory_space<vmem>>, vector<1x32xf32>
    %148 = vector.shape_cast %147 : vector<1x32xf32> to vector<32xf32>
    %149 = vector.shape_cast %148 : vector<32xf32> to vector<1x32xf32>
    %150 = vector.broadcast %149 : vector<1x32xf32> to vector<6x32xf32>
    %151 = arith.addf %146, %150 : vector<6x32xf32>
    %c0_52 = arith.constant 0 : index
    %c0_53 = arith.constant 0 : index
    %c0_54 = arith.constant 0 : index
    %152 = vector.load %arg11[%c0_52, %c0_53, %c0_54] : memref<1x6x32xf32, #tpu.memory_space<vmem>>, vector<1x6x32xf32>
    %153 = vector.shape_cast %152 : vector<1x6x32xf32> to vector<6x32xf32>
    %154 = vector.shape_cast %151 : vector<6x32xf32> to vector<1x6x32xf32>
    tpu.vector_store %arg11[%c0_52, %c0_53, %c0_54], %154 {strides = array<i32>} : memref<1x6x32xf32, #tpu.memory_space<vmem>>, vector<1x6x32xf32>,
    return
  }
  func.func @transform_0(%arg0: i32) -> (i32, i32, i32) {
    %c0_i32 = arith.constant 0 : i32
    %c0_i32_0 = arith.constant 0 : i32
    %c0_i32_1 = arith.constant 0 : i32
    return %arg0, %c0_i32, %c0_i32_0 : i32, i32, i32
  }
  func.func @transform_1(%arg0: i32) -> (i32, i32, i32) {
    %c0_i32 = arith.constant 0 : i32
    %c0_i32_0 = arith.constant 0 : i32
    %c0_i32_1 = arith.constant 0 : i32
    return %arg0, %c0_i32, %c0_i32_0 : i32, i32, i32
  }
  func.func @transform_2(%arg0: i32) -> (i32, i32) {
    %c0_i32 = arith.constant 0 : i32
    %c0_i32_0 = arith.constant 0 : i32
    %c0_i32_1 = arith.constant 0 : i32
    return %c0_i32, %c0_i32_0 : i32, i32
  }
  func.func @transform_3(%arg0: i32) -> (i32, i32) {
    %c0_i32 = arith.constant 0 : i32
    %c0_i32_0 = arith.constant 0 : i32
    %c0_i32_1 = arith.constant 0 : i32
    return %c0_i32, %c0_i32_0 : i32, i32
  }
  func.func @transform_4(%arg0: i32) -> (i32, i32) {
    %c0_i32 = arith.constant 0 : i32
    %c0_i32_0 = arith.constant 0 : i32
    %c0_i32_1 = arith.constant 0 : i32
    return %c0_i32, %c0_i32_0 : i32, i32
  }
  func.func @transform_5(%arg0: i32) -> (i32, i32) {
    %c0_i32 = arith.constant 0 : i32
    %c0_i32_0 = arith.constant 0 : i32
    %c0_i32_1 = arith.constant 0 : i32
    return %c0_i32, %c0_i32_0 : i32, i32
  }
  func.func @transform_6(%arg0: i32) -> (i32, i32) {
    %c0_i32 = arith.constant 0 : i32
    %c0_i32_0 = arith.constant 0 : i32
    %c0_i32_1 = arith.constant 0 : i32
    return %c0_i32, %c0_i32_0 : i32, i32
  }
  func.func @transform_7(%arg0: i32) -> (i32, i32, i32) {
    %c0_i32 = arith.constant 0 : i32
    %c0_i32_0 = arith.constant 0 : i32
    %c0_i32_1 = arith.constant 0 : i32
    return %arg0, %c0_i32, %c0_i32_0 : i32, i32, i32
  }
  func.func @transform_8(%arg0: i32) -> (i32, i32) {
    %c0_i32 = arith.constant 0 : i32
    %c0_i32_0 = arith.constant 0 : i32
    %c0_i32_1 = arith.constant 0 : i32
    return %c0_i32, %c0_i32_0 : i32, i32
  }
  func.func @transform_9(%arg0: i32) -> (i32, i32) {
    %c0_i32 = arith.constant 0 : i32
    %c0_i32_0 = arith.constant 0 : i32
    %c0_i32_1 = arith.constant 0 : i32
    return %c0_i32, %c0_i32_0 : i32, i32
  }
  func.func @transform_10(%arg0: i32) -> (i32, i32, i32) {
    %c0_i32 = arith.constant 0 : i32
    %c0_i32_0 = arith.constant 0 : i32
    %c0_i32_1 = arith.constant 0 : i32
    return %arg0, %c0_i32, %c0_i32_0 : i32, i32, i32
  }
}

module attributes {stable_mosaic.version = 11 : i64} {
  func.func @_ffn_block_kernel(%arg0: i32, %arg1: memref<8x32xf32, #tpu.memory_space<vmem>>, %arg2: memref<32x64xbf16, #tpu.memory_space<vmem>>, %arg3: memref<1x64xf32, #tpu.memory_space<vmem>>, %arg4: memref<64x32xbf16, #tpu.memory_space<vmem>>, %arg5: memref<1x32xf32, #tpu.memory_space<vmem>>, %arg6: memref<1x32xf32, #tpu.memory_space<vmem>>, %arg7: memref<1x32xf32, #tpu.memory_space<vmem>>, %arg8: memref<8x32xf32, #tpu.memory_space<vmem>>) attributes {dimension_semantics = [#tpu.dimension_semantics<parallel>], iteration_bounds = array<i64: 2>, scalar_prefetch = 0 : i64, scratch_operands = 0 : i64, tpu.core_type = #tpu.core_type<tc>, window_params = [{transform_indices = @transform_0, window_bounds = array<i64: 8, 32>}, {pipeline_mode = #tpu.pipeline_mode<synchronous>, transform_indices = @transform_1, window_bounds = array<i64: 32, 64>}, {pipeline_mode = #tpu.pipeline_mode<synchronous>, transform_indices = @transform_2, window_bounds = array<i64: 1, 64>}, {pipeline_mode = #tpu.pipeline_mode<synchronous>, transform_indices = @transform_3, window_bounds = array<i64: 64, 32>}, {pipeline_mode = #tpu.pipeline_mode<synchronous>, transform_indices = @transform_4, window_bounds = array<i64: 1, 32>}, {pipeline_mode = #tpu.pipeline_mode<synchronous>, transform_indices = @transform_5, window_bounds = array<i64: 1, 32>}, {pipeline_mode = #tpu.pipeline_mode<synchronous>, transform_indices = @transform_6, window_bounds = array<i64: 1, 32>}, {transform_indices = @transform_7, window_bounds = array<i64: 8, 32>}]} {
    %c0 = arith.constant 0 : index
    %c0_0 = arith.constant 0 : index
    %0 = vector.load %arg1[%c0, %c0_0] : memref<8x32xf32, #tpu.memory_space<vmem>>, vector<8x32xf32>
    %c0_1 = arith.constant 0 : index
    %c0_2 = arith.constant 0 : index
    %1 = vector.load %arg2[%c0_1, %c0_2] : memref<32x64xbf16, #tpu.memory_space<vmem>>, vector<32x64xbf16>
    %2 = arith.truncf %0 : vector<8x32xf32> to vector<8x32xbf16>
    %cst = arith.constant dense<0.000000e+00> : vector<8x64xf32>
    %3 = tpu.matmul %2, %1, %cst {dimension_numbers = #tpu.dot_dimension_numbers<[1], [0], [0], [1], [0, 0, 1, 1], [], []>} : vector<8x32xbf16>, vector<32x64xbf16>, vector<8x64xf32> -> vector<8x64xf32>
    %c0_3 = arith.constant 0 : index
    %c0_4 = arith.constant 0 : index
    %4 = vector.load %arg3[%c0_3, %c0_4] : memref<1x64xf32, #tpu.memory_space<vmem>>, vector<1x64xf32>
    %5 = vector.shape_cast %4 : vector<1x64xf32> to vector<64xf32>
    %6 = vector.shape_cast %5 : vector<64xf32> to vector<1x64xf32>
    %7 = vector.broadcast %6 : vector<1x64xf32> to vector<8x64xf32>
    %8 = arith.addf %3, %7 : vector<8x64xf32>
    %cst_5 = arith.constant 0.000000e+00 : f32
    %9 = vector.broadcast %cst_5 : f32 to vector<8x64xf32>
    %10 = arith.maximumf %8, %9 : vector<8x64xf32>
    %c0_6 = arith.constant 0 : index
    %c0_7 = arith.constant 0 : index
    %11 = vector.load %arg4[%c0_6, %c0_7] : memref<64x32xbf16, #tpu.memory_space<vmem>>, vector<64x32xbf16>
    %12 = arith.truncf %10 : vector<8x64xf32> to vector<8x64xbf16>
    %cst_8 = arith.constant dense<0.000000e+00> : vector<8x32xf32>
    %13 = tpu.matmul %12, %11, %cst_8 {dimension_numbers = #tpu.dot_dimension_numbers<[1], [0], [0], [1], [0, 0, 1, 1], [], []>} : vector<8x64xbf16>, vector<64x32xbf16>, vector<8x32xf32> -> vector<8x32xf32>
    %c0_9 = arith.constant 0 : index
    %c0_10 = arith.constant 0 : index
    %14 = vector.load %arg5[%c0_9, %c0_10] : memref<1x32xf32, #tpu.memory_space<vmem>>, vector<1x32xf32>
    %15 = vector.shape_cast %14 : vector<1x32xf32> to vector<32xf32>
    %16 = vector.shape_cast %15 : vector<32xf32> to vector<1x32xf32>
    %17 = vector.broadcast %16 : vector<1x32xf32> to vector<8x32xf32>
    %18 = arith.addf %13, %17 : vector<8x32xf32>
    %19 = arith.addf %0, %18 : vector<8x32xf32>
    %cst_11 = arith.constant dense<0.000000e+00> : vector<8xf32>
    %20 = vector.multi_reduction <add>, %19, %cst_11 [1] : vector<8x32xf32> to vector<8xf32>
    %21 = vector.shape_cast %20 : vector<8xf32> to vector<8x1xf32>
    %cst_12 = arith.constant 3.200000e+01 : f32
    %22 = vector.broadcast %cst_12 : f32 to vector<8x1xf32>
    %23 = arith.divf %21, %22 : vector<8x1xf32>
    %24 = vector.broadcast %23 : vector<8x1xf32> to vector<8x32xf32>
    %25 = arith.subf %19, %24 : vector<8x32xf32>
    %26 = arith.mulf %25, %25 : vector<8x32xf32>
    %cst_13 = arith.constant dense<0.000000e+00> : vector<8xf32>
    %27 = vector.multi_reduction <add>, %26, %cst_13 [1] : vector<8x32xf32> to vector<8xf32>
    %28 = vector.shape_cast %27 : vector<8xf32> to vector<8x1xf32>
    %cst_14 = arith.constant 3.200000e+01 : f32
    %29 = vector.broadcast %cst_14 : f32 to vector<8x1xf32>
    %30 = arith.divf %28, %29 : vector<8x1xf32>
    %31 = vector.broadcast %23 : vector<8x1xf32> to vector<8x32xf32>
    %32 = arith.subf %19, %31 : vector<8x32xf32>
    %cst_15 = arith.constant 9.99999974E-6 : f32
    %33 = vector.broadcast %cst_15 : f32 to vector<8x1xf32>
    %34 = arith.addf %30, %33 : vector<8x1xf32>
    %35 = math.rsqrt %34 : vector<8x1xf32>
    %36 = vector.broadcast %35 : vector<8x1xf32> to vector<8x32xf32>
    %37 = arith.mulf %32, %36 : vector<8x32xf32>
    %c0_16 = arith.constant 0 : index
    %c0_17 = arith.constant 0 : index
    %38 = vector.load %arg6[%c0_16, %c0_17] : memref<1x32xf32, #tpu.memory_space<vmem>>, vector<1x32xf32>
    %39 = vector.shape_cast %38 : vector<1x32xf32> to vector<32xf32>
    %40 = vector.shape_cast %39 : vector<32xf32> to vector<1x32xf32>
    %41 = vector.broadcast %40 : vector<1x32xf32> to vector<8x32xf32>
    %42 = arith.mulf %37, %41 : vector<8x32xf32>
    %c0_18 = arith.constant 0 : index
    %c0_19 = arith.constant 0 : index
    %43 = vector.load %arg7[%c0_18, %c0_19] : memref<1x32xf32, #tpu.memory_space<vmem>>, vector<1x32xf32>
    %44 = vector.shape_cast %43 : vector<1x32xf32> to vector<32xf32>
    %45 = vector.shape_cast %44 : vector<32xf32> to vector<1x32xf32>
    %46 = vector.broadcast %45 : vector<1x32xf32> to vector<8x32xf32>
    %47 = arith.addf %42, %46 : vector<8x32xf32>
    %c0_20 = arith.constant 0 : index
    %c0_21 = arith.constant 0 : index
    %48 = vector.load %arg8[%c0_20, %c0_21] : memref<8x32xf32, #tpu.memory_space<vmem>>, vector<8x32xf32>
    tpu.vector_store %arg8[%c0_20, %c0_21], %47 {strides = array<i32>} : memref<8x32xf32, #tpu.memory_space<vmem>>, vector<8x32xf32>,
    return
  }
  func.func @transform_0(%arg0: i32) -> (i32, i32) {
    %c0_i32 = arith.constant 0 : i32
    %c0_i32_0 = arith.constant 0 : i32
    return %arg0, %c0_i32 : i32, i32
  }
  func.func @transform_1(%arg0: i32) -> (i32, i32) {
    %c0_i32 = arith.constant 0 : i32
    %c0_i32_0 = arith.constant 0 : i32
    %c0_i32_1 = arith.constant 0 : i32
    return %c0_i32, %c0_i32_0 : i32, i32
  }
  func.func @transform_2(%arg0: i32) -> (i32, i32) {
    %c0_i32 = arith.constant 0 : i32
    %c0_i32_0 = arith.constant 0 : i32
    %c0_i32_1 = arith.constant 0 : i32
    return %c0_i32, %c0_i32_0 : i32, i32
  }
  func.func @transform_3(%arg0: i32) -> (i32, i32) {
    %c0_i32 = arith.constant 0 : i32
    %c0_i32_0 = arith.constant 0 : i32
    %c0_i32_1 = arith.constant 0 : i32
    return %c0_i32, %c0_i32_0 : i32, i32
  }
  func.func @transform_4(%arg0: i32) -> (i32, i32) {
    %c0_i32 = arith.constant 0 : i32
    %c0_i32_0 = arith.constant 0 : i32
    %c0_i32_1 = arith.constant 0 : i32
    return %c0_i32, %c0_i32_0 : i32, i32
  }
  func.func @transform_5(%arg0: i32) -> (i32, i32) {
    %c0_i32 = arith.constant 0 : i32
    %c0_i32_0 = arith.constant 0 : i32
    %c0_i32_1 = arith.constant 0 : i32
    return %c0_i32, %c0_i32_0 : i32, i32
  }
  func.func @transform_6(%arg0: i32) -> (i32, i32) {
    %c0_i32 = arith.constant 0 : i32
    %c0_i32_0 = arith.constant 0 : i32
    %c0_i32_1 = arith.constant 0 : i32
    return %c0_i32, %c0_i32_0 : i32, i32
  }
  func.func @transform_7(%arg0: i32) -> (i32, i32) {
    %c0_i32 = arith.constant 0 : i32
    %c0_i32_0 = arith.constant 0 : i32
    return %arg0, %c0_i32 : i32, i32
  }
}

module attributes {stable_mosaic.version = 11 : i64} {
  func.func @_mha_block_kernel(%arg0: i32, %arg1: memref<1x8x32xf32, #tpu.memory_space<vmem>>, %arg2: memref<1x8x32xf32, #tpu.memory_space<vmem>>, %arg3: memref<32x96xbf16, #tpu.memory_space<vmem>>, %arg4: memref<1x96xf32, #tpu.memory_space<vmem>>, %arg5: memref<32x32xbf16, #tpu.memory_space<vmem>>, %arg6: memref<1x32xf32, #tpu.memory_space<vmem>>, %arg7: memref<8x8xf32, #tpu.memory_space<vmem>>, %arg8: memref<1x1x8xf32, #tpu.memory_space<vmem>>, %arg9: memref<1x32xf32, #tpu.memory_space<vmem>>, %arg10: memref<1x32xf32, #tpu.memory_space<vmem>>, %arg11: memref<1x8x32xf32, #tpu.memory_space<vmem>>, %arg12: memref<8x32xf32, #tpu.memory_space<vmem>>) attributes {dimension_semantics = [#tpu.dimension_semantics<parallel>], iteration_bounds = array<i64: 2>, scalar_prefetch = 0 : i64, scratch_operands = 1 : i64, tpu.core_type = #tpu.core_type<tc>, window_params = [{transform_indices = @transform_0, window_bounds = array<i64: 1, 8, 32>}, {transform_indices = @transform_1, window_bounds = array<i64: 1, 8, 32>}, {pipeline_mode = #tpu.pipeline_mode<synchronous>, transform_indices = @transform_2, window_bounds = array<i64: 32, 96>}, {pipeline_mode = #tpu.pipeline_mode<synchronous>, transform_indices = @transform_3, window_bounds = array<i64: 1, 96>}, {pipeline_mode = #tpu.pipeline_mode<synchronous>, transform_indices = @transform_4, window_bounds = array<i64: 32, 32>}, {pipeline_mode = #tpu.pipeline_mode<synchronous>, transform_indices = @transform_5, window_bounds = array<i64: 1, 32>}, {pipeline_mode = #tpu.pipeline_mode<synchronous>, transform_indices = @transform_6, window_bounds = array<i64: 8, 8>}, {transform_indices = @transform_7, window_bounds = array<i64: 1, 1, 8>}, {pipeline_mode = #tpu.pipeline_mode<synchronous>, transform_indices = @transform_8, window_bounds = array<i64: 1, 32>}, {pipeline_mode = #tpu.pipeline_mode<synchronous>, transform_indices = @transform_9, window_bounds = array<i64: 1, 32>}, {transform_indices = @transform_10, window_bounds = array<i64: 1, 8, 32>}]} {
    %c0 = arith.constant 0 : index
    %c0_0 = arith.constant 0 : index
    %c0_1 = arith.constant 0 : index
    %0 = vector.load %arg1[%c0, %c0_0, %c0_1] : memref<1x8x32xf32, #tpu.memory_space<vmem>>, vector<1x8x32xf32>
    %1 = vector.shape_cast %0 : vector<1x8x32xf32> to vector<8x32xf32>
    %c0_2 = arith.constant 0 : index
    %c0_3 = arith.constant 0 : index
    %2 = vector.load %arg3[%c0_2, %c0_3] : memref<32x96xbf16, #tpu.memory_space<vmem>>, vector<32x96xbf16>
    %c0_4 = arith.constant 0 : index
    %c0_5 = arith.constant 0 : index
    %3 = vector.load %arg4[%c0_4, %c0_5] : memref<1x96xf32, #tpu.memory_space<vmem>>, vector<1x96xf32>
    %4 = vector.shape_cast %3 : vector<1x96xf32> to vector<96xf32>
    %5 = arith.truncf %1 : vector<8x32xf32> to vector<8x32xbf16>
    %cst = arith.constant dense<0.000000e+00> : vector<8x96xf32>
    %6 = tpu.matmul %5, %2, %cst {dimension_numbers = #tpu.dot_dimension_numbers<[1], [0], [0], [1], [0, 0, 1, 1], [], []>} : vector<8x32xbf16>, vector<32x96xbf16>, vector<8x96xf32> -> vector<8x96xf32>
    %7 = vector.shape_cast %4 : vector<96xf32> to vector<1x96xf32>
    %8 = vector.broadcast %7 : vector<1x96xf32> to vector<8x96xf32>
    %9 = arith.addf %6, %8 : vector<8x96xf32>
    %10 = vector.extract_strided_slice %9 {offsets = [0, 0], sizes = [8, 32], strides = [1, 1]} : vector<8x96xf32> to vector<8x32xf32>
    %11 = vector.extract_strided_slice %9 {offsets = [0, 32], sizes = [8, 32], strides = [1, 1]} : vector<8x96xf32> to vector<8x32xf32>
    %12 = vector.extract_strided_slice %9 {offsets = [0, 64], sizes = [8, 32], strides = [1, 1]} : vector<8x96xf32> to vector<8x32xf32>
    %c0_6 = arith.constant 0 : index
    %c0_7 = arith.constant 0 : index
    %13 = vector.load %arg7[%c0_6, %c0_7] : memref<8x8xf32, #tpu.memory_space<vmem>>, vector<8x8xf32>
    %c0_8 = arith.constant 0 : index
    %c0_9 = arith.constant 0 : index
    %c0_10 = arith.constant 0 : index
    %14 = vector.load %arg8[%c0_8, %c0_9, %c0_10] : memref<1x1x8xf32, #tpu.memory_space<vmem>>, vector<1x1x8xf32>
    %15 = vector.shape_cast %14 : vector<1x1x8xf32> to vector<1x8xf32>
    %16 = vector.broadcast %15 : vector<1x8xf32> to vector<8x8xf32>
    %17 = arith.addf %13, %16 : vector<8x8xf32>
    %18 = vector.extract_strided_slice %10 {offsets = [0, 0], sizes = [8, 8], strides = [1, 1]} : vector<8x32xf32> to vector<8x8xf32>
    %cst_11 = arith.constant 0.353553385 : f32
    %19 = vector.broadcast %cst_11 : f32 to vector<8x8xf32>
    %20 = arith.mulf %18, %19 : vector<8x8xf32>
    %21 = arith.truncf %20 : vector<8x8xf32> to vector<8x8xbf16>
    %22 = vector.extract_strided_slice %11 {offsets = [0, 0], sizes = [8, 8], strides = [1, 1]} : vector<8x32xf32> to vector<8x8xf32>
    %23 = arith.truncf %22 : vector<8x8xf32> to vector<8x8xbf16>
    %24 = vector.extract_strided_slice %12 {offsets = [0, 0], sizes = [8, 8], strides = [1, 1]} : vector<8x32xf32> to vector<8x8xf32>
    %25 = arith.truncf %24 : vector<8x8xf32> to vector<8x8xbf16>
    %26 = tpu.transpose %23, [1, 0] : vector<8x8xbf16> -> vector<8x8xbf16>
    %cst_12 = arith.constant dense<0.000000e+00> : vector<8x8xf32>
    %27 = tpu.matmul %21, %26, %cst_12 {dimension_numbers = #tpu.dot_dimension_numbers<[1], [0], [0], [1], [0, 0, 1, 1], [], []>} : vector<8x8xbf16>, vector<8x8xbf16>, vector<8x8xf32> -> vector<8x8xf32>
    %28 = arith.addf %27, %17 : vector<8x8xf32>
    %cst_13 = arith.constant dense<0xFF800000> : vector<8xf32>
    %29 = vector.multi_reduction <maximumf>, %28, %cst_13 [1] : vector<8x8xf32> to vector<8xf32>
    %30 = vector.shape_cast %29 : vector<8xf32> to vector<8x1xf32>
    %31 = vector.broadcast %30 : vector<8x1xf32> to vector<8x8xf32>
    %32 = arith.subf %28, %31 : vector<8x8xf32>
    %33 = math.exp %32 : vector<8x8xf32>
    %cst_14 = arith.constant dense<0.000000e+00> : vector<8xf32>
    %34 = vector.multi_reduction <add>, %33, %cst_14 [1] : vector<8x8xf32> to vector<8xf32>
    %35 = vector.shape_cast %34 : vector<8xf32> to vector<8x1xf32>
    %36 = tpu.reciprocal %35 {approx = true} : vector<8x1xf32> -> vector<8x1xf32>
    %37 = vector.broadcast %36 : vector<8x1xf32> to vector<8x8xf32>
    %38 = arith.mulf %33, %37 : vector<8x8xf32>
    %39 = arith.truncf %38 : vector<8x8xf32> to vector<8x8xbf16>
    %cst_15 = arith.constant dense<0.000000e+00> : vector<8x8xf32>
    %40 = tpu.matmul %39, %25, %cst_15 {dimension_numbers = #tpu.dot_dimension_numbers<[1], [0], [0], [1], [0, 0, 1, 1], [], []>} : vector<8x8xbf16>, vector<8x8xbf16>, vector<8x8xf32> -> vector<8x8xf32>
    %c0_16 = arith.constant 0 : index
    %c0_17 = arith.constant 0 : index
    %41 = vector.load %arg12[%c0_16, %c0_17] : memref<8x32xf32, #tpu.memory_space<vmem>>, vector<8x8xf32>
    tpu.vector_store %arg12[%c0_16, %c0_17], %40 {strides = array<i32>} : memref<8x32xf32, #tpu.memory_space<vmem>>, vector<8x8xf32>,
    %42 = vector.extract_strided_slice %10 {offsets = [0, 8], sizes = [8, 8], strides = [1, 1]} : vector<8x32xf32> to vector<8x8xf32>
    %cst_18 = arith.constant 0.353553385 : f32
    %43 = vector.broadcast %cst_18 : f32 to vector<8x8xf32>
    %44 = arith.mulf %42, %43 : vector<8x8xf32>
    %45 = arith.truncf %44 : vector<8x8xf32> to vector<8x8xbf16>
    %46 = vector.extract_strided_slice %11 {offsets = [0, 8], sizes = [8, 8], strides = [1, 1]} : vector<8x32xf32> to vector<8x8xf32>
    %47 = arith.truncf %46 : vector<8x8xf32> to vector<8x8xbf16>
    %48 = vector.extract_strided_slice %12 {offsets = [0, 8], sizes = [8, 8], strides = [1, 1]} : vector<8x32xf32> to vector<8x8xf32>
    %49 = arith.truncf %48 : vector<8x8xf32> to vector<8x8xbf16>
    %50 = tpu.transpose %47, [1, 0] : vector<8x8xbf16> -> vector<8x8xbf16>
    %cst_19 = arith.constant dense<0.000000e+00> : vector<8x8xf32>
    %51 = tpu.matmul %45, %50, %cst_19 {dimension_numbers = #tpu.dot_dimension_numbers<[1], [0], [0], [1], [0, 0, 1, 1], [], []>} : vector<8x8xbf16>, vector<8x8xbf16>, vector<8x8xf32> -> vector<8x8xf32>
    %52 = arith.addf %51, %17 : vector<8x8xf32>
    %cst_20 = arith.constant dense<0xFF800000> : vector<8xf32>
    %53 = vector.multi_reduction <maximumf>, %52, %cst_20 [1] : vector<8x8xf32> to vector<8xf32>
    %54 = vector.shape_cast %53 : vector<8xf32> to vector<8x1xf32>
    %55 = vector.broadcast %54 : vector<8x1xf32> to vector<8x8xf32>
    %56 = arith.subf %52, %55 : vector<8x8xf32>
    %57 = math.exp %56 : vector<8x8xf32>
    %cst_21 = arith.constant dense<0.000000e+00> : vector<8xf32>
    %58 = vector.multi_reduction <add>, %57, %cst_21 [1] : vector<8x8xf32> to vector<8xf32>
    %59 = vector.shape_cast %58 : vector<8xf32> to vector<8x1xf32>
    %60 = tpu.reciprocal %59 {approx = true} : vector<8x1xf32> -> vector<8x1xf32>
    %61 = vector.broadcast %60 : vector<8x1xf32> to vector<8x8xf32>
    %62 = arith.mulf %57, %61 : vector<8x8xf32>
    %63 = arith.truncf %62 : vector<8x8xf32> to vector<8x8xbf16>
    %cst_22 = arith.constant dense<0.000000e+00> : vector<8x8xf32>
    %64 = tpu.matmul %63, %49, %cst_22 {dimension_numbers = #tpu.dot_dimension_numbers<[1], [0], [0], [1], [0, 0, 1, 1], [], []>} : vector<8x8xbf16>, vector<8x8xbf16>, vector<8x8xf32> -> vector<8x8xf32>
    %c0_23 = arith.constant 0 : index
    %c8 = arith.constant 8 : index
    %65 = vector.load %arg12[%c0_23, %c8] : memref<8x32xf32, #tpu.memory_space<vmem>>, vector<8x8xf32>
    tpu.vector_store %arg12[%c0_23, %c8], %64 {strides = array<i32>} : memref<8x32xf32, #tpu.memory_space<vmem>>, vector<8x8xf32>,
    %66 = vector.extract_strided_slice %10 {offsets = [0, 16], sizes = [8, 8], strides = [1, 1]} : vector<8x32xf32> to vector<8x8xf32>
    %cst_24 = arith.constant 0.353553385 : f32
    %67 = vector.broadcast %cst_24 : f32 to vector<8x8xf32>
    %68 = arith.mulf %66, %67 : vector<8x8xf32>
    %69 = arith.truncf %68 : vector<8x8xf32> to vector<8x8xbf16>
    %70 = vector.extract_strided_slice %11 {offsets = [0, 16], sizes = [8, 8], strides = [1, 1]} : vector<8x32xf32> to vector<8x8xf32>
    %71 = arith.truncf %70 : vector<8x8xf32> to vector<8x8xbf16>
    %72 = vector.extract_strided_slice %12 {offsets = [0, 16], sizes = [8, 8], strides = [1, 1]} : vector<8x32xf32> to vector<8x8xf32>
    %73 = arith.truncf %72 : vector<8x8xf32> to vector<8x8xbf16>
    %74 = tpu.transpose %71, [1, 0] : vector<8x8xbf16> -> vector<8x8xbf16>
    %cst_25 = arith.constant dense<0.000000e+00> : vector<8x8xf32>
    %75 = tpu.matmul %69, %74, %cst_25 {dimension_numbers = #tpu.dot_dimension_numbers<[1], [0], [0], [1], [0, 0, 1, 1], [], []>} : vector<8x8xbf16>, vector<8x8xbf16>, vector<8x8xf32> -> vector<8x8xf32>
    %76 = arith.addf %75, %17 : vector<8x8xf32>
    %cst_26 = arith.constant dense<0xFF800000> : vector<8xf32>
    %77 = vector.multi_reduction <maximumf>, %76, %cst_26 [1] : vector<8x8xf32> to vector<8xf32>
    %78 = vector.shape_cast %77 : vector<8xf32> to vector<8x1xf32>
    %79 = vector.broadcast %78 : vector<8x1xf32> to vector<8x8xf32>
    %80 = arith.subf %76, %79 : vector<8x8xf32>
    %81 = math.exp %80 : vector<8x8xf32>
    %cst_27 = arith.constant dense<0.000000e+00> : vector<8xf32>
    %82 = vector.multi_reduction <add>, %81, %cst_27 [1] : vector<8x8xf32> to vector<8xf32>
    %83 = vector.shape_cast %82 : vector<8xf32> to vector<8x1xf32>
    %84 = tpu.reciprocal %83 {approx = true} : vector<8x1xf32> -> vector<8x1xf32>
    %85 = vector.broadcast %84 : vector<8x1xf32> to vector<8x8xf32>
    %86 = arith.mulf %81, %85 : vector<8x8xf32>
    %87 = arith.truncf %86 : vector<8x8xf32> to vector<8x8xbf16>
    %cst_28 = arith.constant dense<0.000000e+00> : vector<8x8xf32>
    %88 = tpu.matmul %87, %73, %cst_28 {dimension_numbers = #tpu.dot_dimension_numbers<[1], [0], [0], [1], [0, 0, 1, 1], [], []>} : vector<8x8xbf16>, vector<8x8xbf16>, vector<8x8xf32> -> vector<8x8xf32>
    %c0_29 = arith.constant 0 : index
    %c16 = arith.constant 16 : index
    %89 = vector.load %arg12[%c0_29, %c16] : memref<8x32xf32, #tpu.memory_space<vmem>>, vector<8x8xf32>
    tpu.vector_store %arg12[%c0_29, %c16], %88 {strides = array<i32>} : memref<8x32xf32, #tpu.memory_space<vmem>>, vector<8x8xf32>,
    %90 = vector.extract_strided_slice %10 {offsets = [0, 24], sizes = [8, 8], strides = [1, 1]} : vector<8x32xf32> to vector<8x8xf32>
    %cst_30 = arith.constant 0.353553385 : f32
    %91 = vector.broadcast %cst_30 : f32 to vector<8x8xf32>
    %92 = arith.mulf %90, %91 : vector<8x8xf32>
    %93 = arith.truncf %92 : vector<8x8xf32> to vector<8x8xbf16>
    %94 = vector.extract_strided_slice %11 {offsets = [0, 24], sizes = [8, 8], strides = [1, 1]} : vector<8x32xf32> to vector<8x8xf32>
    %95 = arith.truncf %94 : vector<8x8xf32> to vector<8x8xbf16>
    %96 = vector.extract_strided_slice %12 {offsets = [0, 24], sizes = [8, 8], strides = [1, 1]} : vector<8x32xf32> to vector<8x8xf32>
    %97 = arith.truncf %96 : vector<8x8xf32> to vector<8x8xbf16>
    %98 = tpu.transpose %95, [1, 0] : vector<8x8xbf16> -> vector<8x8xbf16>
    %cst_31 = arith.constant dense<0.000000e+00> : vector<8x8xf32>
    %99 = tpu.matmul %93, %98, %cst_31 {dimension_numbers = #tpu.dot_dimension_numbers<[1], [0], [0], [1], [0, 0, 1, 1], [], []>} : vector<8x8xbf16>, vector<8x8xbf16>, vector<8x8xf32> -> vector<8x8xf32>
    %100 = arith.addf %99, %17 : vector<8x8xf32>
    %cst_32 = arith.constant dense<0xFF800000> : vector<8xf32>
    %101 = vector.multi_reduction <maximumf>, %100, %cst_32 [1] : vector<8x8xf32> to vector<8xf32>
    %102 = vector.shape_cast %101 : vector<8xf32> to vector<8x1xf32>
    %103 = vector.broadcast %102 : vector<8x1xf32> to vector<8x8xf32>
    %104 = arith.subf %100, %103 : vector<8x8xf32>
    %105 = math.exp %104 : vector<8x8xf32>
    %cst_33 = arith.constant dense<0.000000e+00> : vector<8xf32>
    %106 = vector.multi_reduction <add>, %105, %cst_33 [1] : vector<8x8xf32> to vector<8xf32>
    %107 = vector.shape_cast %106 : vector<8xf32> to vector<8x1xf32>
    %108 = tpu.reciprocal %107 {approx = true} : vector<8x1xf32> -> vector<8x1xf32>
    %109 = vector.broadcast %108 : vector<8x1xf32> to vector<8x8xf32>
    %110 = arith.mulf %105, %109 : vector<8x8xf32>
    %111 = arith.truncf %110 : vector<8x8xf32> to vector<8x8xbf16>
    %cst_34 = arith.constant dense<0.000000e+00> : vector<8x8xf32>
    %112 = tpu.matmul %111, %97, %cst_34 {dimension_numbers = #tpu.dot_dimension_numbers<[1], [0], [0], [1], [0, 0, 1, 1], [], []>} : vector<8x8xbf16>, vector<8x8xbf16>, vector<8x8xf32> -> vector<8x8xf32>
    %c0_35 = arith.constant 0 : index
    %c24 = arith.constant 24 : index
    %113 = vector.load %arg12[%c0_35, %c24] : memref<8x32xf32, #tpu.memory_space<vmem>>, vector<8x8xf32>
    tpu.vector_store %arg12[%c0_35, %c24], %112 {strides = array<i32>} : memref<8x32xf32, #tpu.memory_space<vmem>>, vector<8x8xf32>,
    %c0_36 = arith.constant 0 : index
    %c0_37 = arith.constant 0 : index
    %114 = vector.load %arg5[%c0_36, %c0_37] : memref<32x32xbf16, #tpu.memory_space<vmem>>, vector<32x32xbf16>
    %c0_38 = arith.constant 0 : index
    %c0_39 = arith.constant 0 : index
    %115 = vector.load %arg12[%c0_38, %c0_39] : memref<8x32xf32, #tpu.memory_space<vmem>>, vector<8x32xf32>
    %116 = arith.truncf %115 : vector<8x32xf32> to vector<8x32xbf16>
    %cst_40 = arith.constant dense<0.000000e+00> : vector<8x32xf32>
    %117 = tpu.matmul %116, %114, %cst_40 {dimension_numbers = #tpu.dot_dimension_numbers<[1], [0], [0], [1], [0, 0, 1, 1], [], []>} : vector<8x32xbf16>, vector<32x32xbf16>, vector<8x32xf32> -> vector<8x32xf32>
    %c0_41 = arith.constant 0 : index
    %c0_42 = arith.constant 0 : index
    %118 = vector.load %arg6[%c0_41, %c0_42] : memref<1x32xf32, #tpu.memory_space<vmem>>, vector<1x32xf32>
    %119 = vector.shape_cast %118 : vector<1x32xf32> to vector<32xf32>
    %120 = vector.shape_cast %119 : vector<32xf32> to vector<1x32xf32>
    %121 = vector.broadcast %120 : vector<1x32xf32> to vector<8x32xf32>
    %122 = arith.addf %117, %121 : vector<8x32xf32>
    %123 = arith.addf %1, %122 : vector<8x32xf32>
    %cst_43 = arith.constant dense<0.000000e+00> : vector<8xf32>
    %124 = vector.multi_reduction <add>, %123, %cst_43 [1] : vector<8x32xf32> to vector<8xf32>
    %125 = vector.shape_cast %124 : vector<8xf32> to vector<8x1xf32>
    %cst_44 = arith.constant 3.200000e+01 : f32
    %126 = vector.broadcast %cst_44 : f32 to vector<8x1xf32>
    %127 = arith.divf %125, %126 : vector<8x1xf32>
    %128 = vector.broadcast %127 : vector<8x1xf32> to vector<8x32xf32>
    %129 = arith.subf %123, %128 : vector<8x32xf32>
    %130 = arith.mulf %129, %129 : vector<8x32xf32>
    %cst_45 = arith.constant dense<0.000000e+00> : vector<8xf32>
    %131 = vector.multi_reduction <add>, %130, %cst_45 [1] : vector<8x32xf32> to vector<8xf32>
    %132 = vector.shape_cast %131 : vector<8xf32> to vector<8x1xf32>
    %cst_46 = arith.constant 3.200000e+01 : f32
    %133 = vector.broadcast %cst_46 : f32 to vector<8x1xf32>
    %134 = arith.divf %132, %133 : vector<8x1xf32>
    %135 = vector.broadcast %127 : vector<8x1xf32> to vector<8x32xf32>
    %136 = arith.subf %123, %135 : vector<8x32xf32>
    %cst_47 = arith.constant 9.99999974E-6 : f32
    %137 = vector.broadcast %cst_47 : f32 to vector<8x1xf32>
    %138 = arith.addf %134, %137 : vector<8x1xf32>
    %139 = math.rsqrt %138 : vector<8x1xf32>
    %140 = vector.broadcast %139 : vector<8x1xf32> to vector<8x32xf32>
    %141 = arith.mulf %136, %140 : vector<8x32xf32>
    %c0_48 = arith.constant 0 : index
    %c0_49 = arith.constant 0 : index
    %142 = vector.load %arg9[%c0_48, %c0_49] : memref<1x32xf32, #tpu.memory_space<vmem>>, vector<1x32xf32>
    %143 = vector.shape_cast %142 : vector<1x32xf32> to vector<32xf32>
    %144 = vector.shape_cast %143 : vector<32xf32> to vector<1x32xf32>
    %145 = vector.broadcast %144 : vector<1x32xf32> to vector<8x32xf32>
    %146 = arith.mulf %141, %145 : vector<8x32xf32>
    %c0_50 = arith.constant 0 : index
    %c0_51 = arith.constant 0 : index
    %147 = vector.load %arg10[%c0_50, %c0_51] : memref<1x32xf32, #tpu.memory_space<vmem>>, vector<1x32xf32>
    %148 = vector.shape_cast %147 : vector<1x32xf32> to vector<32xf32>
    %149 = vector.shape_cast %148 : vector<32xf32> to vector<1x32xf32>
    %150 = vector.broadcast %149 : vector<1x32xf32> to vector<8x32xf32>
    %151 = arith.addf %146, %150 : vector<8x32xf32>
    %c0_52 = arith.constant 0 : index
    %c0_53 = arith.constant 0 : index
    %c0_54 = arith.constant 0 : index
    %152 = vector.load %arg11[%c0_52, %c0_53, %c0_54] : memref<1x8x32xf32, #tpu.memory_space<vmem>>, vector<1x8x32xf32>
    %153 = vector.shape_cast %152 : vector<1x8x32xf32> to vector<8x32xf32>
    %154 = vector.shape_cast %151 : vector<8x32xf32> to vector<1x8x32xf32>
    tpu.vector_store %arg11[%c0_52, %c0_53, %c0_54], %154 {strides = array<i32>} : memref<1x8x32xf32, #tpu.memory_space<vmem>>, vector<1x8x32xf32>,
    return
  }
  func.func @transform_0(%arg0: i32) -> (i32, i32, i32) {
    %c0_i32 = arith.constant 0 : i32
    %c0_i32_0 = arith.constant 0 : i32
    %c0_i32_1 = arith.constant 0 : i32
    return %arg0, %c0_i32, %c0_i32_0 : i32, i32, i32
  }
  func.func @transform_1(%arg0: i32) -> (i32, i32, i32) {
    %c0_i32 = arith.constant 0 : i32
    %c0_i32_0 = arith.constant 0 : i32
    %c0_i32_1 = arith.constant 0 : i32
    return %arg0, %c0_i32, %c0_i32_0 : i32, i32, i32
  }
  func.func @transform_2(%arg0: i32) -> (i32, i32) {
    %c0_i32 = arith.constant 0 : i32
    %c0_i32_0 = arith.constant 0 : i32
    %c0_i32_1 = arith.constant 0 : i32
    return %c0_i32, %c0_i32_0 : i32, i32
  }
  func.func @transform_3(%arg0: i32) -> (i32, i32) {
    %c0_i32 = arith.constant 0 : i32
    %c0_i32_0 = arith.constant 0 : i32
    %c0_i32_1 = arith.constant 0 : i32
    return %c0_i32, %c0_i32_0 : i32, i32
  }
  func.func @transform_4(%arg0: i32) -> (i32, i32) {
    %c0_i32 = arith.constant 0 : i32
    %c0_i32_0 = arith.constant 0 : i32
    %c0_i32_1 = arith.constant 0 : i32
    return %c0_i32, %c0_i32_0 : i32, i32
  }
  func.func @transform_5(%arg0: i32) -> (i32, i32) {
    %c0_i32 = arith.constant 0 : i32
    %c0_i32_0 = arith.constant 0 : i32
    %c0_i32_1 = arith.constant 0 : i32
    return %c0_i32, %c0_i32_0 : i32, i32
  }
  func.func @transform_6(%arg0: i32) -> (i32, i32) {
    %c0_i32 = arith.constant 0 : i32
    %c0_i32_0 = arith.constant 0 : i32
    %c0_i32_1 = arith.constant 0 : i32
    return %c0_i32, %c0_i32_0 : i32, i32
  }
  func.func @transform_7(%arg0: i32) -> (i32, i32, i32) {
    %c0_i32 = arith.constant 0 : i32
    %c0_i32_0 = arith.constant 0 : i32
    %c0_i32_1 = arith.constant 0 : i32
    return %arg0, %c0_i32, %c0_i32_0 : i32, i32, i32
  }
  func.func @transform_8(%arg0: i32) -> (i32, i32) {
    %c0_i32 = arith.constant 0 : i32
    %c0_i32_0 = arith.constant 0 : i32
    %c0_i32_1 = arith.constant 0 : i32
    return %c0_i32, %c0_i32_0 : i32, i32
  }
  func.func @transform_9(%arg0: i32) -> (i32, i32) {
    %c0_i32 = arith.constant 0 : i32
    %c0_i32_0 = arith.constant 0 : i32
    %c0_i32_1 = arith.constant 0 : i32
    return %c0_i32, %c0_i32_0 : i32, i32
  }
  func.func @transform_10(%arg0: i32) -> (i32, i32, i32) {
    %c0_i32 = arith.constant 0 : i32
    %c0_i32_0 = arith.constant 0 : i32
    %c0_i32_1 = arith.constant 0 : i32
    return %arg0, %c0_i32, %c0_i32_0 : i32, i32, i32
  }
}

module attributes {stable_mosaic.version = 11 : i64} {
  func.func @_layernorm_kernel(%arg0: i32, %arg1: memref<8x32xf32, #tpu.memory_space<vmem>>, %arg2: memref<1x32xf32, #tpu.memory_space<vmem>>, %arg3: memref<1x32xf32, #tpu.memory_space<vmem>>, %arg4: memref<8x32xf32, #tpu.memory_space<vmem>>) attributes {dimension_semantics = [#tpu.dimension_semantics<parallel>], iteration_bounds = array<i64: 2>, scalar_prefetch = 0 : i64, scratch_operands = 0 : i64, tpu.core_type = #tpu.core_type<tc>, window_params = [{transform_indices = @transform_0, window_bounds = array<i64: 8, 32>}, {pipeline_mode = #tpu.pipeline_mode<synchronous>, transform_indices = @transform_1, window_bounds = array<i64: 1, 32>}, {pipeline_mode = #tpu.pipeline_mode<synchronous>, transform_indices = @transform_2, window_bounds = array<i64: 1, 32>}, {transform_indices = @transform_3, window_bounds = array<i64: 8, 32>}]} {
    %c0 = arith.constant 0 : index
    %c0_0 = arith.constant 0 : index
    %0 = vector.load %arg1[%c0, %c0_0] : memref<8x32xf32, #tpu.memory_space<vmem>>, vector<8x32xf32>
    %cst = arith.constant dense<0.000000e+00> : vector<8xf32>
    %1 = vector.multi_reduction <add>, %0, %cst [1] : vector<8x32xf32> to vector<8xf32>
    %2 = vector.shape_cast %1 : vector<8xf32> to vector<8x1xf32>
    %cst_1 = arith.constant 3.200000e+01 : f32
    %3 = vector.broadcast %cst_1 : f32 to vector<8x1xf32>
    %4 = arith.divf %2, %3 : vector<8x1xf32>
    %5 = vector.broadcast %4 : vector<8x1xf32> to vector<8x32xf32>
    %6 = arith.subf %0, %5 : vector<8x32xf32>
    %7 = arith.mulf %6, %6 : vector<8x32xf32>
    %cst_2 = arith.constant dense<0.000000e+00> : vector<8xf32>
    %8 = vector.multi_reduction <add>, %7, %cst_2 [1] : vector<8x32xf32> to vector<8xf32>
    %9 = vector.shape_cast %8 : vector<8xf32> to vector<8x1xf32>
    %cst_3 = arith.constant 3.200000e+01 : f32
    %10 = vector.broadcast %cst_3 : f32 to vector<8x1xf32>
    %11 = arith.divf %9, %10 : vector<8x1xf32>
    %12 = vector.broadcast %4 : vector<8x1xf32> to vector<8x32xf32>
    %13 = arith.subf %0, %12 : vector<8x32xf32>
    %cst_4 = arith.constant 9.99999974E-6 : f32
    %14 = vector.broadcast %cst_4 : f32 to vector<8x1xf32>
    %15 = arith.addf %11, %14 : vector<8x1xf32>
    %16 = math.rsqrt %15 : vector<8x1xf32>
    %17 = vector.broadcast %16 : vector<8x1xf32> to vector<8x32xf32>
    %18 = arith.mulf %13, %17 : vector<8x32xf32>
    %c0_5 = arith.constant 0 : index
    %c0_6 = arith.constant 0 : index
    %19 = vector.load %arg2[%c0_5, %c0_6] : memref<1x32xf32, #tpu.memory_space<vmem>>, vector<1x32xf32>
    %20 = vector.shape_cast %19 : vector<1x32xf32> to vector<32xf32>
    %21 = vector.shape_cast %20 : vector<32xf32> to vector<1x32xf32>
    %22 = vector.broadcast %21 : vector<1x32xf32> to vector<8x32xf32>
    %23 = arith.mulf %18, %22 : vector<8x32xf32>
    %c0_7 = arith.constant 0 : index
    %c0_8 = arith.constant 0 : index
    %24 = vector.load %arg3[%c0_7, %c0_8] : memref<1x32xf32, #tpu.memory_space<vmem>>, vector<1x32xf32>
    %25 = vector.shape_cast %24 : vector<1x32xf32> to vector<32xf32>
    %26 = vector.shape_cast %25 : vector<32xf32> to vector<1x32xf32>
    %27 = vector.broadcast %26 : vector<1x32xf32> to vector<8x32xf32>
    %28 = arith.addf %23, %27 : vector<8x32xf32>
    %c0_9 = arith.constant 0 : index
    %c0_10 = arith.constant 0 : index
    %29 = vector.load %arg4[%c0_9, %c0_10] : memref<8x32xf32, #tpu.memory_space<vmem>>, vector<8x32xf32>
    tpu.vector_store %arg4[%c0_9, %c0_10], %28 {strides = array<i32>} : memref<8x32xf32, #tpu.memory_space<vmem>>, vector<8x32xf32>,
    return
  }
  func.func @transform_0(%arg0: i32) -> (i32, i32) {
    %c0_i32 = arith.constant 0 : i32
    %c0_i32_0 = arith.constant 0 : i32
    return %arg0, %c0_i32 : i32, i32
  }
  func.func @transform_1(%arg0: i32) -> (i32, i32) {
    %c0_i32 = arith.constant 0 : i32
    %c0_i32_0 = arith.constant 0 : i32
    %c0_i32_1 = arith.constant 0 : i32
    return %c0_i32, %c0_i32_0 : i32, i32
  }
  func.func @transform_2(%arg0: i32) -> (i32, i32) {
    %c0_i32 = arith.constant 0 : i32
    %c0_i32_0 = arith.constant 0 : i32
    %c0_i32_1 = arith.constant 0 : i32
    return %c0_i32, %c0_i32_0 : i32, i32
  }
  func.func @transform_3(%arg0: i32) -> (i32, i32) {
    %c0_i32 = arith.constant 0 : i32
    %c0_i32_0 = arith.constant 0 : i32
    return %arg0, %c0_i32 : i32, i32
  }
}

module attributes {stable_mosaic.version = 11 : i64} {
  func.func @_ffn_block_kernel(%arg0: i32, %arg1: memref<12x32xf32, #tpu.memory_space<vmem>>, %arg2: memref<32x64xbf16, #tpu.memory_space<vmem>>, %arg3: memref<1x64xf32, #tpu.memory_space<vmem>>, %arg4: memref<64x32xbf16, #tpu.memory_space<vmem>>, %arg5: memref<1x32xf32, #tpu.memory_space<vmem>>, %arg6: memref<1x32xf32, #tpu.memory_space<vmem>>, %arg7: memref<1x32xf32, #tpu.memory_space<vmem>>, %arg8: memref<12x32xf32, #tpu.memory_space<vmem>>) attributes {dimension_semantics = [#tpu.dimension_semantics<parallel>], iteration_bounds = array<i64: 1>, scalar_prefetch = 0 : i64, scratch_operands = 0 : i64, tpu.core_type = #tpu.core_type<tc>, window_params = [{transform_indices = @transform_0, window_bounds = array<i64: 12, 32>}, {pipeline_mode = #tpu.pipeline_mode<synchronous>, transform_indices = @transform_1, window_bounds = array<i64: 32, 64>}, {pipeline_mode = #tpu.pipeline_mode<synchronous>, transform_indices = @transform_2, window_bounds = array<i64: 1, 64>}, {pipeline_mode = #tpu.pipeline_mode<synchronous>, transform_indices = @transform_3, window_bounds = array<i64: 64, 32>}, {pipeline_mode = #tpu.pipeline_mode<synchronous>, transform_indices = @transform_4, window_bounds = array<i64: 1, 32>}, {pipeline_mode = #tpu.pipeline_mode<synchronous>, transform_indices = @transform_5, window_bounds = array<i64: 1, 32>}, {pipeline_mode = #tpu.pipeline_mode<synchronous>, transform_indices = @transform_6, window_bounds = array<i64: 1, 32>}, {transform_indices = @transform_7, window_bounds = array<i64: 12, 32>}]} {
    %c0 = arith.constant 0 : index
    %c0_0 = arith.constant 0 : index
    %0 = vector.load %arg1[%c0, %c0_0] : memref<12x32xf32, #tpu.memory_space<vmem>>, vector<12x32xf32>
    %c0_1 = arith.constant 0 : index
    %c0_2 = arith.constant 0 : index
    %1 = vector.load %arg2[%c0_1, %c0_2] : memref<32x64xbf16, #tpu.memory_space<vmem>>, vector<32x64xbf16>
    %2 = arith.truncf %0 : vector<12x32xf32> to vector<12x32xbf16>
    %cst = arith.constant dense<0.000000e+00> : vector<12x64xf32>
    %3 = tpu.matmul %2, %1, %cst {dimension_numbers = #tpu.dot_dimension_numbers<[1], [0], [0], [1], [0, 0, 1, 1], [], []>} : vector<12x32xbf16>, vector<32x64xbf16>, vector<12x64xf32> -> vector<12x64xf32>
    %c0_3 = arith.constant 0 : index
    %c0_4 = arith.constant 0 : index
    %4 = vector.load %arg3[%c0_3, %c0_4] : memref<1x64xf32, #tpu.memory_space<vmem>>, vector<1x64xf32>
    %5 = vector.shape_cast %4 : vector<1x64xf32> to vector<64xf32>
    %6 = vector.shape_cast %5 : vector<64xf32> to vector<1x64xf32>
    %7 = vector.broadcast %6 : vector<1x64xf32> to vector<12x64xf32>
    %8 = arith.addf %3, %7 : vector<12x64xf32>
    %cst_5 = arith.constant 0.000000e+00 : f32
    %9 = vector.broadcast %cst_5 : f32 to vector<12x64xf32>
    %10 = arith.maximumf %8, %9 : vector<12x64xf32>
    %c0_6 = arith.constant 0 : index
    %c0_7 = arith.constant 0 : index
    %11 = vector.load %arg4[%c0_6, %c0_7] : memref<64x32xbf16, #tpu.memory_space<vmem>>, vector<64x32xbf16>
    %12 = arith.truncf %10 : vector<12x64xf32> to vector<12x64xbf16>
    %cst_8 = arith.constant dense<0.000000e+00> : vector<12x32xf32>
    %13 = tpu.matmul %12, %11, %cst_8 {dimension_numbers = #tpu.dot_dimension_numbers<[1], [0], [0], [1], [0, 0, 1, 1], [], []>} : vector<12x64xbf16>, vector<64x32xbf16>, vector<12x32xf32> -> vector<12x32xf32>
    %c0_9 = arith.constant 0 : index
    %c0_10 = arith.constant 0 : index
    %14 = vector.load %arg5[%c0_9, %c0_10] : memref<1x32xf32, #tpu.memory_space<vmem>>, vector<1x32xf32>
    %15 = vector.shape_cast %14 : vector<1x32xf32> to vector<32xf32>
    %16 = vector.shape_cast %15 : vector<32xf32> to vector<1x32xf32>
    %17 = vector.broadcast %16 : vector<1x32xf32> to vector<12x32xf32>
    %18 = arith.addf %13, %17 : vector<12x32xf32>
    %19 = arith.addf %0, %18 : vector<12x32xf32>
    %cst_11 = arith.constant dense<0.000000e+00> : vector<12xf32>
    %20 = vector.multi_reduction <add>, %19, %cst_11 [1] : vector<12x32xf32> to vector<12xf32>
    %21 = vector.shape_cast %20 : vector<12xf32> to vector<12x1xf32>
    %cst_12 = arith.constant 3.200000e+01 : f32
    %22 = vector.broadcast %cst_12 : f32 to vector<12x1xf32>
    %23 = arith.divf %21, %22 : vector<12x1xf32>
    %24 = vector.broadcast %23 : vector<12x1xf32> to vector<12x32xf32>
    %25 = arith.subf %19, %24 : vector<12x32xf32>
    %26 = arith.mulf %25, %25 : vector<12x32xf32>
    %cst_13 = arith.constant dense<0.000000e+00> : vector<12xf32>
    %27 = vector.multi_reduction <add>, %26, %cst_13 [1] : vector<12x32xf32> to vector<12xf32>
    %28 = vector.shape_cast %27 : vector<12xf32> to vector<12x1xf32>
    %cst_14 = arith.constant 3.200000e+01 : f32
    %29 = vector.broadcast %cst_14 : f32 to vector<12x1xf32>
    %30 = arith.divf %28, %29 : vector<12x1xf32>
    %31 = vector.broadcast %23 : vector<12x1xf32> to vector<12x32xf32>
    %32 = arith.subf %19, %31 : vector<12x32xf32>
    %cst_15 = arith.constant 9.99999974E-6 : f32
    %33 = vector.broadcast %cst_15 : f32 to vector<12x1xf32>
    %34 = arith.addf %30, %33 : vector<12x1xf32>
    %35 = math.rsqrt %34 : vector<12x1xf32>
    %36 = vector.broadcast %35 : vector<12x1xf32> to vector<12x32xf32>
    %37 = arith.mulf %32, %36 : vector<12x32xf32>
    %c0_16 = arith.constant 0 : index
    %c0_17 = arith.constant 0 : index
    %38 = vector.load %arg6[%c0_16, %c0_17] : memref<1x32xf32, #tpu.memory_space<vmem>>, vector<1x32xf32>
    %39 = vector.shape_cast %38 : vector<1x32xf32> to vector<32xf32>
    %40 = vector.shape_cast %39 : vector<32xf32> to vector<1x32xf32>
    %41 = vector.broadcast %40 : vector<1x32xf32> to vector<12x32xf32>
    %42 = arith.mulf %37, %41 : vector<12x32xf32>
    %c0_18 = arith.constant 0 : index
    %c0_19 = arith.constant 0 : index
    %43 = vector.load %arg7[%c0_18, %c0_19] : memref<1x32xf32, #tpu.memory_space<vmem>>, vector<1x32xf32>
    %44 = vector.shape_cast %43 : vector<1x32xf32> to vector<32xf32>
    %45 = vector.shape_cast %44 : vector<32xf32> to vector<1x32xf32>
    %46 = vector.broadcast %45 : vector<1x32xf32> to vector<12x32xf32>
    %47 = arith.addf %42, %46 : vector<12x32xf32>
    %c0_20 = arith.constant 0 : index
    %c0_21 = arith.constant 0 : index
    %48 = vector.load %arg8[%c0_20, %c0_21] : memref<12x32xf32, #tpu.memory_space<vmem>>, vector<12x32xf32>
    tpu.vector_store %arg8[%c0_20, %c0_21], %47 {strides = array<i32>} : memref<12x32xf32, #tpu.memory_space<vmem>>, vector<12x32xf32>,
    return
  }
  func.func @transform_0(%arg0: i32) -> (i32, i32) {
    %c0_i32 = arith.constant 0 : i32
    %c0_i32_0 = arith.constant 0 : i32
    return %arg0, %c0_i32 : i32, i32
  }
  func.func @transform_1(%arg0: i32) -> (i32, i32) {
    %c0_i32 = arith.constant 0 : i32
    %c0_i32_0 = arith.constant 0 : i32
    %c0_i32_1 = arith.constant 0 : i32
    return %c0_i32, %c0_i32_0 : i32, i32
  }
  func.func @transform_2(%arg0: i32) -> (i32, i32) {
    %c0_i32 = arith.constant 0 : i32
    %c0_i32_0 = arith.constant 0 : i32
    %c0_i32_1 = arith.constant 0 : i32
    return %c0_i32, %c0_i32_0 : i32, i32
  }
  func.func @transform_3(%arg0: i32) -> (i32, i32) {
    %c0_i32 = arith.constant 0 : i32
    %c0_i32_0 = arith.constant 0 : i32
    %c0_i32_1 = arith.constant 0 : i32
    return %c0_i32, %c0_i32_0 : i32, i32
  }
  func.func @transform_4(%arg0: i32) -> (i32, i32) {
    %c0_i32 = arith.constant 0 : i32
    %c0_i32_0 = arith.constant 0 : i32
    %c0_i32_1 = arith.constant 0 : i32
    return %c0_i32, %c0_i32_0 : i32, i32
  }
  func.func @transform_5(%arg0: i32) -> (i32, i32) {
    %c0_i32 = arith.constant 0 : i32
    %c0_i32_0 = arith.constant 0 : i32
    %c0_i32_1 = arith.constant 0 : i32
    return %c0_i32, %c0_i32_0 : i32, i32
  }
  func.func @transform_6(%arg0: i32) -> (i32, i32) {
    %c0_i32 = arith.constant 0 : i32
    %c0_i32_0 = arith.constant 0 : i32
    %c0_i32_1 = arith.constant 0 : i32
    return %c0_i32, %c0_i32_0 : i32, i32
  }
  func.func @transform_7(%arg0: i32) -> (i32, i32) {
    %c0_i32 = arith.constant 0 : i32
    %c0_i32_0 = arith.constant 0 : i32
    return %arg0, %c0_i32 : i32, i32
  }
}

module attributes {stable_mosaic.version = 11 : i64} {
  func.func @_mha_block_kernel(%arg0: i32, %arg1: memref<1x6x32xf32, #tpu.memory_space<vmem>>, %arg2: memref<1x8x32xf32, #tpu.memory_space<vmem>>, %arg3: memref<32x96xbf16, #tpu.memory_space<vmem>>, %arg4: memref<1x96xf32, #tpu.memory_space<vmem>>, %arg5: memref<32x32xbf16, #tpu.memory_space<vmem>>, %arg6: memref<1x32xf32, #tpu.memory_space<vmem>>, %arg7: memref<6x8xf32, #tpu.memory_space<vmem>>, %arg8: memref<1x1x8xf32, #tpu.memory_space<vmem>>, %arg9: memref<1x32xf32, #tpu.memory_space<vmem>>, %arg10: memref<1x32xf32, #tpu.memory_space<vmem>>, %arg11: memref<1x6x32xf32, #tpu.memory_space<vmem>>, %arg12: memref<6x32xf32, #tpu.memory_space<vmem>>) attributes {dimension_semantics = [#tpu.dimension_semantics<parallel>], iteration_bounds = array<i64: 2>, scalar_prefetch = 0 : i64, scratch_operands = 1 : i64, tpu.core_type = #tpu.core_type<tc>, window_params = [{transform_indices = @transform_0, window_bounds = array<i64: 1, 6, 32>}, {transform_indices = @transform_1, window_bounds = array<i64: 1, 8, 32>}, {pipeline_mode = #tpu.pipeline_mode<synchronous>, transform_indices = @transform_2, window_bounds = array<i64: 32, 96>}, {pipeline_mode = #tpu.pipeline_mode<synchronous>, transform_indices = @transform_3, window_bounds = array<i64: 1, 96>}, {pipeline_mode = #tpu.pipeline_mode<synchronous>, transform_indices = @transform_4, window_bounds = array<i64: 32, 32>}, {pipeline_mode = #tpu.pipeline_mode<synchronous>, transform_indices = @transform_5, window_bounds = array<i64: 1, 32>}, {pipeline_mode = #tpu.pipeline_mode<synchronous>, transform_indices = @transform_6, window_bounds = array<i64: 6, 8>}, {transform_indices = @transform_7, window_bounds = array<i64: 1, 1, 8>}, {pipeline_mode = #tpu.pipeline_mode<synchronous>, transform_indices = @transform_8, window_bounds = array<i64: 1, 32>}, {pipeline_mode = #tpu.pipeline_mode<synchronous>, transform_indices = @transform_9, window_bounds = array<i64: 1, 32>}, {transform_indices = @transform_10, window_bounds = array<i64: 1, 6, 32>}]} {
    %c0 = arith.constant 0 : index
    %c0_0 = arith.constant 0 : index
    %c0_1 = arith.constant 0 : index
    %0 = vector.load %arg1[%c0, %c0_0, %c0_1] : memref<1x6x32xf32, #tpu.memory_space<vmem>>, vector<1x6x32xf32>
    %1 = vector.shape_cast %0 : vector<1x6x32xf32> to vector<6x32xf32>
    %c0_2 = arith.constant 0 : index
    %c0_3 = arith.constant 0 : index
    %2 = vector.load %arg3[%c0_2, %c0_3] : memref<32x96xbf16, #tpu.memory_space<vmem>>, vector<32x96xbf16>
    %c0_4 = arith.constant 0 : index
    %c0_5 = arith.constant 0 : index
    %3 = vector.load %arg4[%c0_4, %c0_5] : memref<1x96xf32, #tpu.memory_space<vmem>>, vector<1x96xf32>
    %4 = vector.shape_cast %3 : vector<1x96xf32> to vector<96xf32>
    %c0_6 = arith.constant 0 : index
    %c0_7 = arith.constant 0 : index
    %c0_8 = arith.constant 0 : index
    %5 = vector.load %arg2[%c0_6, %c0_7, %c0_8] : memref<1x8x32xf32, #tpu.memory_space<vmem>>, vector<1x8x32xf32>
    %6 = vector.shape_cast %5 : vector<1x8x32xf32> to vector<8x32xf32>
    %7 = arith.truncf %1 : vector<6x32xf32> to vector<6x32xbf16>
    %8 = vector.extract_strided_slice %2 {offsets = [0, 0], sizes = [32, 32], strides = [1, 1]} : vector<32x96xbf16> to vector<32x32xbf16>
    %cst = arith.constant dense<0.000000e+00> : vector<6x32xf32>
    %9 = tpu.matmul %7, %8, %cst {dimension_numbers = #tpu.dot_dimension_numbers<[1], [0], [0], [1], [0, 0, 1, 1], [], []>} : vector<6x32xbf16>, vector<32x32xbf16>, vector<6x32xf32> -> vector<6x32xf32>
    %10 = vector.extract_strided_slice %4 {offsets = [0], sizes = [32], strides = [1]} : vector<96xf32> to vector<32xf32>
    %11 = vector.shape_cast %10 : vector<32xf32> to vector<1x32xf32>
    %12 = vector.broadcast %11 : vector<1x32xf32> to vector<6x32xf32>
    %13 = arith.addf %9, %12 : vector<6x32xf32>
    %14 = arith.truncf %6 : vector<8x32xf32> to vector<8x32xbf16>
    %15 = vector.extract_strided_slice %2 {offsets = [0, 32], sizes = [32, 64], strides = [1, 1]} : vector<32x96xbf16> to vector<32x64xbf16>
    %cst_9 = arith.constant dense<0.000000e+00> : vector<8x64xf32>
    %16 = tpu.matmul %14, %15, %cst_9 {dimension_numbers = #tpu.dot_dimension_numbers<[1], [0], [0], [1], [0, 0, 1, 1], [], []>} : vector<8x32xbf16>, vector<32x64xbf16>, vector<8x64xf32> -> vector<8x64xf32>
    %17 = vector.extract_strided_slice %4 {offsets = [32], sizes = [64], strides = [1]} : vector<96xf32> to vector<64xf32>
    %18 = vector.shape_cast %17 : vector<64xf32> to vector<1x64xf32>
    %19 = vector.broadcast %18 : vector<1x64xf32> to vector<8x64xf32>
    %20 = arith.addf %16, %19 : vector<8x64xf32>
    %21 = vector.extract_strided_slice %20 {offsets = [0, 0], sizes = [8, 32], strides = [1, 1]} : vector<8x64xf32> to vector<8x32xf32>
    %22 = vector.extract_strided_slice %20 {offsets = [0, 32], sizes = [8, 32], strides = [1, 1]} : vector<8x64xf32> to vector<8x32xf32>
    %c0_10 = arith.constant 0 : index
    %c0_11 = arith.constant 0 : index
    %23 = vector.load %arg7[%c0_10, %c0_11] : memref<6x8xf32, #tpu.memory_space<vmem>>, vector<6x8xf32>
    %c0_12 = arith.constant 0 : index
    %c0_13 = arith.constant 0 : index
    %c0_14 = arith.constant 0 : index
    %24 = vector.load %arg8[%c0_12, %c0_13, %c0_14] : memref<1x1x8xf32, #tpu.memory_space<vmem>>, vector<1x1x8xf32>
    %25 = vector.shape_cast %24 : vector<1x1x8xf32> to vector<1x8xf32>
    %26 = vector.broadcast %25 : vector<1x8xf32> to vector<6x8xf32>
    %27 = arith.addf %23, %26 : vector<6x8xf32>
    %28 = vector.extract_strided_slice %13 {offsets = [0, 0], sizes = [6, 8], strides = [1, 1]} : vector<6x32xf32> to vector<6x8xf32>
    %cst_15 = arith.constant 0.353553385 : f32
    %29 = vector.broadcast %cst_15 : f32 to vector<6x8xf32>
    %30 = arith.mulf %28, %29 : vector<6x8xf32>
    %31 = arith.truncf %30 : vector<6x8xf32> to vector<6x8xbf16>
    %32 = vector.extract_strided_slice %21 {offsets = [0, 0], sizes = [8, 8], strides = [1, 1]} : vector<8x32xf32> to vector<8x8xf32>
    %33 = arith.truncf %32 : vector<8x8xf32> to vector<8x8xbf16>
    %34 = vector.extract_strided_slice %22 {offsets = [0, 0], sizes = [8, 8], strides = [1, 1]} : vector<8x32xf32> to vector<8x8xf32>
    %35 = arith.truncf %34 : vector<8x8xf32> to vector<8x8xbf16>
    %36 = tpu.transpose %33, [1, 0] : vector<8x8xbf16> -> vector<8x8xbf16>
    %cst_16 = arith.constant dense<0.000000e+00> : vector<6x8xf32>
    %37 = tpu.matmul %31, %36, %cst_16 {dimension_numbers = #tpu.dot_dimension_numbers<[1], [0], [0], [1], [0, 0, 1, 1], [], []>} : vector<6x8xbf16>, vector<8x8xbf16>, vector<6x8xf32> -> vector<6x8xf32>
    %38 = arith.addf %37, %27 : vector<6x8xf32>
    %cst_17 = arith.constant dense<0xFF800000> : vector<6xf32>
    %39 = vector.multi_reduction <maximumf>, %38, %cst_17 [1] : vector<6x8xf32> to vector<6xf32>
    %40 = vector.shape_cast %39 : vector<6xf32> to vector<6x1xf32>
    %41 = vector.broadcast %40 : vector<6x1xf32> to vector<6x8xf32>
    %42 = arith.subf %38, %41 : vector<6x8xf32>
    %43 = math.exp %42 : vector<6x8xf32>
    %cst_18 = arith.constant dense<0.000000e+00> : vector<6xf32>
    %44 = vector.multi_reduction <add>, %43, %cst_18 [1] : vector<6x8xf32> to vector<6xf32>
    %45 = vector.shape_cast %44 : vector<6xf32> to vector<6x1xf32>
    %46 = tpu.reciprocal %45 {approx = true} : vector<6x1xf32> -> vector<6x1xf32>
    %47 = vector.broadcast %46 : vector<6x1xf32> to vector<6x8xf32>
    %48 = arith.mulf %43, %47 : vector<6x8xf32>
    %49 = arith.truncf %48 : vector<6x8xf32> to vector<6x8xbf16>
    %cst_19 = arith.constant dense<0.000000e+00> : vector<6x8xf32>
    %50 = tpu.matmul %49, %35, %cst_19 {dimension_numbers = #tpu.dot_dimension_numbers<[1], [0], [0], [1], [0, 0, 1, 1], [], []>} : vector<6x8xbf16>, vector<8x8xbf16>, vector<6x8xf32> -> vector<6x8xf32>
    %c0_20 = arith.constant 0 : index
    %c0_21 = arith.constant 0 : index
    %51 = vector.load %arg12[%c0_20, %c0_21] : memref<6x32xf32, #tpu.memory_space<vmem>>, vector<6x8xf32>
    tpu.vector_store %arg12[%c0_20, %c0_21], %50 {strides = array<i32>} : memref<6x32xf32, #tpu.memory_space<vmem>>, vector<6x8xf32>,
    %52 = vector.extract_strided_slice %13 {offsets = [0, 8], sizes = [6, 8], strides = [1, 1]} : vector<6x32xf32> to vector<6x8xf32>
    %cst_22 = arith.constant 0.353553385 : f32
    %53 = vector.broadcast %cst_22 : f32 to vector<6x8xf32>
    %54 = arith.mulf %52, %53 : vector<6x8xf32>
    %55 = arith.truncf %54 : vector<6x8xf32> to vector<6x8xbf16>
    %56 = vector.extract_strided_slice %21 {offsets = [0, 8], sizes = [8, 8], strides = [1, 1]} : vector<8x32xf32> to vector<8x8xf32>
    %57 = arith.truncf %56 : vector<8x8xf32> to vector<8x8xbf16>
    %58 = vector.extract_strided_slice %22 {offsets = [0, 8], sizes = [8, 8], strides = [1, 1]} : vector<8x32xf32> to vector<8x8xf32>
    %59 = arith.truncf %58 : vector<8x8xf32> to vector<8x8xbf16>
    %60 = tpu.transpose %57, [1, 0] : vector<8x8xbf16> -> vector<8x8xbf16>
    %cst_23 = arith.constant dense<0.000000e+00> : vector<6x8xf32>
    %61 = tpu.matmul %55, %60, %cst_23 {dimension_numbers = #tpu.dot_dimension_numbers<[1], [0], [0], [1], [0, 0, 1, 1], [], []>} : vector<6x8xbf16>, vector<8x8xbf16>, vector<6x8xf32> -> vector<6x8xf32>
    %62 = arith.addf %61, %27 : vector<6x8xf32>
    %cst_24 = arith.constant dense<0xFF800000> : vector<6xf32>
    %63 = vector.multi_reduction <maximumf>, %62, %cst_24 [1] : vector<6x8xf32> to vector<6xf32>
    %64 = vector.shape_cast %63 : vector<6xf32> to vector<6x1xf32>
    %65 = vector.broadcast %64 : vector<6x1xf32> to vector<6x8xf32>
    %66 = arith.subf %62, %65 : vector<6x8xf32>
    %67 = math.exp %66 : vector<6x8xf32>
    %cst_25 = arith.constant dense<0.000000e+00> : vector<6xf32>
    %68 = vector.multi_reduction <add>, %67, %cst_25 [1] : vector<6x8xf32> to vector<6xf32>
    %69 = vector.shape_cast %68 : vector<6xf32> to vector<6x1xf32>
    %70 = tpu.reciprocal %69 {approx = true} : vector<6x1xf32> -> vector<6x1xf32>
    %71 = vector.broadcast %70 : vector<6x1xf32> to vector<6x8xf32>
    %72 = arith.mulf %67, %71 : vector<6x8xf32>
    %73 = arith.truncf %72 : vector<6x8xf32> to vector<6x8xbf16>
    %cst_26 = arith.constant dense<0.000000e+00> : vector<6x8xf32>
    %74 = tpu.matmul %73, %59, %cst_26 {dimension_numbers = #tpu.dot_dimension_numbers<[1], [0], [0], [1], [0, 0, 1, 1], [], []>} : vector<6x8xbf16>, vector<8x8xbf16>, vector<6x8xf32> -> vector<6x8xf32>
    %c0_27 = arith.constant 0 : index
    %c8 = arith.constant 8 : index
    %75 = vector.load %arg12[%c0_27, %c8] : memref<6x32xf32, #tpu.memory_space<vmem>>, vector<6x8xf32>
    tpu.vector_store %arg12[%c0_27, %c8], %74 {strides = array<i32>} : memref<6x32xf32, #tpu.memory_space<vmem>>, vector<6x8xf32>,
    %76 = vector.extract_strided_slice %13 {offsets = [0, 16], sizes = [6, 8], strides = [1, 1]} : vector<6x32xf32> to vector<6x8xf32>
    %cst_28 = arith.constant 0.353553385 : f32
    %77 = vector.broadcast %cst_28 : f32 to vector<6x8xf32>
    %78 = arith.mulf %76, %77 : vector<6x8xf32>
    %79 = arith.truncf %78 : vector<6x8xf32> to vector<6x8xbf16>
    %80 = vector.extract_strided_slice %21 {offsets = [0, 16], sizes = [8, 8], strides = [1, 1]} : vector<8x32xf32> to vector<8x8xf32>
    %81 = arith.truncf %80 : vector<8x8xf32> to vector<8x8xbf16>
    %82 = vector.extract_strided_slice %22 {offsets = [0, 16], sizes = [8, 8], strides = [1, 1]} : vector<8x32xf32> to vector<8x8xf32>
    %83 = arith.truncf %82 : vector<8x8xf32> to vector<8x8xbf16>
    %84 = tpu.transpose %81, [1, 0] : vector<8x8xbf16> -> vector<8x8xbf16>
    %cst_29 = arith.constant dense<0.000000e+00> : vector<6x8xf32>
    %85 = tpu.matmul %79, %84, %cst_29 {dimension_numbers = #tpu.dot_dimension_numbers<[1], [0], [0], [1], [0, 0, 1, 1], [], []>} : vector<6x8xbf16>, vector<8x8xbf16>, vector<6x8xf32> -> vector<6x8xf32>
    %86 = arith.addf %85, %27 : vector<6x8xf32>
    %cst_30 = arith.constant dense<0xFF800000> : vector<6xf32>
    %87 = vector.multi_reduction <maximumf>, %86, %cst_30 [1] : vector<6x8xf32> to vector<6xf32>
    %88 = vector.shape_cast %87 : vector<6xf32> to vector<6x1xf32>
    %89 = vector.broadcast %88 : vector<6x1xf32> to vector<6x8xf32>
    %90 = arith.subf %86, %89 : vector<6x8xf32>
    %91 = math.exp %90 : vector<6x8xf32>
    %cst_31 = arith.constant dense<0.000000e+00> : vector<6xf32>
    %92 = vector.multi_reduction <add>, %91, %cst_31 [1] : vector<6x8xf32> to vector<6xf32>
    %93 = vector.shape_cast %92 : vector<6xf32> to vector<6x1xf32>
    %94 = tpu.reciprocal %93 {approx = true} : vector<6x1xf32> -> vector<6x1xf32>
    %95 = vector.broadcast %94 : vector<6x1xf32> to vector<6x8xf32>
    %96 = arith.mulf %91, %95 : vector<6x8xf32>
    %97 = arith.truncf %96 : vector<6x8xf32> to vector<6x8xbf16>
    %cst_32 = arith.constant dense<0.000000e+00> : vector<6x8xf32>
    %98 = tpu.matmul %97, %83, %cst_32 {dimension_numbers = #tpu.dot_dimension_numbers<[1], [0], [0], [1], [0, 0, 1, 1], [], []>} : vector<6x8xbf16>, vector<8x8xbf16>, vector<6x8xf32> -> vector<6x8xf32>
    %c0_33 = arith.constant 0 : index
    %c16 = arith.constant 16 : index
    %99 = vector.load %arg12[%c0_33, %c16] : memref<6x32xf32, #tpu.memory_space<vmem>>, vector<6x8xf32>
    tpu.vector_store %arg12[%c0_33, %c16], %98 {strides = array<i32>} : memref<6x32xf32, #tpu.memory_space<vmem>>, vector<6x8xf32>,
    %100 = vector.extract_strided_slice %13 {offsets = [0, 24], sizes = [6, 8], strides = [1, 1]} : vector<6x32xf32> to vector<6x8xf32>
    %cst_34 = arith.constant 0.353553385 : f32
    %101 = vector.broadcast %cst_34 : f32 to vector<6x8xf32>
    %102 = arith.mulf %100, %101 : vector<6x8xf32>
    %103 = arith.truncf %102 : vector<6x8xf32> to vector<6x8xbf16>
    %104 = vector.extract_strided_slice %21 {offsets = [0, 24], sizes = [8, 8], strides = [1, 1]} : vector<8x32xf32> to vector<8x8xf32>
    %105 = arith.truncf %104 : vector<8x8xf32> to vector<8x8xbf16>
    %106 = vector.extract_strided_slice %22 {offsets = [0, 24], sizes = [8, 8], strides = [1, 1]} : vector<8x32xf32> to vector<8x8xf32>
    %107 = arith.truncf %106 : vector<8x8xf32> to vector<8x8xbf16>
    %108 = tpu.transpose %105, [1, 0] : vector<8x8xbf16> -> vector<8x8xbf16>
    %cst_35 = arith.constant dense<0.000000e+00> : vector<6x8xf32>
    %109 = tpu.matmul %103, %108, %cst_35 {dimension_numbers = #tpu.dot_dimension_numbers<[1], [0], [0], [1], [0, 0, 1, 1], [], []>} : vector<6x8xbf16>, vector<8x8xbf16>, vector<6x8xf32> -> vector<6x8xf32>
    %110 = arith.addf %109, %27 : vector<6x8xf32>
    %cst_36 = arith.constant dense<0xFF800000> : vector<6xf32>
    %111 = vector.multi_reduction <maximumf>, %110, %cst_36 [1] : vector<6x8xf32> to vector<6xf32>
    %112 = vector.shape_cast %111 : vector<6xf32> to vector<6x1xf32>
    %113 = vector.broadcast %112 : vector<6x1xf32> to vector<6x8xf32>
    %114 = arith.subf %110, %113 : vector<6x8xf32>
    %115 = math.exp %114 : vector<6x8xf32>
    %cst_37 = arith.constant dense<0.000000e+00> : vector<6xf32>
    %116 = vector.multi_reduction <add>, %115, %cst_37 [1] : vector<6x8xf32> to vector<6xf32>
    %117 = vector.shape_cast %116 : vector<6xf32> to vector<6x1xf32>
    %118 = tpu.reciprocal %117 {approx = true} : vector<6x1xf32> -> vector<6x1xf32>
    %119 = vector.broadcast %118 : vector<6x1xf32> to vector<6x8xf32>
    %120 = arith.mulf %115, %119 : vector<6x8xf32>
    %121 = arith.truncf %120 : vector<6x8xf32> to vector<6x8xbf16>
    %cst_38 = arith.constant dense<0.000000e+00> : vector<6x8xf32>
    %122 = tpu.matmul %121, %107, %cst_38 {dimension_numbers = #tpu.dot_dimension_numbers<[1], [0], [0], [1], [0, 0, 1, 1], [], []>} : vector<6x8xbf16>, vector<8x8xbf16>, vector<6x8xf32> -> vector<6x8xf32>
    %c0_39 = arith.constant 0 : index
    %c24 = arith.constant 24 : index
    %123 = vector.load %arg12[%c0_39, %c24] : memref<6x32xf32, #tpu.memory_space<vmem>>, vector<6x8xf32>
    tpu.vector_store %arg12[%c0_39, %c24], %122 {strides = array<i32>} : memref<6x32xf32, #tpu.memory_space<vmem>>, vector<6x8xf32>,
    %c0_40 = arith.constant 0 : index
    %c0_41 = arith.constant 0 : index
    %124 = vector.load %arg5[%c0_40, %c0_41] : memref<32x32xbf16, #tpu.memory_space<vmem>>, vector<32x32xbf16>
    %c0_42 = arith.constant 0 : index
    %c0_43 = arith.constant 0 : index
    %125 = vector.load %arg12[%c0_42, %c0_43] : memref<6x32xf32, #tpu.memory_space<vmem>>, vector<6x32xf32>
    %126 = arith.truncf %125 : vector<6x32xf32> to vector<6x32xbf16>
    %cst_44 = arith.constant dense<0.000000e+00> : vector<6x32xf32>
    %127 = tpu.matmul %126, %124, %cst_44 {dimension_numbers = #tpu.dot_dimension_numbers<[1], [0], [0], [1], [0, 0, 1, 1], [], []>} : vector<6x32xbf16>, vector<32x32xbf16>, vector<6x32xf32> -> vector<6x32xf32>
    %c0_45 = arith.constant 0 : index
    %c0_46 = arith.constant 0 : index
    %128 = vector.load %arg6[%c0_45, %c0_46] : memref<1x32xf32, #tpu.memory_space<vmem>>, vector<1x32xf32>
    %129 = vector.shape_cast %128 : vector<1x32xf32> to vector<32xf32>
    %130 = vector.shape_cast %129 : vector<32xf32> to vector<1x32xf32>
    %131 = vector.broadcast %130 : vector<1x32xf32> to vector<6x32xf32>
    %132 = arith.addf %127, %131 : vector<6x32xf32>
    %133 = arith.addf %1, %132 : vector<6x32xf32>
    %cst_47 = arith.constant dense<0.000000e+00> : vector<6xf32>
    %134 = vector.multi_reduction <add>, %133, %cst_47 [1] : vector<6x32xf32> to vector<6xf32>
    %135 = vector.shape_cast %134 : vector<6xf32> to vector<6x1xf32>
    %cst_48 = arith.constant 3.200000e+01 : f32
    %136 = vector.broadcast %cst_48 : f32 to vector<6x1xf32>
    %137 = arith.divf %135, %136 : vector<6x1xf32>
    %138 = vector.broadcast %137 : vector<6x1xf32> to vector<6x32xf32>
    %139 = arith.subf %133, %138 : vector<6x32xf32>
    %140 = arith.mulf %139, %139 : vector<6x32xf32>
    %cst_49 = arith.constant dense<0.000000e+00> : vector<6xf32>
    %141 = vector.multi_reduction <add>, %140, %cst_49 [1] : vector<6x32xf32> to vector<6xf32>
    %142 = vector.shape_cast %141 : vector<6xf32> to vector<6x1xf32>
    %cst_50 = arith.constant 3.200000e+01 : f32
    %143 = vector.broadcast %cst_50 : f32 to vector<6x1xf32>
    %144 = arith.divf %142, %143 : vector<6x1xf32>
    %145 = vector.broadcast %137 : vector<6x1xf32> to vector<6x32xf32>
    %146 = arith.subf %133, %145 : vector<6x32xf32>
    %cst_51 = arith.constant 9.99999974E-6 : f32
    %147 = vector.broadcast %cst_51 : f32 to vector<6x1xf32>
    %148 = arith.addf %144, %147 : vector<6x1xf32>
    %149 = math.rsqrt %148 : vector<6x1xf32>
    %150 = vector.broadcast %149 : vector<6x1xf32> to vector<6x32xf32>
    %151 = arith.mulf %146, %150 : vector<6x32xf32>
    %c0_52 = arith.constant 0 : index
    %c0_53 = arith.constant 0 : index
    %152 = vector.load %arg9[%c0_52, %c0_53] : memref<1x32xf32, #tpu.memory_space<vmem>>, vector<1x32xf32>
    %153 = vector.shape_cast %152 : vector<1x32xf32> to vector<32xf32>
    %154 = vector.shape_cast %153 : vector<32xf32> to vector<1x32xf32>
    %155 = vector.broadcast %154 : vector<1x32xf32> to vector<6x32xf32>
    %156 = arith.mulf %151, %155 : vector<6x32xf32>
    %c0_54 = arith.constant 0 : index
    %c0_55 = arith.constant 0 : index
    %157 = vector.load %arg10[%c0_54, %c0_55] : memref<1x32xf32, #tpu.memory_space<vmem>>, vector<1x32xf32>
    %158 = vector.shape_cast %157 : vector<1x32xf32> to vector<32xf32>
    %159 = vector.shape_cast %158 : vector<32xf32> to vector<1x32xf32>
    %160 = vector.broadcast %159 : vector<1x32xf32> to vector<6x32xf32>
    %161 = arith.addf %156, %160 : vector<6x32xf32>
    %c0_56 = arith.constant 0 : index
    %c0_57 = arith.constant 0 : index
    %c0_58 = arith.constant 0 : index
    %162 = vector.load %arg11[%c0_56, %c0_57, %c0_58] : memref<1x6x32xf32, #tpu.memory_space<vmem>>, vector<1x6x32xf32>
    %163 = vector.shape_cast %162 : vector<1x6x32xf32> to vector<6x32xf32>
    %164 = vector.shape_cast %161 : vector<6x32xf32> to vector<1x6x32xf32>
    tpu.vector_store %arg11[%c0_56, %c0_57, %c0_58], %164 {strides = array<i32>} : memref<1x6x32xf32, #tpu.memory_space<vmem>>, vector<1x6x32xf32>,
    return
  }
  func.func @transform_0(%arg0: i32) -> (i32, i32, i32) {
    %c0_i32 = arith.constant 0 : i32
    %c0_i32_0 = arith.constant 0 : i32
    %c0_i32_1 = arith.constant 0 : i32
    return %arg0, %c0_i32, %c0_i32_0 : i32, i32, i32
  }
  func.func @transform_1(%arg0: i32) -> (i32, i32, i32) {
    %c0_i32 = arith.constant 0 : i32
    %c0_i32_0 = arith.constant 0 : i32
    %c0_i32_1 = arith.constant 0 : i32
    return %arg0, %c0_i32, %c0_i32_0 : i32, i32, i32
  }
  func.func @transform_2(%arg0: i32) -> (i32, i32) {
    %c0_i32 = arith.constant 0 : i32
    %c0_i32_0 = arith.constant 0 : i32
    %c0_i32_1 = arith.constant 0 : i32
    return %c0_i32, %c0_i32_0 : i32, i32
  }
  func.func @transform_3(%arg0: i32) -> (i32, i32) {
    %c0_i32 = arith.constant 0 : i32
    %c0_i32_0 = arith.constant 0 : i32
    %c0_i32_1 = arith.constant 0 : i32
    return %c0_i32, %c0_i32_0 : i32, i32
  }
  func.func @transform_4(%arg0: i32) -> (i32, i32) {
    %c0_i32 = arith.constant 0 : i32
    %c0_i32_0 = arith.constant 0 : i32
    %c0_i32_1 = arith.constant 0 : i32
    return %c0_i32, %c0_i32_0 : i32, i32
  }
  func.func @transform_5(%arg0: i32) -> (i32, i32) {
    %c0_i32 = arith.constant 0 : i32
    %c0_i32_0 = arith.constant 0 : i32
    %c0_i32_1 = arith.constant 0 : i32
    return %c0_i32, %c0_i32_0 : i32, i32
  }
  func.func @transform_6(%arg0: i32) -> (i32, i32) {
    %c0_i32 = arith.constant 0 : i32
    %c0_i32_0 = arith.constant 0 : i32
    %c0_i32_1 = arith.constant 0 : i32
    return %c0_i32, %c0_i32_0 : i32, i32
  }
  func.func @transform_7(%arg0: i32) -> (i32, i32, i32) {
    %c0_i32 = arith.constant 0 : i32
    %c0_i32_0 = arith.constant 0 : i32
    %c0_i32_1 = arith.constant 0 : i32
    return %arg0, %c0_i32, %c0_i32_0 : i32, i32, i32
  }
  func.func @transform_8(%arg0: i32) -> (i32, i32) {
    %c0_i32 = arith.constant 0 : i32
    %c0_i32_0 = arith.constant 0 : i32
    %c0_i32_1 = arith.constant 0 : i32
    return %c0_i32, %c0_i32_0 : i32, i32
  }
  func.func @transform_9(%arg0: i32) -> (i32, i32) {
    %c0_i32 = arith.constant 0 : i32
    %c0_i32_0 = arith.constant 0 : i32
    %c0_i32_1 = arith.constant 0 : i32
    return %c0_i32, %c0_i32_0 : i32, i32
  }
  func.func @transform_10(%arg0: i32) -> (i32, i32, i32) {
    %c0_i32 = arith.constant 0 : i32
    %c0_i32_0 = arith.constant 0 : i32
    %c0_i32_1 = arith.constant 0 : i32
    return %arg0, %c0_i32, %c0_i32_0 : i32, i32, i32
  }
}

module attributes {stable_mosaic.version = 11 : i64} {
  func.func @_ln_linear_kernel(%arg0: i32, %arg1: i32, %arg2: memref<12x32xf32, #tpu.memory_space<vmem>>, %arg3: memref<1x32xf32, #tpu.memory_space<vmem>>, %arg4: memref<1x32xf32, #tpu.memory_space<vmem>>, %arg5: memref<32x128xbf16, #tpu.memory_space<vmem>>, %arg6: memref<1x128xf32, #tpu.memory_space<vmem>>, %arg7: memref<12x128xf32, #tpu.memory_space<vmem>>) attributes {dimension_semantics = [#tpu.dimension_semantics<parallel>, #tpu.dimension_semantics<parallel>], iteration_bounds = array<i64: 1, 1>, scalar_prefetch = 0 : i64, scratch_operands = 0 : i64, tpu.core_type = #tpu.core_type<tc>, window_params = [{transform_indices = @transform_0, window_bounds = array<i64: 12, 32>}, {pipeline_mode = #tpu.pipeline_mode<synchronous>, transform_indices = @transform_1, window_bounds = array<i64: 1, 32>}, {pipeline_mode = #tpu.pipeline_mode<synchronous>, transform_indices = @transform_2, window_bounds = array<i64: 1, 32>}, {transform_indices = @transform_3, window_bounds = array<i64: 32, 128>}, {transform_indices = @transform_4, window_bounds = array<i64: 1, 128>}, {transform_indices = @transform_5, window_bounds = array<i64: 12, 128>}]} {
    %c0 = arith.constant 0 : index
    %c0_0 = arith.constant 0 : index
    %0 = vector.load %arg2[%c0, %c0_0] : memref<12x32xf32, #tpu.memory_space<vmem>>, vector<12x32xf32>
    %cst = arith.constant dense<0.000000e+00> : vector<12xf32>
    %1 = vector.multi_reduction <add>, %0, %cst [1] : vector<12x32xf32> to vector<12xf32>
    %2 = vector.shape_cast %1 : vector<12xf32> to vector<12x1xf32>
    %cst_1 = arith.constant 3.200000e+01 : f32
    %3 = vector.broadcast %cst_1 : f32 to vector<12x1xf32>
    %4 = arith.divf %2, %3 : vector<12x1xf32>
    %5 = vector.broadcast %4 : vector<12x1xf32> to vector<12x32xf32>
    %6 = arith.subf %0, %5 : vector<12x32xf32>
    %7 = arith.mulf %6, %6 : vector<12x32xf32>
    %cst_2 = arith.constant dense<0.000000e+00> : vector<12xf32>
    %8 = vector.multi_reduction <add>, %7, %cst_2 [1] : vector<12x32xf32> to vector<12xf32>
    %9 = vector.shape_cast %8 : vector<12xf32> to vector<12x1xf32>
    %cst_3 = arith.constant 3.200000e+01 : f32
    %10 = vector.broadcast %cst_3 : f32 to vector<12x1xf32>
    %11 = arith.divf %9, %10 : vector<12x1xf32>
    %12 = vector.broadcast %4 : vector<12x1xf32> to vector<12x32xf32>
    %13 = arith.subf %0, %12 : vector<12x32xf32>
    %cst_4 = arith.constant 9.99999974E-6 : f32
    %14 = vector.broadcast %cst_4 : f32 to vector<12x1xf32>
    %15 = arith.addf %11, %14 : vector<12x1xf32>
    %16 = math.rsqrt %15 : vector<12x1xf32>
    %17 = vector.broadcast %16 : vector<12x1xf32> to vector<12x32xf32>
    %18 = arith.mulf %13, %17 : vector<12x32xf32>
    %c0_5 = arith.constant 0 : index
    %c0_6 = arith.constant 0 : index
    %19 = vector.load %arg3[%c0_5, %c0_6] : memref<1x32xf32, #tpu.memory_space<vmem>>, vector<1x32xf32>
    %20 = vector.shape_cast %19 : vector<1x32xf32> to vector<32xf32>
    %21 = vector.shape_cast %20 : vector<32xf32> to vector<1x32xf32>
    %22 = vector.broadcast %21 : vector<1x32xf32> to vector<12x32xf32>
    %23 = arith.mulf %18, %22 : vector<12x32xf32>
    %c0_7 = arith.constant 0 : index
    %c0_8 = arith.constant 0 : index
    %24 = vector.load %arg4[%c0_7, %c0_8] : memref<1x32xf32, #tpu.memory_space<vmem>>, vector<1x32xf32>
    %25 = vector.shape_cast %24 : vector<1x32xf32> to vector<32xf32>
    %26 = vector.shape_cast %25 : vector<32xf32> to vector<1x32xf32>
    %27 = vector.broadcast %26 : vector<1x32xf32> to vector<12x32xf32>
    %28 = arith.addf %23, %27 : vector<12x32xf32>
    %c0_9 = arith.constant 0 : index
    %c0_10 = arith.constant 0 : index
    %29 = vector.load %arg5[%c0_9, %c0_10] : memref<32x128xbf16, #tpu.memory_space<vmem>>, vector<32x128xbf16>
    %30 = arith.truncf %28 : vector<12x32xf32> to vector<12x32xbf16>
    %cst_11 = arith.constant dense<0.000000e+00> : vector<12x128xf32>
    %31 = tpu.matmul %30, %29, %cst_11 {dimension_numbers = #tpu.dot_dimension_numbers<[1], [0], [0], [1], [0, 0, 1, 1], [], []>} : vector<12x32xbf16>, vector<32x128xbf16>, vector<12x128xf32> -> vector<12x128xf32>
    %c0_12 = arith.constant 0 : index
    %c0_13 = arith.constant 0 : index
    %32 = vector.load %arg6[%c0_12, %c0_13] : memref<1x128xf32, #tpu.memory_space<vmem>>, vector<1x128xf32>
    %33 = vector.shape_cast %32 : vector<1x128xf32> to vector<128xf32>
    %34 = vector.shape_cast %33 : vector<128xf32> to vector<1x128xf32>
    %35 = vector.broadcast %34 : vector<1x128xf32> to vector<12x128xf32>
    %36 = arith.addf %31, %35 : vector<12x128xf32>
    %c0_14 = arith.constant 0 : index
    %c0_15 = arith.constant 0 : index
    %37 = vector.load %arg7[%c0_14, %c0_15] : memref<12x128xf32, #tpu.memory_space<vmem>>, vector<12x128xf32>
    tpu.vector_store %arg7[%c0_14, %c0_15], %36 {strides = array<i32>} : memref<12x128xf32, #tpu.memory_space<vmem>>, vector<12x128xf32>,
    return
  }
  func.func @transform_0(%arg0: i32, %arg1: i32) -> (i32, i32) {
    %c0_i32 = arith.constant 0 : i32
    %c0_i32_0 = arith.constant 0 : i32
    return %arg0, %c0_i32 : i32, i32
  }
  func.func @transform_1(%arg0: i32, %arg1: i32) -> (i32, i32) {
    %c0_i32 = arith.constant 0 : i32
    %c0_i32_0 = arith.constant 0 : i32
    %c0_i32_1 = arith.constant 0 : i32
    return %c0_i32, %c0_i32_0 : i32, i32
  }
  func.func @transform_2(%arg0: i32, %arg1: i32) -> (i32, i32) {
    %c0_i32 = arith.constant 0 : i32
    %c0_i32_0 = arith.constant 0 : i32
    %c0_i32_1 = arith.constant 0 : i32
    return %c0_i32, %c0_i32_0 : i32, i32
  }
  func.func @transform_3(%arg0: i32, %arg1: i32) -> (i32, i32) {
    %c0_i32 = arith.constant 0 : i32
    %c0_i32_0 = arith.constant 0 : i32
    return %c0_i32, %arg1 : i32, i32
  }
  func.func @transform_4(%arg0: i32, %arg1: i32) -> (i32, i32) {
    %c0_i32 = arith.constant 0 : i32
    %c0_i32_0 = arith.constant 0 : i32
    return %c0_i32, %arg1 : i32, i32
  }
  func.func @transform_5(%arg0: i32, %arg1: i32) -> (i32, i32) {
    %c0_i32 = arith.constant 0 : i32
    return %arg0, %arg1 : i32, i32
  }
}

</mosaic_0001>

<llo_original>
// kernel: fwd.16
$region0: #{fwd.16}
  #allocation0 [shape = 'u32[]', space=smem, size = 0x4, offset = 0x4, fixed_abs, tag = 'smem constant byte address 0x4 - core index']
  #allocation1 [shape = 'u32[144,128]{1,0:T(1,128)}', space=vmem, size = 0x12000, scoped, tag = 'internal scratch']
  %s0 = inlined_call_operand.vmem [shape: f32[16,32], index: 0, kind: input, shape index: {}]
  %s1 = inlined_call_operand.vmem [shape: f32[1,32], index: 1, kind: input, shape index: {}]
  %s2 = inlined_call_operand.vmem [shape: f32[1,32], index: 2, kind: input, shape index: {}]
  %s3 = inlined_call_operand.vmem [shape: f32[16,32], index: 3, kind: output, shape index: {}]
  %s4 = sld [smem:[#allocation0]]
  $region45: #{fwd.16} parent=0
    _
  %s6 = ssub.s32 1, %s4
  %s7 = scalar_select 0, %s6, %s4
  loop: start=0, step=1, limit=4
  $region2: #{fwd.16} parent=0 // loop_pre_header
    _
  $region3: #{fwd.16} parent=0 // loop_header
    %s9 = sphi 0, %s13
    %p10 = scmp.ge.s32.totalorder %s9, 4
    %s19 = sphi 0, %s21
    %s22 = sphi 0, %s19
    %s23 = sphi 0, %s22
    %s39 = sphi 0, %s23
    %s43 = sphi 0, %s43
    %s45 = sphi 0, %s43
    %s46 = sphi 0, %s45
    %s60 = sphi 0, %s46
    %s64 = sphi 0, %s64
    %s66 = sphi 0, %s64
    %s67 = sphi 0, %s66
    %s81 = sphi 0, %s67
    %s87 = sphi 0, %s89
    %s90 = sphi 0, %s87
    %s91 = sphi 0, %s90
    %s107 = sphi 0, %s91
  $region4: #{fwd.16} parent=0 // loop_header_branch
    %12 = sbr.rel (%p10) target = $region8
  $region5: #{fwd.16} parent=0 // loop_body
    %s14 = ssub.s32 %s9, 1
    %s15 = ssub.s32 %s9, 2
    %s16 = sadd.s32 %s9, 1
    %s17 = ssub.s32 %s9, %s16
    %p18 = scmp.eq.s32.totalorder %s17, 0
    %s20 = sadd.s32 %s19, 1
    %s21 = scalar_select %p18, %s19, %s20
    %p24 = pneg %p18
    %p25 = scmp.eq.s32.totalorder %s9, 1
    %p26 = por %p24, %p25
    %p27 = scmp.ne.s32.totalorder %s19, %s22
    %p28 = scmp.eq.s32.totalorder %s9, 0
    %p29 = por %p27, %p28
    %p30 = scmp.ne.s32.totalorder %s19, %s22
    %p31 = scmp.eq.s32.totalorder %s14, 1
    %p32 = por %p30, %p31
    %p33 = scmp.ne.s32.totalorder %s22, %s23
    %p34 = scmp.eq.s32.totalorder %s14, 0
    %p35 = por %p33, %p34
    %p36 = scmp.ne.s32.totalorder %s22, %s23
    %p37 = scmp.eq.s32.totalorder %s15, 1
    %p38 = por %p36, %p37
    %p40 = scmp.ne.s32.totalorder %s23, %s39
    %p41 = scmp.eq.s32.totalorder %s15, 0
    %p42 = por %p40, %p41
    %s44 = sadd.s32 %s43, 1
    %p47 = scmp.eq.s32.totalorder %s9, 1
    %p48 = scmp.ne.s32.totalorder %s43, %s45
    %p49 = scmp.eq.s32.totalorder %s9, 0
    %p50 = por %p48, %p49
    %p51 = scmp.ne.s32.totalorder %s43, %s45
    %p52 = scmp.eq.s32.totalorder %s14, 1
    %p53 = por %p51, %p52
    %p54 = scmp.ne.s32.totalorder %s45, %s46
    %p55 = scmp.eq.s32.totalorder %s14, 0
    %p56 = por %p54, %p55
    %p57 = scmp.ne.s32.totalorder %s45, %s46
    %p58 = scmp.eq.s32.totalorder %s15, 1
    %p59 = por %p57, %p58
    %p61 = scmp.ne.s32.totalorder %s46, %s60
    %p62 = scmp.eq.s32.totalorder %s15, 0
    %p63 = por %p61, %p62
    %s65 = sadd.s32 %s64, 1
    %p68 = scmp.eq.s32.totalorder %s9, 1
    %p69 = scmp.ne.s32.totalorder %s64, %s66
    %p70 = scmp.eq.s32.totalorder %s9, 0
    %p71 = por %p69, %p70
    %p72 = scmp.ne.s32.totalorder %s64, %s66
    %p73 = scmp.eq.s32.totalorder %s14, 1
    %p74 = por %p72, %p73
    %p75 = scmp.ne.s32.totalorder %s66, %s67
    %p76 = scmp.eq.s32.totalorder %s14, 0
    %p77 = por %p75, %p76
    %p78 = scmp.ne.s32.totalorder %s66, %s67
    %p79 = scmp.eq.s32.totalorder %s15, 1
    %p80 = por %p78, %p79
    %p82 = scmp.ne.s32.totalorder %s67, %s81
    %p83 = scmp.eq.s32.totalorder %s15, 0
    %p84 = por %p82, %p83
    %s85 = ssub.s32 %s9, %s16
    %p86 = scmp.eq.s32.totalorder %s85, 0
    %s88 = sadd.s32 %s87, 1
    %s89 = scalar_select %p86, %s87, %s88
    %p92 = pneg %p86
    %p93 = scmp.eq.s32.totalorder %s9, 1
    %p94 = por %p92, %p93
    %p95 = scmp.ne.s32.totalorder %s87, %s90
    %p96 = scmp.eq.s32.totalorder %s9, 0
    %p97 = por %p95, %p96
    %p98 = scmp.ne.s32.totalorder %s87, %s90
    %p99 = scmp.eq.s32.totalorder %s14, 1
    %p100 = por %p98, %p99
    %p101 = scmp.ne.s32.totalorder %s90, %s91
    %p102 = scmp.eq.s32.totalorder %s14, 0
    %p103 = por %p101, %p102
    %p104 = scmp.ne.s32.totalorder %s90, %s91
    %p105 = scmp.eq.s32.totalorder %s15, 1
    %p106 = por %p104, %p105
    %p108 = scmp.ne.s32.totalorder %s91, %s107
    %p109 = scmp.eq.s32.totalorder %s15, 0
    %p110 = por %p108, %p109
    %p111 = scmp.le.s32.totalorder 1, %s9
    %p112 = scmp.lt.s32.totalorder %s9, 3
    %p113 = pnand %p111, %p112
    %p114 = pneg %p113
    // Predicated region
    $region9: #{fwd.16} parent=5 // pred_check
      _
    $region10: #{fwd.16} parent=5 // pred_check_branch
      %116 = sbr.rel (%p113) target = $region12
    $region11: #{fwd.16} parent=5 // pred_region
      %s117 = ssub.s32 %s9, 1
      // Predicated region
      $region13: #{fwd.16} parent=11 // pred_check
        %p118 = pneg %p56
      $region14: #{fwd.16} parent=11 // pred_check_branch
        %120 = sbr.rel (%p118) target = $region16
      $region15: #{fwd.16} parent=11 // pred_region
        _
      $region16: #{fwd.16} parent=11 // pred_fallthru
        _
      // Predicated region
      $region17: #{fwd.16} parent=11 // pred_check
        %p121 = pneg %p77
      $region18: #{fwd.16} parent=11 // pred_check_branch
        %123 = sbr.rel (%p121) target = $region20
      $region19: #{fwd.16} parent=11 // pred_region
        _
      $region20: #{fwd.16} parent=11 // pred_fallthru
        _
    $region12: #{fwd.16} parent=5 // pred_fallthru
      _
    %p124 = scmp.lt.s32.totalorder %s9, 2
    // Predicated region
    $region21: #{fwd.16} parent=5 // pred_check
      %p125 = pneg %p124
    $region22: #{fwd.16} parent=5 // pred_check_branch
      %127 = sbr.rel (%p125) target = $region24
    $region23: #{fwd.16} parent=5 // pred_region
      // Predicated region
      $region25: #{fwd.16} parent=23 // pred_check
        %p128 = pneg %p29
      $region26: #{fwd.16} parent=23 // pred_check_branch
        %130 = sbr.rel (%p128) target = $region28
      $region27: #{fwd.16} parent=23 // pred_region
        %p131 = scmp.lt.s32.totalorder %s9, 1
        %s132 = scalar_select %p131, %s9, 1
        %s133 = smul.addr %s132, 8
        %s134 = scalar_lea.vmem %s0, %s133
      $region28: #{fwd.16} parent=23 // pred_fallthru
        _
    $region24: #{fwd.16} parent=5 // pred_fallthru
      _
    %p135 = scmp.le.s32.totalorder 1, %s9
    %p136 = scmp.lt.s32.totalorder %s9, 3
    %p137 = pnand %p135, %p136
    %p138 = pneg %p137
    // Predicated region
    $region29: #{fwd.16} parent=5 // pred_check
      _
    $region30: #{fwd.16} parent=5 // pred_check_branch
      %140 = sbr.rel (%p137) target = $region32
    $region31: #{fwd.16} parent=5 // pred_region
      %s141 = ssub.s32 %s9, 1
      %p142 = scmp.lt.s32.totalorder %s14, 1
      %s143 = scalar_select %p142, %s14, 1
      %s144 = smul.addr %s143, 8
      %s145 = scalar_lea.vmem %s0, %s144
      %p146 = pneg %p35
      %p147 = pneg %p32
      %p148 = pneg %p56
      %p149 = pneg %p53
      %p150 = pneg %p77
      %p151 = pneg %p74
      %p152 = pneg %p103
      %p153 = pneg %p100
      %p154 = scmp.lt.s32.totalorder %s14, 1
      %s155 = scalar_select %p154, %s14, 1
      %s156 = smul.addr %s155, 8
      %s157 = scalar_lea.vmem %s3, %s156
      %p158 = scmp.lt.s32.totalorder %s14, 1
      %s159 = scalar_select %p158, %s14, 1
      %s160 = smul.addr %s159, 8
      %s161 = scalar_lea.vmem %s0, %s160
      %p162 = scmp.lt.s32.totalorder %s14, 1
      %s163 = scalar_select %p162, %s14, 1
      %s164 = smul.addr %s163, 8
      %s165 = scalar_lea.vmem %s3, %s164
      %v166 = vld [vmem:[%s161] sm:$0xff]
      %vm167 = vcmask 261120
      %v168 = vsel %vm167, %v166, 0.0
      %169 = vadd.xlane.f32.xlu0 %v168
      %v170 = vpop.xlane.xlu0 %169
      %v171 = vrcp.pop 32.0
      %v172 = vmul.f32 %v170, %v171
      %v173 = vsub.f32 %v166, %v172
      %v174 = vmul.f32 %v173, %v173
      %v175 = vsel %vm167, %v174, 0.0
      %176 = vadd.xlane.f32.xlu0 %v175
      %v177 = vpop.xlane.xlu0 %176
      %v178 = vmul.f32 %v177, %v171
      %v179 = vadd.f32 %v178, 1e-05
      %v180 = vrsqrt.pop %v179
      %v181 = vmul.f32 %v173, %v180
      %v182 = vld [vmem:[%s1] sm:$0x1]
      %v184 = vlaneseq
      %v185 = vshrl.u32 %v184, 7
      %v186 = vsub.s32 0, %v185
      %v187 = vrot.slane %v182, %v186
      %v189 = vmul.f32 %v181, %v187
      %v190 = vld [vmem:[%s2] sm:$0x1]
      %v192 = vlaneseq
      %v193 = vshrl.u32 %v192, 7
      %v194 = vsub.s32 0, %v193
      %v195 = vrot.slane %v190, %v194
      %v197 = vadd.f32 %v189, %v195
      %198 = vst.msk [vmem:[%s165] sm:$0xff] %vm167, %v197
      %p199 = scmp.lt.s32.totalorder %s14, 1
      %s200 = scalar_select %p199, %s14, 1
      %s201 = smul.addr %s200, 8
      %s202 = scalar_lea.vmem %s3, %s201
      // Predicated region
      $region33: #{fwd.16} parent=31 // pred_check
        %p203 = pneg %p100
      $region34: #{fwd.16} parent=31 // pred_check_branch
        %205 = sbr.rel (%p203) target = $region36
      $region35: #{fwd.16} parent=31 // pred_region
        _
      $region36: #{fwd.16} parent=31 // pred_fallthru
        _
    $region32: #{fwd.16} parent=5 // pred_fallthru
      _
    %p206 = scmp.le.s32.totalorder 2, %s9
    // Predicated region
    $region37: #{fwd.16} parent=5 // pred_check
      %p207 = pneg %p206
    $region38: #{fwd.16} parent=5 // pred_check_branch
      %209 = sbr.rel (%p207) target = $region40
    $region39: #{fwd.16} parent=5 // pred_region
      %s210 = ssub.s32 %s9, 2
      // Predicated region
      $region41: #{fwd.16} parent=39 // pred_check
        %p211 = pneg %p106
      $region42: #{fwd.16} parent=39 // pred_check_branch
        %213 = sbr.rel (%p211) target = $region44
      $region43: #{fwd.16} parent=39 // pred_region
        %p214 = scmp.lt.s32.totalorder %s15, 1
        %s215 = scalar_select %p214, %s15, 1
        %s216 = smul.addr %s215, 8
        %s217 = scalar_lea.vmem %s3, %s216
      $region44: #{fwd.16} parent=39 // pred_fallthru
        _
    $region40: #{fwd.16} parent=5 // pred_fallthru
      _
  $region6: #{fwd.16} parent=0 // loop_footer
    %s13 = sadd.s32 1, %s9
  $region7: #{fwd.16} parent=0 // loop_footer_branch
    %8 = sbr.rel target = $region3
  $region8: #{fwd.16} parent=0 // loop_exit
    _

// kernel: fwd.13
$region0: #{fwd.13}
  #allocation0 [shape = 'u32[]', space=smem, size = 0x4, offset = 0x4, fixed_abs, tag = 'smem constant byte address 0x4 - core index']
  #allocation1 [shape = 'u32[144,128]{1,0:T(1,128)}', space=vmem, size = 0x12000, scoped, tag = 'internal scratch']
  %s0 = inlined_call_operand.vmem [shape: f32[16,32], index: 0, kind: input, shape index: {}]
  %s1 = inlined_call_operand.vmem [shape: bf16[32,64], index: 1, kind: input, shape index: {}]
  %s2 = inlined_call_operand.vmem [shape: f32[1,64], index: 2, kind: input, shape index: {}]
  %s3 = inlined_call_operand.vmem [shape: bf16[64,32], index: 3, kind: input, shape index: {}]
  %s4 = inlined_call_operand.vmem [shape: f32[1,32], index: 4, kind: input, shape index: {}]
  %s5 = inlined_call_operand.vmem [shape: f32[1,32], index: 5, kind: input, shape index: {}]
  %s6 = inlined_call_operand.vmem [shape: f32[1,32], index: 6, kind: input, shape index: {}]
  %s7 = inlined_call_operand.vmem [shape: f32[16,32], index: 7, kind: output, shape index: {}]
  %s8 = sld [smem:[#allocation0]]
  $region61: #{fwd.13} parent=0
    _
  %s10 = ssub.s32 1, %s8
  %s11 = scalar_select 0, %s10, %s8
  loop: start=0, step=1, limit=4
  $region2: #{fwd.13} parent=0 // loop_pre_header
    _
  $region3: #{fwd.13} parent=0 // loop_header
    %s13 = sphi 0, %s17
    %p14 = scmp.ge.s32.totalorder %s13, 4
    %s23 = sphi 0, %s25
    %s26 = sphi 0, %s23
    %s27 = sphi 0, %s26
    %s43 = sphi 0, %s27
    %s47 = sphi 0, %s47
    %s49 = sphi 0, %s47
    %s50 = sphi 0, %s49
    %s64 = sphi 0, %s50
    %s68 = sphi 0, %s68
    %s70 = sphi 0, %s68
    %s71 = sphi 0, %s70
    %s85 = sphi 0, %s71
    %s89 = sphi 0, %s89
    %s91 = sphi 0, %s89
    %s92 = sphi 0, %s91
    %s106 = sphi 0, %s92
    %s110 = sphi 0, %s110
    %s112 = sphi 0, %s110
    %s113 = sphi 0, %s112
    %s127 = sphi 0, %s113
    %s131 = sphi 0, %s131
    %s133 = sphi 0, %s131
    %s134 = sphi 0, %s133
    %s148 = sphi 0, %s134
    %s152 = sphi 0, %s152
    %s154 = sphi 0, %s152
    %s155 = sphi 0, %s154
    %s169 = sphi 0, %s155
    %s175 = sphi 0, %s177
    %s178 = sphi 0, %s175
    %s179 = sphi 0, %s178
    %s195 = sphi 0, %s179
  $region4: #{fwd.13} parent=0 // loop_header_branch
    %16 = sbr.rel (%p14) target = $region8
  $region5: #{fwd.13} parent=0 // loop_body
    %s18 = ssub.s32 %s13, 1
    %s19 = ssub.s32 %s13, 2
    %s20 = sadd.s32 %s13, 1
    %s21 = ssub.s32 %s13, %s20
    %p22 = scmp.eq.s32.totalorder %s21, 0
    %s24 = sadd.s32 %s23, 1
    %s25 = scalar_select %p22, %s23, %s24
    %p28 = pneg %p22
    %p29 = scmp.eq.s32.totalorder %s13, 1
    %p30 = por %p28, %p29
    %p31 = scmp.ne.s32.totalorder %s23, %s26
    %p32 = scmp.eq.s32.totalorder %s13, 0
    %p33 = por %p31, %p32
    %p34 = scmp.ne.s32.totalorder %s23, %s26
    %p35 = scmp.eq.s32.totalorder %s18, 1
    %p36 = por %p34, %p35
    %p37 = scmp.ne.s32.totalorder %s26, %s27
    %p38 = scmp.eq.s32.totalorder %s18, 0
    %p39 = por %p37, %p38
    %p40 = scmp.ne.s32.totalorder %s26, %s27
    %p41 = scmp.eq.s32.totalorder %s19, 1
    %p42 = por %p40, %p41
    %p44 = scmp.ne.s32.totalorder %s27, %s43
    %p45 = scmp.eq.s32.totalorder %s19, 0
    %p46 = por %p44, %p45
    %s48 = sadd.s32 %s47, 1
    %p51 = scmp.eq.s32.totalorder %s13, 1
    %p52 = scmp.ne.s32.totalorder %s47, %s49
    %p53 = scmp.eq.s32.totalorder %s13, 0
    %p54 = por %p52, %p53
    %p55 = scmp.ne.s32.totalorder %s47, %s49
    %p56 = scmp.eq.s32.totalorder %s18, 1
    %p57 = por %p55, %p56
    %p58 = scmp.ne.s32.totalorder %s49, %s50
    %p59 = scmp.eq.s32.totalorder %s18, 0
    %p60 = por %p58, %p59
    %p61 = scmp.ne.s32.totalorder %s49, %s50
    %p62 = scmp.eq.s32.totalorder %s19, 1
    %p63 = por %p61, %p62
    %p65 = scmp.ne.s32.totalorder %s50, %s64
    %p66 = scmp.eq.s32.totalorder %s19, 0
    %p67 = por %p65, %p66
    %s69 = sadd.s32 %s68, 1
    %p72 = scmp.eq.s32.totalorder %s13, 1
    %p73 = scmp.ne.s32.totalorder %s68, %s70
    %p74 = scmp.eq.s32.totalorder %s13, 0
    %p75 = por %p73, %p74
    %p76 = scmp.ne.s32.totalorder %s68, %s70
    %p77 = scmp.eq.s32.totalorder %s18, 1
    %p78 = por %p76, %p77
    %p79 = scmp.ne.s32.totalorder %s70, %s71
    %p80 = scmp.eq.s32.totalorder %s18, 0
    %p81 = por %p79, %p80
    %p82 = scmp.ne.s32.totalorder %s70, %s71
    %p83 = scmp.eq.s32.totalorder %s19, 1
    %p84 = por %p82, %p83
    %p86 = scmp.ne.s32.totalorder %s71, %s85
    %p87 = scmp.eq.s32.totalorder %s19, 0
    %p88 = por %p86, %p87
    %s90 = sadd.s32 %s89, 1
    %p93 = scmp.eq.s32.totalorder %s13, 1
    %p94 = scmp.ne.s32.totalorder %s89, %s91
    %p95 = scmp.eq.s32.totalorder %s13, 0
    %p96 = por %p94, %p95
    %p97 = scmp.ne.s32.totalorder %s89, %s91
    %p98 = scmp.eq.s32.totalorder %s18, 1
    %p99 = por %p97, %p98
    %p100 = scmp.ne.s32.totalorder %s91, %s92
    %p101 = scmp.eq.s32.totalorder %s18, 0
    %p102 = por %p100, %p101
    %p103 = scmp.ne.s32.totalorder %s91, %s92
    %p104 = scmp.eq.s32.totalorder %s19, 1
    %p105 = por %p103, %p104
    %p107 = scmp.ne.s32.totalorder %s92, %s106
    %p108 = scmp.eq.s32.totalorder %s19, 0
    %p109 = por %p107, %p108
    %s111 = sadd.s32 %s110, 1
    %p114 = scmp.eq.s32.totalorder %s13, 1
    %p115 = scmp.ne.s32.totalorder %s110, %s112
    %p116 = scmp.eq.s32.totalorder %s13, 0
    %p117 = por %p115, %p116
    %p118 = scmp.ne.s32.totalorder %s110, %s112
    %p119 = scmp.eq.s32.totalorder %s18, 1
    %p120 = por %p118, %p119
    %p121 = scmp.ne.s32.totalorder %s112, %s113
    %p122 = scmp.eq.s32.totalorder %s18, 0
    %p123 = por %p121, %p122
    %p124 = scmp.ne.s32.totalorder %s112, %s113
    %p125 = scmp.eq.s32.totalorder %s19, 1
    %p126 = por %p124, %p125
    %p128 = scmp.ne.s32.totalorder %s113, %s127
    %p129 = scmp.eq.s32.totalorder %s19, 0
    %p130 = por %p128, %p129
    %s132 = sadd.s32 %s131, 1
    %p135 = scmp.eq.s32.totalorder %s13, 1
    %p136 = scmp.ne.s32.totalorder %s131, %s133
    %p137 = scmp.eq.s32.totalorder %s13, 0
    %p138 = por %p136, %p137
    %p139 = scmp.ne.s32.totalorder %s131, %s133
    %p140 = scmp.eq.s32.totalorder %s18, 1
    %p141 = por %p139, %p140
    %p142 = scmp.ne.s32.totalorder %s133, %s134
    %p143 = scmp.eq.s32.totalorder %s18, 0
    %p144 = por %p142, %p143
    %p145 = scmp.ne.s32.totalorder %s133, %s134
    %p146 = scmp.eq.s32.totalorder %s19, 1
    %p147 = por %p145, %p146
    %p149 = scmp.ne.s32.totalorder %s134, %s148
    %p150 = scmp.eq.s32.totalorder %s19, 0
    %p151 = por %p149, %p150
    %s153 = sadd.s32 %s152, 1
    %p156 = scmp.eq.s32.totalorder %s13, 1
    %p157 = scmp.ne.s32.totalorder %s152, %s154
    %p158 = scmp.eq.s32.totalorder %s13, 0
    %p159 = por %p157, %p158
    %p160 = scmp.ne.s32.totalorder %s152, %s154
    %p161 = scmp.eq.s32.totalorder %s18, 1
    %p162 = por %p160, %p161
    %p163 = scmp.ne.s32.totalorder %s154, %s155
    %p164 = scmp.eq.s32.totalorder %s18, 0
    %p165 = por %p163, %p164
    %p166 = scmp.ne.s32.totalorder %s154, %s155
    %p167 = scmp.eq.s32.totalorder %s19, 1
    %p168 = por %p166, %p167
    %p170 = scmp.ne.s32.totalorder %s155, %s169
    %p171 = scmp.eq.s32.totalorder %s19, 0
    %p172 = por %p170, %p171
    %s173 = ssub.s32 %s13, %s20
    %p174 = scmp.eq.s32.totalorder %s173, 0
    %s176 = sadd.s32 %s175, 1
    %s177 = scalar_select %p174, %s175, %s176
    %p180 = pneg %p174
    %p181 = scmp.eq.s32.totalorder %s13, 1
    %p182 = por %p180, %p181
    %p183 = scmp.ne.s32.totalorder %s175, %s178
    %p184 = scmp.eq.s32.totalorder %s13, 0
    %p185 = por %p183, %p184
    %p186 = scmp.ne.s32.totalorder %s175, %s178
    %p187 = scmp.eq.s32.totalorder %s18, 1
    %p188 = por %p186, %p187
    %p189 = scmp.ne.s32.totalorder %s178, %s179
    %p190 = scmp.eq.s32.totalorder %s18, 0
    %p191 = por %p189, %p190
    %p192 = scmp.ne.s32.totalorder %s178, %s179
    %p193 = scmp.eq.s32.totalorder %s19, 1
    %p194 = por %p192, %p193
    %p196 = scmp.ne.s32.totalorder %s179, %s195
    %p197 = scmp.eq.s32.totalorder %s19, 0
    %p198 = por %p196, %p197
    %p199 = scmp.le.s32.totalorder 1, %s13
    %p200 = scmp.lt.s32.totalorder %s13, 3
    %p201 = pnand %p199, %p200
    %p202 = pneg %p201
    // Predicated region
    $region9: #{fwd.13} parent=5 // pred_check
      _
    $region10: #{fwd.13} parent=5 // pred_check_branch
      %204 = sbr.rel (%p201) target = $region12
    $region11: #{fwd.13} parent=5 // pred_region
      %s205 = ssub.s32 %s13, 1
      // Predicated region
      $region13: #{fwd.13} parent=11 // pred_check
        %p206 = pneg %p60
      $region14: #{fwd.13} parent=11 // pred_check_branch
        %208 = sbr.rel (%p206) target = $region16
      $region15: #{fwd.13} parent=11 // pred_region
        _
      $region16: #{fwd.13} parent=11 // pred_fallthru
        _
      // Predicated region
      $region17: #{fwd.13} parent=11 // pred_check
        %p209 = pneg %p81
      $region18: #{fwd.13} parent=11 // pred_check_branch
        %211 = sbr.rel (%p209) target = $region20
      $region19: #{fwd.13} parent=11 // pred_region
        _
      $region20: #{fwd.13} parent=11 // pred_fallthru
        _
      // Predicated region
      $region21: #{fwd.13} parent=11 // pred_check
        %p212 = pneg %p102
      $region22: #{fwd.13} parent=11 // pred_check_branch
        %214 = sbr.rel (%p212) target = $region24
      $region23: #{fwd.13} parent=11 // pred_region
        _
      $region24: #{fwd.13} parent=11 // pred_fallthru
        _
      // Predicated region
      $region25: #{fwd.13} parent=11 // pred_check
        %p215 = pneg %p123
      $region26: #{fwd.13} parent=11 // pred_check_branch
        %217 = sbr.rel (%p215) target = $region28
      $region27: #{fwd.13} parent=11 // pred_region
        _
      $region28: #{fwd.13} parent=11 // pred_fallthru
        _
      // Predicated region
      $region29: #{fwd.13} parent=11 // pred_check
        %p218 = pneg %p144
      $region30: #{fwd.13} parent=11 // pred_check_branch
        %220 = sbr.rel (%p218) target = $region32
      $region31: #{fwd.13} parent=11 // pred_region
        _
      $region32: #{fwd.13} parent=11 // pred_fallthru
        _
      // Predicated region
      $region33: #{fwd.13} parent=11 // pred_check
        %p221 = pneg %p165
      $region34: #{fwd.13} parent=11 // pred_check_branch
        %223 = sbr.rel (%p221) target = $region36
      $region35: #{fwd.13} parent=11 // pred_region
        _
      $region36: #{fwd.13} parent=11 // pred_fallthru
        _
    $region12: #{fwd.13} parent=5 // pred_fallthru
      _
    %p224 = scmp.lt.s32.totalorder %s13, 2
    // Predicated region
    $region37: #{fwd.13} parent=5 // pred_check
      %p225 = pneg %p224
    $region38: #{fwd.13} parent=5 // pred_check_branch
      %227 = sbr.rel (%p225) target = $region40
    $region39: #{fwd.13} parent=5 // pred_region
      // Predicated region
      $region41: #{fwd.13} parent=39 // pred_check
        %p228 = pneg %p33
      $region42: #{fwd.13} parent=39 // pred_check_branch
        %230 = sbr.rel (%p228) target = $region44
      $region43: #{fwd.13} parent=39 // pred_region
        %p231 = scmp.lt.s32.totalorder %s13, 1
        %s232 = scalar_select %p231, %s13, 1
        %s233 = smul.addr %s232, 8
        %s234 = scalar_lea.vmem %s0, %s233
      $region44: #{fwd.13} parent=39 // pred_fallthru
        _
    $region40: #{fwd.13} parent=5 // pred_fallthru
      _
    %p235 = scmp.le.s32.totalorder 1, %s13
    %p236 = scmp.lt.s32.totalorder %s13, 3
    %p237 = pnand %p235, %p236
    %p238 = pneg %p237
    // Predicated region
    $region45: #{fwd.13} parent=5 // pred_check
      _
    $region46: #{fwd.13} parent=5 // pred_check_branch
      %240 = sbr.rel (%p237) target = $region48
    $region47: #{fwd.13} parent=5 // pred_region
      %s241 = ssub.s32 %s13, 1
      %p242 = scmp.lt.s32.totalorder %s18, 1
      %s243 = scalar_select %p242, %s18, 1
      %s244 = smul.addr %s243, 8
      %s245 = scalar_lea.vmem %s0, %s244
      %p246 = pneg %p39
      %p247 = pneg %p36
      %p248 = pneg %p60
      %p249 = pneg %p57
      %p250 = pneg %p81
      %p251 = pneg %p78
      %p252 = pneg %p102
      %p253 = pneg %p99
      %p254 = pneg %p123
      %p255 = pneg %p120
      %p256 = pneg %p144
      %p257 = pneg %p141
      %p258 = pneg %p165
      %p259 = pneg %p162
      %p260 = pneg %p191
      %p261 = pneg %p188
      %p262 = scmp.lt.s32.totalorder %s18, 1
      %s263 = scalar_select %p262, %s18, 1
      %s264 = smul.addr %s263, 8
      %s265 = scalar_lea.vmem %s7, %s264
      %p266 = scmp.lt.s32.totalorder %s18, 1
      %s267 = scalar_select %p266, %s18, 1
      %s268 = smul.addr %s267, 8
      %s269 = scalar_lea.vmem %s0, %s268
      %p270 = scmp.lt.s32.totalorder %s18, 1
      %s271 = scalar_select %p270, %s18, 1
      %s272 = smul.addr %s271, 8
      %s273 = scalar_lea.vmem %s7, %s272
      %v275 = vld [vmem:[%s269] sm:$0xff]
      %v276 = vld [vmem:[%s1] sm:$0xf]
      %v277 = vld [vmem:[%s1 + $0x4] sm:$0xf]
      %v278 = vld [vmem:[%s1 + $0x8] sm:$0xf]
      %v279 = vld [vmem:[%s1 + $0xc] sm:$0xf]
      %v280 = vpack.c.bf16 %v275, %v275
      %v281 = vld [vmem:[%s2] sm:$0x1]
      %v283 = vlaneseq
      %v284 = vshrl.u32 %v283, 7
      %v285 = vsub.s32 0, %v284
      %v286 = vrot.slane %v281, %v285
      %v292 = vunpack.c.l.b16 %v276
      %v293 = vunpack.c.l.b16 %v277
      %v294 = vunpack.c.l.b16 %v278
      %v295 = vunpack.c.l.b16 %v279
      %v296 = vpack.c.b16 %v293, %v292
      %v297 = vpack.c.b16 %v295, %v294
      %vm300 = vcmask 261120
      %v302 = vsel %vm300, %v280, 0
      %304 = vmatprep.subr.bf16.mxu0 0
      %305 = vmatpush1.bf16.msra.mxu0 0
      %306 = vmatprep.subr.bf16.mxu0 0
      %307 = vmatpush1.bf16.msra.mxu0 0
      %308 = vmatprep.subr.bf16.mxu0 0
      %309 = vmatpush1.bf16.msra.mxu0 0
      %310 = vmatprep.subr.bf16.mxu0 0
      %311 = vmatpush1.bf16.msra.mxu0 0
      %312 = vmatprep.subr.bf16.mxu0 0
      %313 = vmatpush1.bf16.msra.mxu0 0
      %314 = vmatprep.subr.bf16.mxu0 0
      %315 = vmatpush1.bf16.msra.mxu0 0
      %316 = vmatprep.subr.bf16.mxu0 0
      %317 = vmatpush1.bf16.msra.mxu0 %v297
      %318 = vmatprep.subr.bf16.mxu0 0
      %319 = vmatpush1.bf16.msra.mxu0 %v296
      %320 = vmatprep.subr.bf16.mxu0 0
      %321 = vmatpush2.bf16.msra.mxu0 0
      %322 = vmatprep.subr.bf16.mxu0 0
      %323 = vmatpush2.bf16.msra.mxu0 0
      %324 = vmatprep.subr.bf16.mxu0 0
      %325 = vmatpush2.bf16.msra.mxu0 0
      %326 = vmatprep.subr.bf16.mxu0 0
      %327 = vmatpush2.bf16.msra.mxu0 0
      %328 = vmatprep.subr.bf16.mxu0 0
      %329 = vmatpush2.bf16.msra.mxu0 0
      %330 = vmatprep.subr.bf16.mxu0 0
      %331 = vmatpush2.bf16.msra.mxu0 0
      %332 = vmatprep.subr.bf16.mxu0 0
      %333 = vmatpush2.bf16.msra.mxu0 0
      %334 = vmatprep.subr.bf16.mxu0 0
      %335 = vmatpush2.bf16.msra.mxu0 0
      %336 = vmatprep.mubr.bf16.mxu0 0
      %337 = vmatmul.mubr.bf16.gmra.mxu0 %v302
      %v338 = vpop.f32.mrf.mxu0
      %v339 = vadd.f32 %v286, %v338
      %v340 = vpop.f32.mrf.mxu0
      %v341 = vpop.f32.mrf.mxu0
      %v342 = vpop.f32.mrf.mxu0
      %343 = vdwg.mxu0
      %v344 = vmax.f32 %v339, 0.0
      %v345 = vld [vmem:[%s3] sm:$0xf]
      %v346 = vld [vmem:[%s3 + $0x4] sm:$0xf]
      %v347 = vld [vmem:[%s3 + $0x8] sm:$0xf]
      %v348 = vld [vmem:[%s3 + $0xc] sm:$0xf]
      %v349 = vld [vmem:[%s3 + $0x10] sm:$0xf]
      %v350 = vld [vmem:[%s3 + $0x14] sm:$0xf]
      %v351 = vld [vmem:[%s3 + $0x18] sm:$0xf]
      %v352 = vld [vmem:[%s3 + $0x1c] sm:$0xf]
      %v353 = vpack.c.bf16 %v344, %v344
      %v354 = vld [vmem:[%s4] sm:$0x1]
      %v356 = vlaneseq
      %v357 = vshrl.u32 %v356, 7
      %v358 = vsub.s32 0, %v357
      %v359 = vrot.slane %v354, %v358
      %v369 = vunpack.c.l.b16 %v345
      %v370 = vunpack.c.l.b16 %v346
      %v371 = vunpack.c.l.b16 %v347
      %v372 = vunpack.c.l.b16 %v348
      %v373 = vunpack.c.l.b16 %v349
      %v374 = vunpack.c.l.b16 %v350
      %v375 = vunpack.c.l.b16 %v351
      %v376 = vunpack.c.l.b16 %v352
      %v377 = vpack.c.b16 %v370, %v369
      %v378 = vpack.c.b16 %v372, %v371
      %v379 = vpack.c.b16 %v374, %v373
      %v380 = vpack.c.b16 %v376, %v375
      %vm385 = vcmask 523264
      %v387 = vsel %vm385, %v353, 0
      %389 = vmatprep.subr.bf16.mxu0 0
      %390 = vmatpush1.bf16.msra.mxu0 0
      %391 = vmatprep.subr.bf16.mxu0 0
      %392 = vmatpush1.bf16.msra.mxu0 0
      %393 = vmatprep.subr.bf16.mxu0 0
      %394 = vmatpush1.bf16.msra.mxu0 0
      %395 = vmatprep.subr.bf16.mxu0 0
      %396 = vmatpush1.bf16.msra.mxu0 0
      %397 = vmatprep.subr.bf16.mxu0 0
      %398 = vmatpush1.bf16.msra.mxu0 %v380
      %399 = vmatprep.subr.bf16.mxu0 0
      %400 = vmatpush1.bf16.msra.mxu0 %v379
      %401 = vmatprep.subr.bf16.mxu0 0
      %402 = vmatpush1.bf16.msra.mxu0 %v378
      %403 = vmatprep.subr.bf16.mxu0 0
      %404 = vmatpush1.bf16.msra.mxu0 %v377
      %405 = vmatprep.subr.bf16.mxu0 0
      %406 = vmatpush2.bf16.msra.mxu0 0
      %407 = vmatprep.subr.bf16.mxu0 0
      %408 = vmatpush2.bf16.msra.mxu0 0
      %409 = vmatprep.subr.bf16.mxu0 0
      %410 = vmatpush2.bf16.msra.mxu0 0
      %411 = vmatprep.subr.bf16.mxu0 0
      %412 = vmatpush2.bf16.msra.mxu0 0
      %413 = vmatprep.subr.bf16.mxu0 0
      %414 = vmatpush2.bf16.msra.mxu0 0
      %415 = vmatprep.subr.bf16.mxu0 0
      %416 = vmatpush2.bf16.msra.mxu0 0
      %417 = vmatprep.subr.bf16.mxu0 0
      %418 = vmatpush2.bf16.msra.mxu0 0
      %419 = vmatprep.subr.bf16.mxu0 0
      %420 = vmatpush2.bf16.msra.mxu0 0
      %421 = vmatprep.mubr.bf16.mxu0 0
      %422 = vmatmul.mubr.bf16.gmra.mxu0 %v387
      %v423 = vpop.f32.mrf.mxu0
      %v424 = vadd.f32 %v359, %v423
      %v425 = vpop.f32.mrf.mxu0
      %v426 = vpop.f32.mrf.mxu0
      %v427 = vpop.f32.mrf.mxu0
      %428 = vdwg.mxu0
      %v429 = vadd.f32 %v275, %v424
      %v430 = vsel %vm300, %v429, 0.0
      %431 = vadd.xlane.f32.xlu0 %v430
      %v432 = vpop.xlane.xlu0 %431
      %v433 = vrcp.pop 32.0
      %v434 = vmul.f32 %v432, %v433
      %v435 = vsub.f32 %v429, %v434
      %v436 = vmul.f32 %v435, %v435
      %v437 = vsel %vm300, %v436, 0.0
      %438 = vadd.xlane.f32.xlu0 %v437
      %v439 = vpop.xlane.xlu0 %438
      %v440 = vmul.f32 %v439, %v433
      %v441 = vadd.f32 %v440, 1e-05
      %v442 = vrsqrt.pop %v441
      %v443 = vmul.f32 %v435, %v442
      %v444 = vld [vmem:[%s5] sm:$0x1]
      %v446 = vlaneseq
      %v447 = vshrl.u32 %v446, 7
      %v448 = vsub.s32 0, %v447
      %v449 = vrot.slane %v444, %v448
      %v451 = vmul.f32 %v443, %v449
      %v452 = vld [vmem:[%s6] sm:$0x1]
      %v454 = vlaneseq
      %v455 = vshrl.u32 %v454, 7
      %v456 = vsub.s32 0, %v455
      %v457 = vrot.slane %v452, %v456
      %v459 = vadd.f32 %v451, %v457
      %460 = vst.msk [vmem:[%s273] sm:$0xff] %vm300, %v459
      %p461 = scmp.lt.s32.totalorder %s18, 1
      %s462 = scalar_select %p461, %s18, 1
      %s463 = smul.addr %s462, 8
      %s464 = scalar_lea.vmem %s7, %s463
      // Predicated region
      $region49: #{fwd.13} parent=47 // pred_check
        %p465 = pneg %p188
      $region50: #{fwd.13} parent=47 // pred_check_branch
        %467 = sbr.rel (%p465) target = $region52
      $region51: #{fwd.13} parent=47 // pred_region
        _
      $region52: #{fwd.13} parent=47 // pred_fallthru
        _
    $region48: #{fwd.13} parent=5 // pred_fallthru
      _
    %p468 = scmp.le.s32.totalorder 2, %s13
    // Predicated region
    $region53: #{fwd.13} parent=5 // pred_check
      %p469 = pneg %p468
    $region54: #{fwd.13} parent=5 // pred_check_branch
      %471 = sbr.rel (%p469) target = $region56
    $region55: #{fwd.13} parent=5 // pred_region
      %s472 = ssub.s32 %s13, 2
      // Predicated region
      $region57: #{fwd.13} parent=55 // pred_check
        %p473 = pneg %p194
      $region58: #{fwd.13} parent=55 // pred_check_branch
        %475 = sbr.rel (%p473) target = $region60
      $region59: #{fwd.13} parent=55 // pred_region
        %p476 = scmp.lt.s32.totalorder %s19, 1
        %s477 = scalar_select %p476, %s19, 1
        %s478 = smul.addr %s477, 8
        %s479 = scalar_lea.vmem %s7, %s478
      $region60: #{fwd.13} parent=55 // pred_fallthru
        _
    $region56: #{fwd.13} parent=5 // pred_fallthru
      _
  $region6: #{fwd.13} parent=0 // loop_footer
    %s17 = sadd.s32 1, %s13
  $region7: #{fwd.13} parent=0 // loop_footer_branch
    %12 = sbr.rel target = $region3
  $region8: #{fwd.13} parent=0 // loop_exit
    _

// kernel: fwd.12
$region0: #{fwd.12}
  #allocation0 [shape = 'u32[]', space=smem, size = 0x4, offset = 0x4, fixed_abs, tag = 'smem constant byte address 0x4 - core index']
  #allocation1 [shape = 'u32[144,128]{1,0:T(1,128)}', space=vmem, size = 0x12000, scoped, tag = 'internal scratch']
  #allocation2 [shape = 'f32[8,32]{1,0:T(8,128)}', space=vmem, size = 0x1000, scoped, tag = 'scratch operand']
  %s0 = inlined_call_operand.vmem [shape: f32[2,8,32], index: 0, kind: input, shape index: {}, may-alias: {0,1}]
  %s1 = inlined_call_operand.vmem [shape: f32[2,8,32], index: 1, kind: input, shape index: {}, may-alias: {0,1}]
  %s2 = inlined_call_operand.vmem [shape: bf16[32,96], index: 2, kind: input, shape index: {}]
  %s3 = inlined_call_operand.vmem [shape: f32[1,96], index: 3, kind: input, shape index: {}]
  %s4 = inlined_call_operand.vmem [shape: bf16[32,32], index: 4, kind: input, shape index: {}]
  %s5 = inlined_call_operand.vmem [shape: f32[1,32], index: 5, kind: input, shape index: {}]
  %s6 = inlined_call_operand.vmem [shape: f32[8,8], index: 6, kind: input, shape index: {}]
  %s7 = inlined_call_operand.vmem [shape: f32[2,1,8], index: 7, kind: input, shape index: {}]
  %s8 = inlined_call_operand.vmem [shape: f32[1,32], index: 8, kind: input, shape index: {}]
  %s9 = inlined_call_operand.vmem [shape: f32[1,32], index: 9, kind: input, shape index: {}]
  %s10 = inlined_call_operand.vmem [shape: f32[2,8,32], index: 10, kind: output, shape index: {}]
  %s11 = sld [smem:[#allocation0]]
  $region73: #{fwd.12} parent=0
    _
  %s13 = ssub.s32 1, %s11
  %s14 = scalar_select 0, %s13, %s11
  loop: start=0, step=1, limit=4
  $region2: #{fwd.12} parent=0 // loop_pre_header
    _
  $region3: #{fwd.12} parent=0 // loop_header
    %s16 = sphi 0, %s20
    %p17 = scmp.ge.s32.totalorder %s16, 4
    %s26 = sphi 0, %s28
    %s29 = sphi 0, %s26
    %s30 = sphi 0, %s29
    %s46 = sphi 0, %s30
    %s52 = sphi 0, %s54
    %s55 = sphi 0, %s52
    %s56 = sphi 0, %s55
    %s72 = sphi 0, %s56
    %s76 = sphi 0, %s76
    %s78 = sphi 0, %s76
    %s79 = sphi 0, %s78
    %s93 = sphi 0, %s79
    %s97 = sphi 0, %s97
    %s99 = sphi 0, %s97
    %s100 = sphi 0, %s99
    %s114 = sphi 0, %s100
    %s118 = sphi 0, %s118
    %s120 = sphi 0, %s118
    %s121 = sphi 0, %s120
    %s135 = sphi 0, %s121
    %s139 = sphi 0, %s139
    %s141 = sphi 0, %s139
    %s142 = sphi 0, %s141
    %s156 = sphi 0, %s142
    %s160 = sphi 0, %s160
    %s162 = sphi 0, %s160
    %s163 = sphi 0, %s162
    %s177 = sphi 0, %s163
    %s183 = sphi 0, %s185
    %s186 = sphi 0, %s183
    %s187 = sphi 0, %s186
    %s203 = sphi 0, %s187
    %s207 = sphi 0, %s207
    %s209 = sphi 0, %s207
    %s210 = sphi 0, %s209
    %s224 = sphi 0, %s210
    %s228 = sphi 0, %s228
    %s230 = sphi 0, %s228
    %s231 = sphi 0, %s230
    %s245 = sphi 0, %s231
    %s251 = sphi 0, %s253
    %s254 = sphi 0, %s251
    %s255 = sphi 0, %s254
    %s271 = sphi 0, %s255
  $region4: #{fwd.12} parent=0 // loop_header_branch
    %19 = sbr.rel (%p17) target = $region8
  $region5: #{fwd.12} parent=0 // loop_body
    %s21 = ssub.s32 %s16, 1
    %s22 = ssub.s32 %s16, 2
    %s23 = sadd.s32 %s16, 1
    %s24 = ssub.s32 %s16, %s23
    %p25 = scmp.eq.s32.totalorder %s24, 0
    %s27 = sadd.s32 %s26, 1
    %s28 = scalar_select %p25, %s26, %s27
    %p31 = pneg %p25
    %p32 = scmp.eq.s32.totalorder %s16, 1
    %p33 = por %p31, %p32
    %p34 = scmp.ne.s32.totalorder %s26, %s29
    %p35 = scmp.eq.s32.totalorder %s16, 0
    %p36 = por %p34, %p35
    %p37 = scmp.ne.s32.totalorder %s26, %s29
    %p38 = scmp.eq.s32.totalorder %s21, 1
    %p39 = por %p37, %p38
    %p40 = scmp.ne.s32.totalorder %s29, %s30
    %p41 = scmp.eq.s32.totalorder %s21, 0
    %p42 = por %p40, %p41
    %p43 = scmp.ne.s32.totalorder %s29, %s30
    %p44 = scmp.eq.s32.totalorder %s22, 1
    %p45 = por %p43, %p44
    %p47 = scmp.ne.s32.totalorder %s30, %s46
    %p48 = scmp.eq.s32.totalorder %s22, 0
    %p49 = por %p47, %p48
    %s50 = ssub.s32 %s16, %s23
    %p51 = scmp.eq.s32.totalorder %s50, 0
    %s53 = sadd.s32 %s52, 1
    %s54 = scalar_select %p51, %s52, %s53
    %p57 = pneg %p51
    %p58 = scmp.eq.s32.totalorder %s16, 1
    %p59 = por %p57, %p58
    %p60 = scmp.ne.s32.totalorder %s52, %s55
    %p61 = scmp.eq.s32.totalorder %s16, 0
    %p62 = por %p60, %p61
    %p63 = scmp.ne.s32.totalorder %s52, %s55
    %p64 = scmp.eq.s32.totalorder %s21, 1
    %p65 = por %p63, %p64
    %p66 = scmp.ne.s32.totalorder %s55, %s56
    %p67 = scmp.eq.s32.totalorder %s21, 0
    %p68 = por %p66, %p67
    %p69 = scmp.ne.s32.totalorder %s55, %s56
    %p70 = scmp.eq.s32.totalorder %s22, 1
    %p71 = por %p69, %p70
    %p73 = scmp.ne.s32.totalorder %s56, %s72
    %p74 = scmp.eq.s32.totalorder %s22, 0
    %p75 = por %p73, %p74
    %s77 = sadd.s32 %s76, 1
    %p80 = scmp.eq.s32.totalorder %s16, 1
    %p81 = scmp.ne.s32.totalorder %s76, %s78
    %p82 = scmp.eq.s32.totalorder %s16, 0
    %p83 = por %p81, %p82
    %p84 = scmp.ne.s32.totalorder %s76, %s78
    %p85 = scmp.eq.s32.totalorder %s21, 1
    %p86 = por %p84, %p85
    %p87 = scmp.ne.s32.totalorder %s78, %s79
    %p88 = scmp.eq.s32.totalorder %s21, 0
    %p89 = por %p87, %p88
    %p90 = scmp.ne.s32.totalorder %s78, %s79
    %p91 = scmp.eq.s32.totalorder %s22, 1
    %p92 = por %p90, %p91
    %p94 = scmp.ne.s32.totalorder %s79, %s93
    %p95 = scmp.eq.s32.totalorder %s22, 0
    %p96 = por %p94, %p95
    %s98 = sadd.s32 %s97, 1
    %p101 = scmp.eq.s32.totalorder %s16, 1
    %p102 = scmp.ne.s32.totalorder %s97, %s99
    %p103 = scmp.eq.s32.totalorder %s16, 0
    %p104 = por %p102, %p103
    %p105 = scmp.ne.s32.totalorder %s97, %s99
    %p106 = scmp.eq.s32.totalorder %s21, 1
    %p107 = por %p105, %p106
    %p108 = scmp.ne.s32.totalorder %s99, %s100
    %p109 = scmp.eq.s32.totalorder %s21, 0
    %p110 = por %p108, %p109
    %p111 = scmp.ne.s32.totalorder %s99, %s100
    %p112 = scmp.eq.s32.totalorder %s22, 1
    %p113 = por %p111, %p112
    %p115 = scmp.ne.s32.totalorder %s100, %s114
    %p116 = scmp.eq.s32.totalorder %s22, 0
    %p117 = por %p115, %p116
    %s119 = sadd.s32 %s118, 1
    %p122 = scmp.eq.s32.totalorder %s16, 1
    %p123 = scmp.ne.s32.totalorder %s118, %s120
    %p124 = scmp.eq.s32.totalorder %s16, 0
    %p125 = por %p123, %p124
    %p126 = scmp.ne.s32.totalorder %s118, %s120
    %p127 = scmp.eq.s32.totalorder %s21, 1
    %p128 = por %p126, %p127
    %p129 = scmp.ne.s32.totalorder %s120, %s121
    %p130 = scmp.eq.s32.totalorder %s21, 0
    %p131 = por %p129, %p130
    %p132 = scmp.ne.s32.totalorder %s120, %s121
    %p133 = scmp.eq.s32.totalorder %s22, 1
    %p134 = por %p132, %p133
    %p136 = scmp.ne.s32.totalorder %s121, %s135
    %p137 = scmp.eq.s32.totalorder %s22, 0
    %p138 = por %p136, %p137
    %s140 = sadd.s32 %s139, 1
    %p143 = scmp.eq.s32.totalorder %s16, 1
    %p144 = scmp.ne.s32.totalorder %s139, %s141
    %p145 = scmp.eq.s32.totalorder %s16, 0
    %p146 = por %p144, %p145
    %p147 = scmp.ne.s32.totalorder %s139, %s141
    %p148 = scmp.eq.s32.totalorder %s21, 1
    %p149 = por %p147, %p148
    %p150 = scmp.ne.s32.totalorder %s141, %s142
    %p151 = scmp.eq.s32.totalorder %s21, 0
    %p152 = por %p150, %p151
    %p153 = scmp.ne.s32.totalorder %s141, %s142
    %p154 = scmp.eq.s32.totalorder %s22, 1
    %p155 = por %p153, %p154
    %p157 = scmp.ne.s32.totalorder %s142, %s156
    %p158 = scmp.eq.s32.totalorder %s22, 0
    %p159 = por %p157, %p158
    %s161 = sadd.s32 %s160, 1
    %p164 = scmp.eq.s32.totalorder %s16, 1
    %p165 = scmp.ne.s32.totalorder %s160, %s162
    %p166 = scmp.eq.s32.totalorder %s16, 0
    %p167 = por %p165, %p166
    %p168 = scmp.ne.s32.totalorder %s160, %s162
    %p169 = scmp.eq.s32.totalorder %s21, 1
    %p170 = por %p168, %p169
    %p171 = scmp.ne.s32.totalorder %s162, %s163
    %p172 = scmp.eq.s32.totalorder %s21, 0
    %p173 = por %p171, %p172
    %p174 = scmp.ne.s32.totalorder %s162, %s163
    %p175 = scmp.eq.s32.totalorder %s22, 1
    %p176 = por %p174, %p175
    %p178 = scmp.ne.s32.totalorder %s163, %s177
    %p179 = scmp.eq.s32.totalorder %s22, 0
    %p180 = por %p178, %p179
    %s181 = ssub.s32 %s16, %s23
    %p182 = scmp.eq.s32.totalorder %s181, 0
    %s184 = sadd.s32 %s183, 1
    %s185 = scalar_select %p182, %s183, %s184
    %p188 = pneg %p182
    %p189 = scmp.eq.s32.totalorder %s16, 1
    %p190 = por %p188, %p189
    %p191 = scmp.ne.s32.totalorder %s183, %s186
    %p192 = scmp.eq.s32.totalorder %s16, 0
    %p193 = por %p191, %p192
    %p194 = scmp.ne.s32.totalorder %s183, %s186
    %p195 = scmp.eq.s32.totalorder %s21, 1
    %p196 = por %p194, %p195
    %p197 = scmp.ne.s32.totalorder %s186, %s187
    %p198 = scmp.eq.s32.totalorder %s21, 0
    %p199 = por %p197, %p198
    %p200 = scmp.ne.s32.totalorder %s186, %s187
    %p201 = scmp.eq.s32.totalorder %s22, 1
    %p202 = por %p200, %p201
    %p204 = scmp.ne.s32.totalorder %s187, %s203
    %p205 = scmp.eq.s32.totalorder %s22, 0
    %p206 = por %p204, %p205
    %s208 = sadd.s32 %s207, 1
    %p211 = scmp.eq.s32.totalorder %s16, 1
    %p212 = scmp.ne.s32.totalorder %s207, %s209
    %p213 = scmp.eq.s32.totalorder %s16, 0
    %p214 = por %p212, %p213
    %p215 = scmp.ne.s32.totalorder %s207, %s209
    %p216 = scmp.eq.s32.totalorder %s21, 1
    %p217 = por %p215, %p216
    %p218 = scmp.ne.s32.totalorder %s209, %s210
    %p219 = scmp.eq.s32.totalorder %s21, 0
    %p220 = por %p218, %p219
    %p221 = scmp.ne.s32.totalorder %s209, %s210
    %p222 = scmp.eq.s32.totalorder %s22, 1
    %p223 = por %p221, %p222
    %p225 = scmp.ne.s32.totalorder %s210, %s224
    %p226 = scmp.eq.s32.totalorder %s22, 0
    %p227 = por %p225, %p226
    %s229 = sadd.s32 %s228, 1
    %p232 = scmp.eq.s32.totalorder %s16, 1
    %p233 = scmp.ne.s32.totalorder %s228, %s230
    %p234 = scmp.eq.s32.totalorder %s16, 0
    %p235 = por %p233, %p234
    %p236 = scmp.ne.s32.totalorder %s228, %s230
    %p237 = scmp.eq.s32.totalorder %s21, 1
    %p238 = por %p236, %p237
    %p239 = scmp.ne.s32.totalorder %s230, %s231
    %p240 = scmp.eq.s32.totalorder %s21, 0
    %p241 = por %p239, %p240
    %p242 = scmp.ne.s32.totalorder %s230, %s231
    %p243 = scmp.eq.s32.totalorder %s22, 1
    %p244 = por %p242, %p243
    %p246 = scmp.ne.s32.totalorder %s231, %s245
    %p247 = scmp.eq.s32.totalorder %s22, 0
    %p248 = por %p246, %p247
    %s249 = ssub.s32 %s16, %s23
    %p250 = scmp.eq.s32.totalorder %s249, 0
    %s252 = sadd.s32 %s251, 1
    %s253 = scalar_select %p250, %s251, %s252
    %p256 = pneg %p250
    %p257 = scmp.eq.s32.totalorder %s16, 1
    %p258 = por %p256, %p257
    %p259 = scmp.ne.s32.totalorder %s251, %s254
    %p260 = scmp.eq.s32.totalorder %s16, 0
    %p261 = por %p259, %p260
    %p262 = scmp.ne.s32.totalorder %s251, %s254
    %p263 = scmp.eq.s32.totalorder %s21, 1
    %p264 = por %p262, %p263
    %p265 = scmp.ne.s32.totalorder %s254, %s255
    %p266 = scmp.eq.s32.totalorder %s21, 0
    %p267 = por %p265, %p266
    %p268 = scmp.ne.s32.totalorder %s254, %s255
    %p269 = scmp.eq.s32.totalorder %s22, 1
    %p270 = por %p268, %p269
    %p272 = scmp.ne.s32.totalorder %s255, %s271
    %p273 = scmp.eq.s32.totalorder %s22, 0
    %p274 = por %p272, %p273
    %p275 = scmp.le.s32.totalorder 1, %s16
    %p276 = scmp.lt.s32.totalorder %s16, 3
    %p277 = pnand %p275, %p276
    %p278 = pneg %p277
    // Predicated region
    $region9: #{fwd.12} parent=5 // pred_check
      _
    $region10: #{fwd.12} parent=5 // pred_check_branch
      %280 = sbr.rel (%p277) target = $region12
    $region11: #{fwd.12} parent=5 // pred_region
      %s281 = ssub.s32 %s16, 1
      // Predicated region
      $region13: #{fwd.12} parent=11 // pred_check
        %p282 = pneg %p89
      $region14: #{fwd.12} parent=11 // pred_check_branch
        %284 = sbr.rel (%p282) target = $region16
      $region15: #{fwd.12} parent=11 // pred_region
        _
      $region16: #{fwd.12} parent=11 // pred_fallthru
        _
      // Predicated region
      $region17: #{fwd.12} parent=11 // pred_check
        %p285 = pneg %p110
      $region18: #{fwd.12} parent=11 // pred_check_branch
        %287 = sbr.rel (%p285) target = $region20
      $region19: #{fwd.12} parent=11 // pred_region
        _
      $region20: #{fwd.12} parent=11 // pred_fallthru
        _
      // Predicated region
      $region21: #{fwd.12} parent=11 // pred_check
        %p288 = pneg %p131
      $region22: #{fwd.12} parent=11 // pred_check_branch
        %290 = sbr.rel (%p288) target = $region24
      $region23: #{fwd.12} parent=11 // pred_region
        _
      $region24: #{fwd.12} parent=11 // pred_fallthru
        _
      // Predicated region
      $region25: #{fwd.12} parent=11 // pred_check
        %p291 = pneg %p152
      $region26: #{fwd.12} parent=11 // pred_check_branch
        %293 = sbr.rel (%p291) target = $region28
      $region27: #{fwd.12} parent=11 // pred_region
        _
      $region28: #{fwd.12} parent=11 // pred_fallthru
        _
      // Predicated region
      $region29: #{fwd.12} parent=11 // pred_check
        %p294 = pneg %p173
      $region30: #{fwd.12} parent=11 // pred_check_branch
        %296 = sbr.rel (%p294) target = $region32
      $region31: #{fwd.12} parent=11 // pred_region
        _
      $region32: #{fwd.12} parent=11 // pred_fallthru
        _
      // Predicated region
      $region33: #{fwd.12} parent=11 // pred_check
        %p297 = pneg %p220
      $region34: #{fwd.12} parent=11 // pred_check_branch
        %299 = sbr.rel (%p297) target = $region36
      $region35: #{fwd.12} parent=11 // pred_region
        _
      $region36: #{fwd.12} parent=11 // pred_fallthru
        _
      // Predicated region
      $region37: #{fwd.12} parent=11 // pred_check
        %p300 = pneg %p241
      $region38: #{fwd.12} parent=11 // pred_check_branch
        %302 = sbr.rel (%p300) target = $region40
      $region39: #{fwd.12} parent=11 // pred_region
        _
      $region40: #{fwd.12} parent=11 // pred_fallthru
        _
    $region12: #{fwd.12} parent=5 // pred_fallthru
      _
    %p303 = scmp.lt.s32.totalorder %s16, 2
    // Predicated region
    $region41: #{fwd.12} parent=5 // pred_check
      %p304 = pneg %p303
    $region42: #{fwd.12} parent=5 // pred_check_branch
      %306 = sbr.rel (%p304) target = $region44
    $region43: #{fwd.12} parent=5 // pred_region
      // Predicated region
      $region45: #{fwd.12} parent=43 // pred_check
        %p307 = pneg %p36
      $region46: #{fwd.12} parent=43 // pred_check_branch
        %309 = sbr.rel (%p307) target = $region48
      $region47: #{fwd.12} parent=43 // pred_region
        %p310 = scmp.lt.s32.totalorder %s16, 1
        %s311 = scalar_select %p310, %s16, 1
        %s312 = smul.addr %s311, 8
        %s313 = scalar_lea.vmem %s0, %s312
      $region48: #{fwd.12} parent=43 // pred_fallthru
        _
      // Predicated region
      $region49: #{fwd.12} parent=43 // pred_check
        %p314 = pneg %p62
      $region50: #{fwd.12} parent=43 // pred_check_branch
        %316 = sbr.rel (%p314) target = $region52
      $region51: #{fwd.12} parent=43 // pred_region
        %p317 = scmp.lt.s32.totalorder %s16, 1
        %s318 = scalar_select %p317, %s16, 1
        %s319 = smul.addr %s318, 8
        %s320 = scalar_lea.vmem %s1, %s319
      $region52: #{fwd.12} parent=43 // pred_fallthru
        _
      // Predicated region
      $region53: #{fwd.12} parent=43 // pred_check
        %p321 = pneg %p193
      $region54: #{fwd.12} parent=43 // pred_check_branch
        %323 = sbr.rel (%p321) target = $region56
      $region55: #{fwd.12} parent=43 // pred_region
        %p324 = scmp.lt.s32.totalorder %s16, 1
        %s325 = scalar_select %p324, %s16, 1
        %s326 = scalar_lea.vmem %s7, %s325
      $region56: #{fwd.12} parent=43 // pred_fallthru
        _
    $region44: #{fwd.12} parent=5 // pred_fallthru
      _
    %p327 = scmp.le.s32.totalorder 1, %s16
    %p328 = scmp.lt.s32.totalorder %s16, 3
    %p329 = pnand %p327, %p328
    %p330 = pneg %p329
    // Predicated region
    $region57: #{fwd.12} parent=5 // pred_check
      _
    $region58: #{fwd.12} parent=5 // pred_check_branch
      %332 = sbr.rel (%p329) target = $region60
    $region59: #{fwd.12} parent=5 // pred_region
      %s333 = ssub.s32 %s16, 1
      %p334 = scmp.lt.s32.totalorder %s21, 1
      %s335 = scalar_select %p334, %s21, 1
      %s336 = smul.addr %s335, 8
      %s337 = scalar_lea.vmem %s0, %s336
      %p338 = pneg %p42
      %p339 = pneg %p39
      %p340 = scmp.lt.s32.totalorder %s21, 1
      %s341 = scalar_select %p340, %s21, 1
      %s342 = smul.addr %s341, 8
      %s343 = scalar_lea.vmem %s1, %s342
      %p344 = pneg %p68
      %p345 = pneg %p65
      %p346 = pneg %p89
      %p347 = pneg %p86
      %p348 = pneg %p110
      %p349 = pneg %p107
      %p350 = pneg %p131
      %p351 = pneg %p128
      %p352 = pneg %p152
      %p353 = pneg %p149
      %p354 = pneg %p173
      %p355 = pneg %p170
      %p356 = scmp.lt.s32.totalorder %s21, 1
      %s357 = scalar_select %p356, %s21, 1
      %s358 = scalar_lea.vmem %s7, %s357
      %p359 = pneg %p199
      %p360 = pneg %p196
      %p361 = pneg %p220
      %p362 = pneg %p217
      %p363 = pneg %p241
      %p364 = pneg %p238
      %p365 = pneg %p267
      %p366 = pneg %p264
      %p367 = scmp.lt.s32.totalorder %s21, 1
      %s368 = scalar_select %p367, %s21, 1
      %s369 = smul.addr %s368, 8
      %s370 = scalar_lea.vmem %s10, %s369
      %p371 = scmp.lt.s32.totalorder %s21, 1
      %s372 = scalar_select %p371, %s21, 1
      %s373 = smul.addr %s372, 8
      %s374 = scalar_lea.vmem %s0, %s373
      %p375 = scmp.lt.s32.totalorder %s21, 1
      %s376 = scalar_select %p375, %s21, 1
      %s377 = smul.addr %s376, 8
      %s378 = scalar_lea.vmem %s1, %s377
      %p379 = scmp.lt.s32.totalorder %s21, 1
      %s380 = scalar_select %p379, %s21, 1
      %s381 = scalar_lea.vmem %s7, %s380
      %p382 = scmp.lt.s32.totalorder %s21, 1
      %s383 = scalar_select %p382, %s21, 1
      %s384 = smul.addr %s383, 8
      %s385 = scalar_lea.vmem %s10, %s384
      %v387 = vld [vmem:[%s374] sm:$0xff]
      %v388 = vld [vmem:[%s2] sm:$0xf]
      %v389 = vld [vmem:[%s2 + $0x4] sm:$0xf]
      %v390 = vld [vmem:[%s2 + $0x8] sm:$0xf]
      %v391 = vld [vmem:[%s2 + $0xc] sm:$0xf]
      %v392 = vld [vmem:[%s3] sm:$0x1]
      %v393 = vpack.c.bf16 %v387, %v387
      %v395 = vlaneseq
      %v396 = vshrl.u32 %v395, 7
      %v397 = vsub.s32 0, %v396
      %v398 = vrot.slane %v392, %v397
      %v404 = vunpack.c.l.b16 %v388
      %v405 = vunpack.c.l.b16 %v389
      %v406 = vunpack.c.l.b16 %v390
      %v407 = vunpack.c.l.b16 %v391
      %v408 = vpack.c.b16 %v405, %v404
      %v409 = vpack.c.b16 %v407, %v406
      %vm412 = vcmask 261120
      %v414 = vsel %vm412, %v393, 0
      %416 = vmatprep.subr.bf16.mxu0 0
      %417 = vmatpush1.bf16.msra.mxu0 0
      %418 = vmatprep.subr.bf16.mxu0 0
      %419 = vmatpush1.bf16.msra.mxu0 0
      %420 = vmatprep.subr.bf16.mxu0 0
      %421 = vmatpush1.bf16.msra.mxu0 0
      %422 = vmatprep.subr.bf16.mxu0 0
      %423 = vmatpush1.bf16.msra.mxu0 0
      %424 = vmatprep.subr.bf16.mxu0 0
      %425 = vmatpush1.bf16.msra.mxu0 0
      %426 = vmatprep.subr.bf16.mxu0 0
      %427 = vmatpush1.bf16.msra.mxu0 0
      %428 = vmatprep.subr.bf16.mxu0 0
      %429 = vmatpush1.bf16.msra.mxu0 %v409
      %430 = vmatprep.subr.bf16.mxu0 0
      %431 = vmatpush1.bf16.msra.mxu0 %v408
      %432 = vmatprep.subr.bf16.mxu0 0
      %433 = vmatpush2.bf16.msra.mxu0 0
      %434 = vmatprep.subr.bf16.mxu0 0
      %435 = vmatpush2.bf16.msra.mxu0 0
      %436 = vmatprep.subr.bf16.mxu0 0
      %437 = vmatpush2.bf16.msra.mxu0 0
      %438 = vmatprep.subr.bf16.mxu0 0
      %439 = vmatpush2.bf16.msra.mxu0 0
      %440 = vmatprep.subr.bf16.mxu0 0
      %441 = vmatpush2.bf16.msra.mxu0 0
      %442 = vmatprep.subr.bf16.mxu0 0
      %443 = vmatpush2.bf16.msra.mxu0 0
      %444 = vmatprep.subr.bf16.mxu0 0
      %445 = vmatpush2.bf16.msra.mxu0 0
      %446 = vmatprep.subr.bf16.mxu0 0
      %447 = vmatpush2.bf16.msra.mxu0 0
      %448 = vmatprep.mubr.bf16.mxu0 0
      %449 = vmatmul.mubr.bf16.gmra.mxu0 %v414
      %v450 = vpop.f32.mrf.mxu0
      %v451 = vadd.f32 %v398, %v450
      %v452 = vpop.f32.mrf.mxu0
      %v453 = vpop.f32.mrf.mxu0
      %v454 = vpop.f32.mrf.mxu0
      %455 = vdwg.mxu0
      %v456 = vld [vmem:[%s6] sm:$0xff]
      %v457 = vld [vmem:[%s381] sm:$0x1]
      %v459 = vlaneseq
      %v460 = vshrl.u32 %v459, 7
      %v461 = vsub.s32 0, %v460
      %v462 = vrot.slane %v457, %v461
      %v464 = vadd.f32 %v456, %v462
      %v465 = vmul.f32 %v451, 0.35355338
      %v466 = vpack.c.bf16 %v465, %v465
      %v467 = vpack.c.bf16 %v451, %v451
      %469 = vrot.lane.b32.xlu0 %v467, 96
      %v470 = vpop.permute.xlu0 %469
      %vm471 = vcmask 64512
      %v473 = vsel %vm471, %v466, 0
      %v476 = vsel %vm471, %v470, 0
      %478 = vmatprep.subr.bf16.mxu0 0
      %479 = vmatpush1.bf16.xpose.msra.mxu0 0
      %480 = vmatprep.subr.bf16.mxu0 0
      %481 = vmatpush1.bf16.xpose.msra.mxu0 0
      %482 = vmatprep.subr.bf16.mxu0 0
      %483 = vmatpush1.bf16.xpose.msra.mxu0 0
      %484 = vmatprep.subr.bf16.mxu0 0
      %485 = vmatpush1.bf16.xpose.msra.mxu0 0
      %486 = vmatprep.subr.bf16.mxu0 0
      %487 = vmatpush1.bf16.xpose.msra.mxu0 0
      %488 = vmatprep.subr.bf16.mxu0 0
      %489 = vmatpush1.bf16.xpose.msra.mxu0 0
      %490 = vmatprep.subr.bf16.mxu0 0
      %491 = vmatpush1.bf16.xpose.msra.mxu0 0
      %492 = vmatprep.subr.bf16.mxu0 0
      %493 = vmatpush1.bf16.xpose.msra.mxu0 %v476
      %494 = vmatprep.subr.bf16.mxu0 0
      %495 = vmatpush2.bf16.xpose.msra.mxu0 0
      %496 = vmatprep.subr.bf16.mxu0 0
      %497 = vmatpush2.bf16.xpose.msra.mxu0 0
      %498 = vmatprep.subr.bf16.mxu0 0
      %499 = vmatpush2.bf16.xpose.msra.mxu0 0
      %500 = vmatprep.subr.bf16.mxu0 0
      %501 = vmatpush2.bf16.xpose.msra.mxu0 0
      %502 = vmatprep.subr.bf16.mxu0 0
      %503 = vmatpush2.bf16.xpose.msra.mxu0 0
      %504 = vmatprep.subr.bf16.mxu0 0
      %505 = vmatpush2.bf16.xpose.msra.mxu0 0
      %506 = vmatprep.subr.bf16.mxu0 0
      %507 = vmatpush2.bf16.xpose.msra.mxu0 0
      %508 = vmatprep.subr.bf16.mxu0 0
      %509 = vmatpush2.bf16.xpose.msra.mxu0 0
      %510 = vmatprep.mubr.bf16.mxu0 0
      %511 = vmatmul.mubr.bf16.gmra.mxu0 %v473
      %v512 = vpop.f32.mrf.mxu0
      %v513 = vadd.f32 %v464, %v512
      %v514 = vpop.f32.mrf.mxu0
      %v515 = vpop.f32.mrf.mxu0
      %v516 = vpop.f32.mrf.mxu0
      %517 = vdwg.mxu0
      %v518 = vsel %vm471, %v513, -inf
      %519 = vmax.xlane.f32.xlu0 %v518
      %v520 = vpop.xlane.xlu0 %519
      %v521 = vsub.f32 %v513, %v520
      %v522 = vmul.f32 %v521, 1.442695
      %v523 = vpow.pop %v522
      %v524 = vsel %vm471, %v523, 0.0
      %525 = vadd.xlane.f32.xlu0 %v524
      %v526 = vpop.xlane.xlu0 %525
      %v527 = vrcp.pop %v526
      %v528 = vmul.f32 %v523, %v527
      %v529 = vpack.c.bf16 %v528, %v528
      %530 = vrot.lane.b32.xlu0 %v467, 64
      %v531 = vpop.permute.xlu0 %530
      %v533 = vsel %vm471, %v529, 0
      %vm535 = vcmask 1043456
      %v537 = vsel %vm535, %v531, 0
      %539 = vmatprep.subr.bf16.mxu0 0
      %540 = vmatpush1.bf16.msra.mxu0 0
      %541 = vmatprep.subr.bf16.mxu0 0
      %542 = vmatpush1.bf16.msra.mxu0 0
      %543 = vmatprep.subr.bf16.mxu0 0
      %544 = vmatpush1.bf16.msra.mxu0 0
      %545 = vmatprep.subr.bf16.mxu0 0
      %546 = vmatpush1.bf16.msra.mxu0 0
      %547 = vmatprep.subr.bf16.mxu0 0
      %548 = vmatpush1.bf16.msra.mxu0 0
      %549 = vmatprep.subr.bf16.mxu0 0
      %550 = vmatpush1.bf16.msra.mxu0 0
      %551 = vmatprep.subr.bf16.mxu0 0
      %552 = vmatpush1.bf16.msra.mxu0 0
      %553 = vmatprep.subr.bf16.mxu0 0
      %554 = vmatpush1.bf16.msra.mxu0 %v537
      %555 = vmatprep.subr.bf16.mxu0 0
      %556 = vmatpush2.bf16.msra.mxu0 0
      %557 = vmatprep.subr.bf16.mxu0 0
      %558 = vmatpush2.bf16.msra.mxu0 0
      %559 = vmatprep.subr.bf16.mxu0 0
      %560 = vmatpush2.bf16.msra.mxu0 0
      %561 = vmatprep.subr.bf16.mxu0 0
      %562 = vmatpush2.bf16.msra.mxu0 0
      %563 = vmatprep.subr.bf16.mxu0 0
      %564 = vmatpush2.bf16.msra.mxu0 0
      %565 = vmatprep.subr.bf16.mxu0 0
      %566 = vmatpush2.bf16.msra.mxu0 0
      %567 = vmatprep.subr.bf16.mxu0 0
      %568 = vmatpush2.bf16.msra.mxu0 0
      %569 = vmatprep.subr.bf16.mxu0 0
      %570 = vmatpush2.bf16.msra.mxu0 0
      %571 = vmatprep.mubr.bf16.mxu0 0
      %572 = vmatmul.mubr.bf16.gmra.mxu0 %v533
      %v573 = vpop.f32.mrf.mxu0
      %v574 = vadd.f32 0.0, %v573
      %v575 = vpop.f32.mrf.mxu0
      %v576 = vpop.f32.mrf.mxu0
      %v577 = vpop.f32.mrf.mxu0
      %578 = vdwg.mxu0
      %579 = vst.msk [vmem:[#allocation2] sm:$0xff] %vm471, %v574
      %581 = vrot.lane.b32.xlu0 %v466, 120
      %v582 = vpop.permute.xlu0 %581
      %583 = vrot.lane.b32.xlu0 %v467, 88
      %v584 = vpop.permute.xlu0 %583
      %v586 = vsel %vm471, %v582, 0
      %v589 = vsel %vm471, %v584, 0
      %591 = vmatprep.subr.bf16.mxu0 0
      %592 = vmatpush1.bf16.xpose.msra.mxu0 0
      %593 = vmatprep.subr.bf16.mxu0 0
      %594 = vmatpush1.bf16.xpose.msra.mxu0 0
      %595 = vmatprep.subr.bf16.mxu0 0
      %596 = vmatpush1.bf16.xpose.msra.mxu0 0
      %597 = vmatprep.subr.bf16.mxu0 0
      %598 = vmatpush1.bf16.xpose.msra.mxu0 0
      %599 = vmatprep.subr.bf16.mxu0 0
      %600 = vmatpush1.bf16.xpose.msra.mxu0 0
      %601 = vmatprep.subr.bf16.mxu0 0
      %602 = vmatpush1.bf16.xpose.msra.mxu0 0
      %603 = vmatprep.subr.bf16.mxu0 0
      %604 = vmatpush1.bf16.xpose.msra.mxu0 0
      %605 = vmatprep.subr.bf16.mxu0 0
      %606 = vmatpush1.bf16.xpose.msra.mxu0 %v589
      %607 = vmatprep.subr.bf16.mxu0 0
      %608 = vmatpush2.bf16.xpose.msra.mxu0 0
      %609 = vmatprep.subr.bf16.mxu0 0
      %610 = vmatpush2.bf16.xpose.msra.mxu0 0
      %611 = vmatprep.subr.bf16.mxu0 0
      %612 = vmatpush2.bf16.xpose.msra.mxu0 0
      %613 = vmatprep.subr.bf16.mxu0 0
      %614 = vmatpush2.bf16.xpose.msra.mxu0 0
      %615 = vmatprep.subr.bf16.mxu0 0
      %616 = vmatpush2.bf16.xpose.msra.mxu0 0
      %617 = vmatprep.subr.bf16.mxu0 0
      %618 = vmatpush2.bf16.xpose.msra.mxu0 0
      %619 = vmatprep.subr.bf16.mxu0 0
      %620 = vmatpush2.bf16.xpose.msra.mxu0 0
      %621 = vmatprep.subr.bf16.mxu0 0
      %622 = vmatpush2.bf16.xpose.msra.mxu0 0
      %623 = vmatprep.mubr.bf16.mxu0 0
      %624 = vmatmul.mubr.bf16.gmra.mxu0 %v586
      %v625 = vpop.f32.mrf.mxu0
      %v626 = vadd.f32 %v464, %v625
      %v627 = vpop.f32.mrf.mxu0
      %v628 = vpop.f32.mrf.mxu0
      %v629 = vpop.f32.mrf.mxu0
      %630 = vdwg.mxu0
      %v631 = vsel %vm471, %v626, -inf
      %632 = vmax.xlane.f32.xlu0 %v631
      %v633 = vpop.xlane.xlu0 %632
      %v634 = vsub.f32 %v626, %v633
      %v635 = vmul.f32 %v634, 1.442695
      %v636 = vpow.pop %v635
      %v637 = vsel %vm471, %v636, 0.0
      %638 = vadd.xlane.f32.xlu0 %v637
      %v639 = vpop.xlane.xlu0 %638
      %v640 = vrcp.pop %v639
      %v641 = vmul.f32 %v636, %v640
      %v642 = vpack.c.bf16 %v641, %v641
      %643 = vrot.lane.b32.xlu0 %v467, 56
      %v644 = vpop.permute.xlu0 %643
      %v646 = vsel %vm471, %v642, 0
      %v649 = vsel %vm535, %v644, 0
      %651 = vmatprep.subr.bf16.mxu0 0
      %652 = vmatpush1.bf16.msra.mxu0 0
      %653 = vmatprep.subr.bf16.mxu0 0
      %654 = vmatpush1.bf16.msra.mxu0 0
      %655 = vmatprep.subr.bf16.mxu0 0
      %656 = vmatpush1.bf16.msra.mxu0 0
      %657 = vmatprep.subr.bf16.mxu0 0
      %658 = vmatpush1.bf16.msra.mxu0 0
      %659 = vmatprep.subr.bf16.mxu0 0
      %660 = vmatpush1.bf16.msra.mxu0 0
      %661 = vmatprep.subr.bf16.mxu0 0
      %662 = vmatpush1.bf16.msra.mxu0 0
      %663 = vmatprep.subr.bf16.mxu0 0
      %664 = vmatpush1.bf16.msra.mxu0 0
      %665 = vmatprep.subr.bf16.mxu0 0
      %666 = vmatpush1.bf16.msra.mxu0 %v649
      %667 = vmatprep.subr.bf16.mxu0 0
      %668 = vmatpush2.bf16.msra.mxu0 0
      %669 = vmatprep.subr.bf16.mxu0 0
      %670 = vmatpush2.bf16.msra.mxu0 0
      %671 = vmatprep.subr.bf16.mxu0 0
      %672 = vmatpush2.bf16.msra.mxu0 0
      %673 = vmatprep.subr.bf16.mxu0 0
      %674 = vmatpush2.bf16.msra.mxu0 0
      %675 = vmatprep.subr.bf16.mxu0 0
      %676 = vmatpush2.bf16.msra.mxu0 0
      %677 = vmatprep.subr.bf16.mxu0 0
      %678 = vmatpush2.bf16.msra.mxu0 0
      %679 = vmatprep.subr.bf16.mxu0 0
      %680 = vmatpush2.bf16.msra.mxu0 0
      %681 = vmatprep.subr.bf16.mxu0 0
      %682 = vmatpush2.bf16.msra.mxu0 0
      %683 = vmatprep.mubr.bf16.mxu0 0
      %684 = vmatmul.mubr.bf16.gmra.mxu0 %v646
      %v685 = vpop.f32.mrf.mxu0
      %v686 = vadd.f32 0.0, %v685
      %v687 = vpop.f32.mrf.mxu0
      %v688 = vpop.f32.mrf.mxu0
      %v689 = vpop.f32.mrf.mxu0
      %690 = vdwg.mxu0
      %692 = vrot.lane.b32.xlu0 %v686, 8
      %v693 = vpop.permute.xlu0 %692
      %vm695 = vcmask 130112
      %696 = vst.msk [vmem:[#allocation2] sm:$0xff] %vm695, %v693
      %697 = vrot.lane.b32.xlu0 %v466, 112
      %v698 = vpop.permute.xlu0 %697
      %699 = vrot.lane.b32.xlu0 %v467, 80
      %v700 = vpop.permute.xlu0 %699
      %v702 = vsel %vm471, %v698, 0
      %v705 = vsel %vm471, %v700, 0
      %707 = vmatprep.subr.bf16.mxu0 0
      %708 = vmatpush1.bf16.xpose.msra.mxu0 0
      %709 = vmatprep.subr.bf16.mxu0 0
      %710 = vmatpush1.bf16.xpose.msra.mxu0 0
      %711 = vmatprep.subr.bf16.mxu0 0
      %712 = vmatpush1.bf16.xpose.msra.mxu0 0
      %713 = vmatprep.subr.bf16.mxu0 0
      %714 = vmatpush1.bf16.xpose.msra.mxu0 0
      %715 = vmatprep.subr.bf16.mxu0 0
      %716 = vmatpush1.bf16.xpose.msra.mxu0 0
      %717 = vmatprep.subr.bf16.mxu0 0
      %718 = vmatpush1.bf16.xpose.msra.mxu0 0
      %719 = vmatprep.subr.bf16.mxu0 0
      %720 = vmatpush1.bf16.xpose.msra.mxu0 0
      %721 = vmatprep.subr.bf16.mxu0 0
      %722 = vmatpush1.bf16.xpose.msra.mxu0 %v705
      %723 = vmatprep.subr.bf16.mxu0 0
      %724 = vmatpush2.bf16.xpose.msra.mxu0 0
      %725 = vmatprep.subr.bf16.mxu0 0
      %726 = vmatpush2.bf16.xpose.msra.mxu0 0
      %727 = vmatprep.subr.bf16.mxu0 0
      %728 = vmatpush2.bf16.xpose.msra.mxu0 0
      %729 = vmatprep.subr.bf16.mxu0 0
      %730 = vmatpush2.bf16.xpose.msra.mxu0 0
      %731 = vmatprep.subr.bf16.mxu0 0
      %732 = vmatpush2.bf16.xpose.msra.mxu0 0
      %733 = vmatprep.subr.bf16.mxu0 0
      %734 = vmatpush2.bf16.xpose.msra.mxu0 0
      %735 = vmatprep.subr.bf16.mxu0 0
      %736 = vmatpush2.bf16.xpose.msra.mxu0 0
      %737 = vmatprep.subr.bf16.mxu0 0
      %738 = vmatpush2.bf16.xpose.msra.mxu0 0
      %739 = vmatprep.mubr.bf16.mxu0 0
      %740 = vmatmul.mubr.bf16.gmra.mxu0 %v702
      %v741 = vpop.f32.mrf.mxu0
      %v742 = vadd.f32 %v464, %v741
      %v743 = vpop.f32.mrf.mxu0
      %v744 = vpop.f32.mrf.mxu0
      %v745 = vpop.f32.mrf.mxu0
      %746 = vdwg.mxu0
      %v747 = vsel %vm471, %v742, -inf
      %748 = vmax.xlane.f32.xlu0 %v747
      %v749 = vpop.xlane.xlu0 %748
      %v750 = vsub.f32 %v742, %v749
      %v751 = vmul.f32 %v750, 1.442695
      %v752 = vpow.pop %v751
      %v753 = vsel %vm471, %v752, 0.0
      %754 = vadd.xlane.f32.xlu0 %v753
      %v755 = vpop.xlane.xlu0 %754
      %v756 = vrcp.pop %v755
      %v757 = vmul.f32 %v752, %v756
      %v758 = vpack.c.bf16 %v757, %v757
      %759 = vrot.lane.b32.xlu0 %v467, 48
      %v760 = vpop.permute.xlu0 %759
      %v762 = vsel %vm471, %v758, 0
      %v765 = vsel %vm535, %v760, 0
      %767 = vmatprep.subr.bf16.mxu0 0
      %768 = vmatpush1.bf16.msra.mxu0 0
      %769 = vmatprep.subr.bf16.mxu0 0
      %770 = vmatpush1.bf16.msra.mxu0 0
      %771 = vmatprep.subr.bf16.mxu0 0
      %772 = vmatpush1.bf16.msra.mxu0 0
      %773 = vmatprep.subr.bf16.mxu0 0
      %774 = vmatpush1.bf16.msra.mxu0 0
      %775 = vmatprep.subr.bf16.mxu0 0
      %776 = vmatpush1.bf16.msra.mxu0 0
      %777 = vmatprep.subr.bf16.mxu0 0
      %778 = vmatpush1.bf16.msra.mxu0 0
      %779 = vmatprep.subr.bf16.mxu0 0
      %780 = vmatpush1.bf16.msra.mxu0 0
      %781 = vmatprep.subr.bf16.mxu0 0
      %782 = vmatpush1.bf16.msra.mxu0 %v765
      %783 = vmatprep.subr.bf16.mxu0 0
      %784 = vmatpush2.bf16.msra.mxu0 0
      %785 = vmatprep.subr.bf16.mxu0 0
      %786 = vmatpush2.bf16.msra.mxu0 0
      %787 = vmatprep.subr.bf16.mxu0 0
      %788 = vmatpush2.bf16.msra.mxu0 0
      %789 = vmatprep.subr.bf16.mxu0 0
      %790 = vmatpush2.bf16.msra.mxu0 0
      %791 = vmatprep.subr.bf16.mxu0 0
      %792 = vmatpush2.bf16.msra.mxu0 0
      %793 = vmatprep.subr.bf16.mxu0 0
      %794 = vmatpush2.bf16.msra.mxu0 0
      %795 = vmatprep.subr.bf16.mxu0 0
      %796 = vmatpush2.bf16.msra.mxu0 0
      %797 = vmatprep.subr.bf16.mxu0 0
      %798 = vmatpush2.bf16.msra.mxu0 0
      %799 = vmatprep.mubr.bf16.mxu0 0
      %800 = vmatmul.mubr.bf16.gmra.mxu0 %v762
      %v801 = vpop.f32.mrf.mxu0
      %v802 = vadd.f32 0.0, %v801
      %v803 = vpop.f32.mrf.mxu0
      %v804 = vpop.f32.mrf.mxu0
      %v805 = vpop.f32.mrf.mxu0
      %806 = vdwg.mxu0
      %808 = vrot.lane.b32.xlu0 %v802, 16
      %v809 = vpop.permute.xlu0 %808
      %vm811 = vcmask 195712
      %812 = vst.msk [vmem:[#allocation2] sm:$0xff] %vm811, %v809
      %813 = vrot.lane.b32.xlu0 %v466, 104
      %v814 = vpop.permute.xlu0 %813
      %815 = vrot.lane.b32.xlu0 %v467, 72
      %v816 = vpop.permute.xlu0 %815
      %v818 = vsel %vm471, %v814, 0
      %v821 = vsel %vm471, %v816, 0
      %823 = vmatprep.subr.bf16.mxu0 0
      %824 = vmatpush1.bf16.xpose.msra.mxu0 0
      %825 = vmatprep.subr.bf16.mxu0 0
      %826 = vmatpush1.bf16.xpose.msra.mxu0 0
      %827 = vmatprep.subr.bf16.mxu0 0
      %828 = vmatpush1.bf16.xpose.msra.mxu0 0
      %829 = vmatprep.subr.bf16.mxu0 0
      %830 = vmatpush1.bf16.xpose.msra.mxu0 0
      %831 = vmatprep.subr.bf16.mxu0 0
      %832 = vmatpush1.bf16.xpose.msra.mxu0 0
      %833 = vmatprep.subr.bf16.mxu0 0
      %834 = vmatpush1.bf16.xpose.msra.mxu0 0
      %835 = vmatprep.subr.bf16.mxu0 0
      %836 = vmatpush1.bf16.xpose.msra.mxu0 0
      %837 = vmatprep.subr.bf16.mxu0 0
      %838 = vmatpush1.bf16.xpose.msra.mxu0 %v821
      %839 = vmatprep.subr.bf16.mxu0 0
      %840 = vmatpush2.bf16.xpose.msra.mxu0 0
      %841 = vmatprep.subr.bf16.mxu0 0
      %842 = vmatpush2.bf16.xpose.msra.mxu0 0
      %843 = vmatprep.subr.bf16.mxu0 0
      %844 = vmatpush2.bf16.xpose.msra.mxu0 0
      %845 = vmatprep.subr.bf16.mxu0 0
      %846 = vmatpush2.bf16.xpose.msra.mxu0 0
      %847 = vmatprep.subr.bf16.mxu0 0
      %848 = vmatpush2.bf16.xpose.msra.mxu0 0
      %849 = vmatprep.subr.bf16.mxu0 0
      %850 = vmatpush2.bf16.xpose.msra.mxu0 0
      %851 = vmatprep.subr.bf16.mxu0 0
      %852 = vmatpush2.bf16.xpose.msra.mxu0 0
      %853 = vmatprep.subr.bf16.mxu0 0
      %854 = vmatpush2.bf16.xpose.msra.mxu0 0
      %855 = vmatprep.mubr.bf16.mxu0 0
      %856 = vmatmul.mubr.bf16.gmra.mxu0 %v818
      %v857 = vpop.f32.mrf.mxu0
      %v858 = vadd.f32 %v464, %v857
      %v859 = vpop.f32.mrf.mxu0
      %v860 = vpop.f32.mrf.mxu0
      %v861 = vpop.f32.mrf.mxu0
      %862 = vdwg.mxu0
      %v863 = vsel %vm471, %v858, -inf
      %864 = vmax.xlane.f32.xlu0 %v863
      %v865 = vpop.xlane.xlu0 %864
      %v866 = vsub.f32 %v858, %v865
      %v867 = vmul.f32 %v866, 1.442695
      %v868 = vpow.pop %v867
      %v869 = vsel %vm471, %v868, 0.0
      %870 = vadd.xlane.f32.xlu0 %v869
      %v871 = vpop.xlane.xlu0 %870
      %v872 = vrcp.pop %v871
      %v873 = vmul.f32 %v868, %v872
      %v874 = vpack.c.bf16 %v873, %v873
      %875 = vrot.lane.b32.xlu0 %v467, 40
      %v876 = vpop.permute.xlu0 %875
      %v878 = vsel %vm471, %v874, 0
      %v881 = vsel %vm535, %v876, 0
      %883 = vmatprep.subr.bf16.mxu0 0
      %884 = vmatpush1.bf16.msra.mxu0 0
      %885 = vmatprep.subr.bf16.mxu0 0
      %886 = vmatpush1.bf16.msra.mxu0 0
      %887 = vmatprep.subr.bf16.mxu0 0
      %888 = vmatpush1.bf16.msra.mxu0 0
      %889 = vmatprep.subr.bf16.mxu0 0
      %890 = vmatpush1.bf16.msra.mxu0 0
      %891 = vmatprep.subr.bf16.mxu0 0
      %892 = vmatpush1.bf16.msra.mxu0 0
      %893 = vmatprep.subr.bf16.mxu0 0
      %894 = vmatpush1.bf16.msra.mxu0 0
      %895 = vmatprep.subr.bf16.mxu0 0
      %896 = vmatpush1.bf16.msra.mxu0 0
      %897 = vmatprep.subr.bf16.mxu0 0
      %898 = vmatpush1.bf16.msra.mxu0 %v881
      %899 = vmatprep.subr.bf16.mxu0 0
      %900 = vmatpush2.bf16.msra.mxu0 0
      %901 = vmatprep.subr.bf16.mxu0 0
      %902 = vmatpush2.bf16.msra.mxu0 0
      %903 = vmatprep.subr.bf16.mxu0 0
      %904 = vmatpush2.bf16.msra.mxu0 0
      %905 = vmatprep.subr.bf16.mxu0 0
      %906 = vmatpush2.bf16.msra.mxu0 0
      %907 = vmatprep.subr.bf16.mxu0 0
      %908 = vmatpush2.bf16.msra.mxu0 0
      %909 = vmatprep.subr.bf16.mxu0 0
      %910 = vmatpush2.bf16.msra.mxu0 0
      %911 = vmatprep.subr.bf16.mxu0 0
      %912 = vmatpush2.bf16.msra.mxu0 0
      %913 = vmatprep.subr.bf16.mxu0 0
      %914 = vmatpush2.bf16.msra.mxu0 0
      %915 = vmatprep.mubr.bf16.mxu0 0
      %916 = vmatmul.mubr.bf16.gmra.mxu0 %v878
      %v917 = vpop.f32.mrf.mxu0
      %v918 = vadd.f32 0.0, %v917
      %v919 = vpop.f32.mrf.mxu0
      %v920 = vpop.f32.mrf.mxu0
      %v921 = vpop.f32.mrf.mxu0
      %922 = vdwg.mxu0
      %924 = vrot.lane.b32.xlu0 %v918, 24
      %v925 = vpop.permute.xlu0 %924
      %vm927 = vcmask 261312
      %928 = vst.msk [vmem:[#allocation2] sm:$0xff] %vm927, %v925
      %v929 = vld [vmem:[%s4] sm:$0xf]
      %v930 = vld [vmem:[%s4 + $0x4] sm:$0xf]
      %v931 = vld [vmem:[%s4 + $0x8] sm:$0xf]
      %v932 = vld [vmem:[%s4 + $0xc] sm:$0xf]
      %v933 = vld [vmem:[#allocation2] sm:$0xff]
      %v934 = vpack.c.bf16 %v933, %v933
      %v935 = vld [vmem:[%s5] sm:$0x1]
      %v937 = vlaneseq
      %v938 = vshrl.u32 %v937, 7
      %v939 = vsub.s32 0, %v938
      %v940 = vrot.slane %v935, %v939
      %v946 = vunpack.c.l.b16 %v929
      %v947 = vunpack.c.l.b16 %v930
      %v948 = vunpack.c.l.b16 %v931
      %v949 = vunpack.c.l.b16 %v932
      %v950 = vpack.c.b16 %v947, %v946
      %v951 = vpack.c.b16 %v949, %v948
      %v955 = vsel %vm412, %v934, 0
      %957 = vmatprep.subr.bf16.mxu0 0
      %958 = vmatpush1.bf16.msra.mxu0 0
      %959 = vmatprep.subr.bf16.mxu0 0
      %960 = vmatpush1.bf16.msra.mxu0 0
      %961 = vmatprep.subr.bf16.mxu0 0
      %962 = vmatpush1.bf16.msra.mxu0 0
      %963 = vmatprep.subr.bf16.mxu0 0
      %964 = vmatpush1.bf16.msra.mxu0 0
      %965 = vmatprep.subr.bf16.mxu0 0
      %966 = vmatpush1.bf16.msra.mxu0 0
      %967 = vmatprep.subr.bf16.mxu0 0
      %968 = vmatpush1.bf16.msra.mxu0 0
      %969 = vmatprep.subr.bf16.mxu0 0
      %970 = vmatpush1.bf16.msra.mxu0 %v951
      %971 = vmatprep.subr.bf16.mxu0 0
      %972 = vmatpush1.bf16.msra.mxu0 %v950
      %973 = vmatprep.subr.bf16.mxu0 0
      %974 = vmatpush2.bf16.msra.mxu0 0
      %975 = vmatprep.subr.bf16.mxu0 0
      %976 = vmatpush2.bf16.msra.mxu0 0
      %977 = vmatprep.subr.bf16.mxu0 0
      %978 = vmatpush2.bf16.msra.mxu0 0
      %979 = vmatprep.subr.bf16.mxu0 0
      %980 = vmatpush2.bf16.msra.mxu0 0
      %981 = vmatprep.subr.bf16.mxu0 0
      %982 = vmatpush2.bf16.msra.mxu0 0
      %983 = vmatprep.subr.bf16.mxu0 0
      %984 = vmatpush2.bf16.msra.mxu0 0
      %985 = vmatprep.subr.bf16.mxu0 0
      %986 = vmatpush2.bf16.msra.mxu0 0
      %987 = vmatprep.subr.bf16.mxu0 0
      %988 = vmatpush2.bf16.msra.mxu0 0
      %989 = vmatprep.mubr.bf16.mxu0 0
      %990 = vmatmul.mubr.bf16.gmra.mxu0 %v955
      %v991 = vpop.f32.mrf.mxu0
      %v992 = vadd.f32 %v940, %v991
      %v993 = vpop.f32.mrf.mxu0
      %v994 = vpop.f32.mrf.mxu0
      %v995 = vpop.f32.mrf.mxu0
      %996 = vdwg.mxu0
      %v997 = vadd.f32 %v387, %v992
      %v998 = vsel %vm412, %v997, 0.0
      %999 = vadd.xlane.f32.xlu0 %v998
      %v1000 = vpop.xlane.xlu0 %999
      %v1001 = vrcp.pop 32.0
      %v1002 = vmul.f32 %v1000, %v1001
      %v1003 = vsub.f32 %v997, %v1002
      %v1004 = vmul.f32 %v1003, %v1003
      %v1005 = vsel %vm412, %v1004, 0.0
      %1006 = vadd.xlane.f32.xlu0 %v1005
      %v1007 = vpop.xlane.xlu0 %1006
      %v1008 = vmul.f32 %v1007, %v1001
      %v1009 = vadd.f32 %v1008, 1e-05
      %v1010 = vrsqrt.pop %v1009
      %v1011 = vmul.f32 %v1003, %v1010
      %v1012 = vld [vmem:[%s8] sm:$0x1]
      %v1014 = vlaneseq
      %v1015 = vshrl.u32 %v1014, 7
      %v1016 = vsub.s32 0, %v1015
      %v1017 = vrot.slane %v1012, %v1016
      %v1019 = vmul.f32 %v1011, %v1017
      %v1020 = vld [vmem:[%s9] sm:$0x1]
      %v1022 = vlaneseq
      %v1023 = vshrl.u32 %v1022, 7
      %v1024 = vsub.s32 0, %v1023
      %v1025 = vrot.slane %v1020, %v1024
      %v1027 = vadd.f32 %v1019, %v1025
      %1028 = vst.msk [vmem:[%s385] sm:$0xff] %vm412, %v1027
      %p1029 = scmp.lt.s32.totalorder %s21, 1
      %s1030 = scalar_select %p1029, %s21, 1
      %s1031 = smul.addr %s1030, 8
      %s1032 = scalar_lea.vmem %s10, %s1031
      // Predicated region
      $region61: #{fwd.12} parent=59 // pred_check
        %p1033 = pneg %p264
      $region62: #{fwd.12} parent=59 // pred_check_branch
        %1035 = sbr.rel (%p1033) target = $region64
      $region63: #{fwd.12} parent=59 // pred_region
        _
      $region64: #{fwd.12} parent=59 // pred_fallthru
        _
    $region60: #{fwd.12} parent=5 // pred_fallthru
      _
    %p1036 = scmp.le.s32.totalorder 2, %s16
    // Predicated region
    $region65: #{fwd.12} parent=5 // pred_check
      %p1037 = pneg %p1036
    $region66: #{fwd.12} parent=5 // pred_check_branch
      %1039 = sbr.rel (%p1037) target = $region68
    $region67: #{fwd.12} parent=5 // pred_region
      %s1040 = ssub.s32 %s16, 2
      // Predicated region
      $region69: #{fwd.12} parent=67 // pred_check
        %p1041 = pneg %p270
      $region70: #{fwd.12} parent=67 // pred_check_branch
        %1043 = sbr.rel (%p1041) target = $region72
      $region71: #{fwd.12} parent=67 // pred_region
        %p1044 = scmp.lt.s32.totalorder %s22, 1
        %s1045 = scalar_select %p1044, %s22, 1
        %s1046 = smul.addr %s1045, 8
        %s1047 = scalar_lea.vmem %s10, %s1046
      $region72: #{fwd.12} parent=67 // pred_fallthru
        _
    $region68: #{fwd.12} parent=5 // pred_fallthru
      _
  $region6: #{fwd.12} parent=0 // loop_footer
    %s20 = sadd.s32 1, %s16
  $region7: #{fwd.12} parent=0 // loop_footer_branch
    %15 = sbr.rel target = $region3
  $region8: #{fwd.12} parent=0 // loop_exit
    _

// kernel: fwd.17
$region0: #{fwd.17}
  #allocation0 [shape = 'u32[]', space=smem, size = 0x4, offset = 0x4, fixed_abs, tag = 'smem constant byte address 0x4 - core index']
  #allocation1 [shape = 'u32[144,128]{1,0:T(1,128)}', space=vmem, size = 0x12000, scoped, tag = 'internal scratch']
  #allocation2 [shape = 'f32[6,32]{1,0:T(8,128)}', space=vmem, size = 0x1000, scoped, tag = 'scratch operand']
  %s0 = inlined_call_operand.vmem [shape: f32[2,6,32], index: 0, kind: input, shape index: {}, may-alias: {0,1}]
  %s1 = inlined_call_operand.vmem [shape: f32[2,6,32], index: 1, kind: input, shape index: {}, may-alias: {0,1}]
  %s2 = inlined_call_operand.vmem [shape: bf16[32,96], index: 2, kind: input, shape index: {}]
  %s3 = inlined_call_operand.vmem [shape: f32[1,96], index: 3, kind: input, shape index: {}]
  %s4 = inlined_call_operand.vmem [shape: bf16[32,32], index: 4, kind: input, shape index: {}]
  %s5 = inlined_call_operand.vmem [shape: f32[1,32], index: 5, kind: input, shape index: {}]
  %s6 = inlined_call_operand.vmem [shape: f32[6,6], index: 6, kind: input, shape index: {}]
  %s7 = inlined_call_operand.vmem [shape: f32[2,1,6], index: 7, kind: input, shape index: {}]
  %s8 = inlined_call_operand.vmem [shape: f32[1,32], index: 8, kind: input, shape index: {}]
  %s9 = inlined_call_operand.vmem [shape: f32[1,32], index: 9, kind: input, shape index: {}]
  %s10 = inlined_call_operand.vmem [shape: f32[2,6,32], index: 10, kind: output, shape index: {}]
  %s11 = sld [smem:[#allocation0]]
  $region73: #{fwd.17} parent=0
    _
  %s13 = ssub.s32 1, %s11
  %s14 = scalar_select 0, %s13, %s11
  loop: start=0, step=1, limit=4
  $region2: #{fwd.17} parent=0 // loop_pre_header
    _
  $region3: #{fwd.17} parent=0 // loop_header
    %s16 = sphi 0, %s20
    %p17 = scmp.ge.s32.totalorder %s16, 4
    %s26 = sphi 0, %s28
    %s29 = sphi 0, %s26
    %s30 = sphi 0, %s29
    %s46 = sphi 0, %s30
    %s52 = sphi 0, %s54
    %s55 = sphi 0, %s52
    %s56 = sphi 0, %s55
    %s72 = sphi 0, %s56
    %s76 = sphi 0, %s76
    %s78 = sphi 0, %s76
    %s79 = sphi 0, %s78
    %s93 = sphi 0, %s79
    %s97 = sphi 0, %s97
    %s99 = sphi 0, %s97
    %s100 = sphi 0, %s99
    %s114 = sphi 0, %s100
    %s118 = sphi 0, %s118
    %s120 = sphi 0, %s118
    %s121 = sphi 0, %s120
    %s135 = sphi 0, %s121
    %s139 = sphi 0, %s139
    %s141 = sphi 0, %s139
    %s142 = sphi 0, %s141
    %s156 = sphi 0, %s142
    %s160 = sphi 0, %s160
    %s162 = sphi 0, %s160
    %s163 = sphi 0, %s162
    %s177 = sphi 0, %s163
    %s183 = sphi 0, %s185
    %s186 = sphi 0, %s183
    %s187 = sphi 0, %s186
    %s203 = sphi 0, %s187
    %s207 = sphi 0, %s207
    %s209 = sphi 0, %s207
    %s210 = sphi 0, %s209
    %s224 = sphi 0, %s210
    %s228 = sphi 0, %s228
    %s230 = sphi 0, %s228
    %s231 = sphi 0, %s230
    %s245 = sphi 0, %s231
    %s251 = sphi 0, %s253
    %s254 = sphi 0, %s251
    %s255 = sphi 0, %s254
    %s271 = sphi 0, %s255
  $region4: #{fwd.17} parent=0 // loop_header_branch
    %19 = sbr.rel (%p17) target = $region8
  $region5: #{fwd.17} parent=0 // loop_body
    %s21 = ssub.s32 %s16, 1
    %s22 = ssub.s32 %s16, 2
    %s23 = sadd.s32 %s16, 1
    %s24 = ssub.s32 %s16, %s23
    %p25 = scmp.eq.s32.totalorder %s24, 0
    %s27 = sadd.s32 %s26, 1
    %s28 = scalar_select %p25, %s26, %s27
    %p31 = pneg %p25
    %p32 = scmp.eq.s32.totalorder %s16, 1
    %p33 = por %p31, %p32
    %p34 = scmp.ne.s32.totalorder %s26, %s29
    %p35 = scmp.eq.s32.totalorder %s16, 0
    %p36 = por %p34, %p35
    %p37 = scmp.ne.s32.totalorder %s26, %s29
    %p38 = scmp.eq.s32.totalorder %s21, 1
    %p39 = por %p37, %p38
    %p40 = scmp.ne.s32.totalorder %s29, %s30
    %p41 = scmp.eq.s32.totalorder %s21, 0
    %p42 = por %p40, %p41
    %p43 = scmp.ne.s32.totalorder %s29, %s30
    %p44 = scmp.eq.s32.totalorder %s22, 1
    %p45 = por %p43, %p44
    %p47 = scmp.ne.s32.totalorder %s30, %s46
    %p48 = scmp.eq.s32.totalorder %s22, 0
    %p49 = por %p47, %p48
    %s50 = ssub.s32 %s16, %s23
    %p51 = scmp.eq.s32.totalorder %s50, 0
    %s53 = sadd.s32 %s52, 1
    %s54 = scalar_select %p51, %s52, %s53
    %p57 = pneg %p51
    %p58 = scmp.eq.s32.totalorder %s16, 1
    %p59 = por %p57, %p58
    %p60 = scmp.ne.s32.totalorder %s52, %s55
    %p61 = scmp.eq.s32.totalorder %s16, 0
    %p62 = por %p60, %p61
    %p63 = scmp.ne.s32.totalorder %s52, %s55
    %p64 = scmp.eq.s32.totalorder %s21, 1
    %p65 = por %p63, %p64
    %p66 = scmp.ne.s32.totalorder %s55, %s56
    %p67 = scmp.eq.s32.totalorder %s21, 0
    %p68 = por %p66, %p67
    %p69 = scmp.ne.s32.totalorder %s55, %s56
    %p70 = scmp.eq.s32.totalorder %s22, 1
    %p71 = por %p69, %p70
    %p73 = scmp.ne.s32.totalorder %s56, %s72
    %p74 = scmp.eq.s32.totalorder %s22, 0
    %p75 = por %p73, %p74
    %s77 = sadd.s32 %s76, 1
    %p80 = scmp.eq.s32.totalorder %s16, 1
    %p81 = scmp.ne.s32.totalorder %s76, %s78
    %p82 = scmp.eq.s32.totalorder %s16, 0
    %p83 = por %p81, %p82
    %p84 = scmp.ne.s32.totalorder %s76, %s78
    %p85 = scmp.eq.s32.totalorder %s21, 1
    %p86 = por %p84, %p85
    %p87 = scmp.ne.s32.totalorder %s78, %s79
    %p88 = scmp.eq.s32.totalorder %s21, 0
    %p89 = por %p87, %p88
    %p90 = scmp.ne.s32.totalorder %s78, %s79
    %p91 = scmp.eq.s32.totalorder %s22, 1
    %p92 = por %p90, %p91
    %p94 = scmp.ne.s32.totalorder %s79, %s93
    %p95 = scmp.eq.s32.totalorder %s22, 0
    %p96 = por %p94, %p95
    %s98 = sadd.s32 %s97, 1
    %p101 = scmp.eq.s32.totalorder %s16, 1
    %p102 = scmp.ne.s32.totalorder %s97, %s99
    %p103 = scmp.eq.s32.totalorder %s16, 0
    %p104 = por %p102, %p103
    %p105 = scmp.ne.s32.totalorder %s97, %s99
    %p106 = scmp.eq.s32.totalorder %s21, 1
    %p107 = por %p105, %p106
    %p108 = scmp.ne.s32.totalorder %s99, %s100
    %p109 = scmp.eq.s32.totalorder %s21, 0
    %p110 = por %p108, %p109
    %p111 = scmp.ne.s32.totalorder %s99, %s100
    %p112 = scmp.eq.s32.totalorder %s22, 1
    %p113 = por %p111, %p112
    %p115 = scmp.ne.s32.totalorder %s100, %s114
    %p116 = scmp.eq.s32.totalorder %s22, 0
    %p117 = por %p115, %p116
    %s119 = sadd.s32 %s118, 1
    %p122 = scmp.eq.s32.totalorder %s16, 1
    %p123 = scmp.ne.s32.totalorder %s118, %s120
    %p124 = scmp.eq.s32.totalorder %s16, 0
    %p125 = por %p123, %p124
    %p126 = scmp.ne.s32.totalorder %s118, %s120
    %p127 = scmp.eq.s32.totalorder %s21, 1
    %p128 = por %p126, %p127
    %p129 = scmp.ne.s32.totalorder %s120, %s121
    %p130 = scmp.eq.s32.totalorder %s21, 0
    %p131 = por %p129, %p130
    %p132 = scmp.ne.s32.totalorder %s120, %s121
    %p133 = scmp.eq.s32.totalorder %s22, 1
    %p134 = por %p132, %p133
    %p136 = scmp.ne.s32.totalorder %s121, %s135
    %p137 = scmp.eq.s32.totalorder %s22, 0
    %p138 = por %p136, %p137
    %s140 = sadd.s32 %s139, 1
    %p143 = scmp.eq.s32.totalorder %s16, 1
    %p144 = scmp.ne.s32.totalorder %s139, %s141
    %p145 = scmp.eq.s32.totalorder %s16, 0
    %p146 = por %p144, %p145
    %p147 = scmp.ne.s32.totalorder %s139, %s141
    %p148 = scmp.eq.s32.totalorder %s21, 1
    %p149 = por %p147, %p148
    %p150 = scmp.ne.s32.totalorder %s141, %s142
    %p151 = scmp.eq.s32.totalorder %s21, 0
    %p152 = por %p150, %p151
    %p153 = scmp.ne.s32.totalorder %s141, %s142
    %p154 = scmp.eq.s32.totalorder %s22, 1
    %p155 = por %p153, %p154
    %p157 = scmp.ne.s32.totalorder %s142, %s156
    %p158 = scmp.eq.s32.totalorder %s22, 0
    %p159 = por %p157, %p158
    %s161 = sadd.s32 %s160, 1
    %p164 = scmp.eq.s32.totalorder %s16, 1
    %p165 = scmp.ne.s32.totalorder %s160, %s162
    %p166 = scmp.eq.s32.totalorder %s16, 0
    %p167 = por %p165, %p166
    %p168 = scmp.ne.s32.totalorder %s160, %s162
    %p169 = scmp.eq.s32.totalorder %s21, 1
    %p170 = por %p168, %p169
    %p171 = scmp.ne.s32.totalorder %s162, %s163
    %p172 = scmp.eq.s32.totalorder %s21, 0
    %p173 = por %p171, %p172
    %p174 = scmp.ne.s32.totalorder %s162, %s163
    %p175 = scmp.eq.s32.totalorder %s22, 1
    %p176 = por %p174, %p175
    %p178 = scmp.ne.s32.totalorder %s163, %s177
    %p179 = scmp.eq.s32.totalorder %s22, 0
    %p180 = por %p178, %p179
    %s181 = ssub.s32 %s16, %s23
    %p182 = scmp.eq.s32.totalorder %s181, 0
    %s184 = sadd.s32 %s183, 1
    %s185 = scalar_select %p182, %s183, %s184
    %p188 = pneg %p182
    %p189 = scmp.eq.s32.totalorder %s16, 1
    %p190 = por %p188, %p189
    %p191 = scmp.ne.s32.totalorder %s183, %s186
    %p192 = scmp.eq.s32.totalorder %s16, 0
    %p193 = por %p191, %p192
    %p194 = scmp.ne.s32.totalorder %s183, %s186
    %p195 = scmp.eq.s32.totalorder %s21, 1
    %p196 = por %p194, %p195
    %p197 = scmp.ne.s32.totalorder %s186, %s187
    %p198 = scmp.eq.s32.totalorder %s21, 0
    %p199 = por %p197, %p198
    %p200 = scmp.ne.s32.totalorder %s186, %s187
    %p201 = scmp.eq.s32.totalorder %s22, 1
    %p202 = por %p200, %p201
    %p204 = scmp.ne.s32.totalorder %s187, %s203
    %p205 = scmp.eq.s32.totalorder %s22, 0
    %p206 = por %p204, %p205
    %s208 = sadd.s32 %s207, 1
    %p211 = scmp.eq.s32.totalorder %s16, 1
    %p212 = scmp.ne.s32.totalorder %s207, %s209
    %p213 = scmp.eq.s32.totalorder %s16, 0
    %p214 = por %p212, %p213
    %p215 = scmp.ne.s32.totalorder %s207, %s209
    %p216 = scmp.eq.s32.totalorder %s21, 1
    %p217 = por %p215, %p216
    %p218 = scmp.ne.s32.totalorder %s209, %s210
    %p219 = scmp.eq.s32.totalorder %s21, 0
    %p220 = por %p218, %p219
    %p221 = scmp.ne.s32.totalorder %s209, %s210
    %p222 = scmp.eq.s32.totalorder %s22, 1
    %p223 = por %p221, %p222
    %p225 = scmp.ne.s32.totalorder %s210, %s224
    %p226 = scmp.eq.s32.totalorder %s22, 0
    %p227 = por %p225, %p226
    %s229 = sadd.s32 %s228, 1
    %p232 = scmp.eq.s32.totalorder %s16, 1
    %p233 = scmp.ne.s32.totalorder %s228, %s230
    %p234 = scmp.eq.s32.totalorder %s16, 0
    %p235 = por %p233, %p234
    %p236 = scmp.ne.s32.totalorder %s228, %s230
    %p237 = scmp.eq.s32.totalorder %s21, 1
    %p238 = por %p236, %p237
    %p239 = scmp.ne.s32.totalorder %s230, %s231
    %p240 = scmp.eq.s32.totalorder %s21, 0
    %p241 = por %p239, %p240
    %p242 = scmp.ne.s32.totalorder %s230, %s231
    %p243 = scmp.eq.s32.totalorder %s22, 1
    %p244 = por %p242, %p243
    %p246 = scmp.ne.s32.totalorder %s231, %s245
    %p247 = scmp.eq.s32.totalorder %s22, 0
    %p248 = por %p246, %p247
    %s249 = ssub.s32 %s16, %s23
    %p250 = scmp.eq.s32.totalorder %s249, 0
    %s252 = sadd.s32 %s251, 1
    %s253 = scalar_select %p250, %s251, %s252
    %p256 = pneg %p250
    %p257 = scmp.eq.s32.totalorder %s16, 1
    %p258 = por %p256, %p257
    %p259 = scmp.ne.s32.totalorder %s251, %s254
    %p260 = scmp.eq.s32.totalorder %s16, 0
    %p261 = por %p259, %p260
    %p262 = scmp.ne.s32.totalorder %s251, %s254
    %p263 = scmp.eq.s32.totalorder %s21, 1
    %p264 = por %p262, %p263
    %p265 = scmp.ne.s32.totalorder %s254, %s255
    %p266 = scmp.eq.s32.totalorder %s21, 0
    %p267 = por %p265, %p266
    %p268 = scmp.ne.s32.totalorder %s254, %s255
    %p269 = scmp.eq.s32.totalorder %s22, 1
    %p270 = por %p268, %p269
    %p272 = scmp.ne.s32.totalorder %s255, %s271
    %p273 = scmp.eq.s32.totalorder %s22, 0
    %p274 = por %p272, %p273
    %p275 = scmp.le.s32.totalorder 1, %s16
    %p276 = scmp.lt.s32.totalorder %s16, 3
    %p277 = pnand %p275, %p276
    %p278 = pneg %p277
    // Predicated region
    $region9: #{fwd.17} parent=5 // pred_check
      _
    $region10: #{fwd.17} parent=5 // pred_check_branch
      %280 = sbr.rel (%p277) target = $region12
    $region11: #{fwd.17} parent=5 // pred_region
      %s281 = ssub.s32 %s16, 1
      // Predicated region
      $region13: #{fwd.17} parent=11 // pred_check
        %p282 = pneg %p89
      $region14: #{fwd.17} parent=11 // pred_check_branch
        %284 = sbr.rel (%p282) target = $region16
      $region15: #{fwd.17} parent=11 // pred_region
        _
      $region16: #{fwd.17} parent=11 // pred_fallthru
        _
      // Predicated region
      $region17: #{fwd.17} parent=11 // pred_check
        %p285 = pneg %p110
      $region18: #{fwd.17} parent=11 // pred_check_branch
        %287 = sbr.rel (%p285) target = $region20
      $region19: #{fwd.17} parent=11 // pred_region
        _
      $region20: #{fwd.17} parent=11 // pred_fallthru
        _
      // Predicated region
      $region21: #{fwd.17} parent=11 // pred_check
        %p288 = pneg %p131
      $region22: #{fwd.17} parent=11 // pred_check_branch
        %290 = sbr.rel (%p288) target = $region24
      $region23: #{fwd.17} parent=11 // pred_region
        _
      $region24: #{fwd.17} parent=11 // pred_fallthru
        _
      // Predicated region
      $region25: #{fwd.17} parent=11 // pred_check
        %p291 = pneg %p152
      $region26: #{fwd.17} parent=11 // pred_check_branch
        %293 = sbr.rel (%p291) target = $region28
      $region27: #{fwd.17} parent=11 // pred_region
        _
      $region28: #{fwd.17} parent=11 // pred_fallthru
        _
      // Predicated region
      $region29: #{fwd.17} parent=11 // pred_check
        %p294 = pneg %p173
      $region30: #{fwd.17} parent=11 // pred_check_branch
        %296 = sbr.rel (%p294) target = $region32
      $region31: #{fwd.17} parent=11 // pred_region
        _
      $region32: #{fwd.17} parent=11 // pred_fallthru
        _
      // Predicated region
      $region33: #{fwd.17} parent=11 // pred_check
        %p297 = pneg %p220
      $region34: #{fwd.17} parent=11 // pred_check_branch
        %299 = sbr.rel (%p297) target = $region36
      $region35: #{fwd.17} parent=11 // pred_region
        _
      $region36: #{fwd.17} parent=11 // pred_fallthru
        _
      // Predicated region
      $region37: #{fwd.17} parent=11 // pred_check
        %p300 = pneg %p241
      $region38: #{fwd.17} parent=11 // pred_check_branch
        %302 = sbr.rel (%p300) target = $region40
      $region39: #{fwd.17} parent=11 // pred_region
        _
      $region40: #{fwd.17} parent=11 // pred_fallthru
        _
    $region12: #{fwd.17} parent=5 // pred_fallthru
      _
    %p303 = scmp.lt.s32.totalorder %s16, 2
    // Predicated region
    $region41: #{fwd.17} parent=5 // pred_check
      %p304 = pneg %p303
    $region42: #{fwd.17} parent=5 // pred_check_branch
      %306 = sbr.rel (%p304) target = $region44
    $region43: #{fwd.17} parent=5 // pred_region
      // Predicated region
      $region45: #{fwd.17} parent=43 // pred_check
        %p307 = pneg %p36
      $region46: #{fwd.17} parent=43 // pred_check_branch
        %309 = sbr.rel (%p307) target = $region48
      $region47: #{fwd.17} parent=43 // pred_region
        %p310 = scmp.lt.s32.totalorder %s16, 1
        %s311 = scalar_select %p310, %s16, 1
        %s312 = smul.addr %s311, 8
        %s313 = scalar_lea.vmem %s0, %s312
      $region48: #{fwd.17} parent=43 // pred_fallthru
        _
      // Predicated region
      $region49: #{fwd.17} parent=43 // pred_check
        %p314 = pneg %p62
      $region50: #{fwd.17} parent=43 // pred_check_branch
        %316 = sbr.rel (%p314) target = $region52
      $region51: #{fwd.17} parent=43 // pred_region
        %p317 = scmp.lt.s32.totalorder %s16, 1
        %s318 = scalar_select %p317, %s16, 1
        %s319 = smul.addr %s318, 8
        %s320 = scalar_lea.vmem %s1, %s319
      $region52: #{fwd.17} parent=43 // pred_fallthru
        _
      // Predicated region
      $region53: #{fwd.17} parent=43 // pred_check
        %p321 = pneg %p193
      $region54: #{fwd.17} parent=43 // pred_check_branch
        %323 = sbr.rel (%p321) target = $region56
      $region55: #{fwd.17} parent=43 // pred_region
        %p324 = scmp.lt.s32.totalorder %s16, 1
        %s325 = scalar_select %p324, %s16, 1
        %s326 = scalar_lea.vmem %s7, %s325
      $region56: #{fwd.17} parent=43 // pred_fallthru
        _
    $region44: #{fwd.17} parent=5 // pred_fallthru
      _
    %p327 = scmp.le.s32.totalorder 1, %s16
    %p328 = scmp.lt.s32.totalorder %s16, 3
    %p329 = pnand %p327, %p328
    %p330 = pneg %p329
    // Predicated region
    $region57: #{fwd.17} parent=5 // pred_check
      _
    $region58: #{fwd.17} parent=5 // pred_check_branch
      %332 = sbr.rel (%p329) target = $region60
    $region59: #{fwd.17} parent=5 // pred_region
      %s333 = ssub.s32 %s16, 1
      %p334 = scmp.lt.s32.totalorder %s21, 1
      %s335 = scalar_select %p334, %s21, 1
      %s336 = smul.addr %s335, 8
      %s337 = scalar_lea.vmem %s0, %s336
      %p338 = pneg %p42
      %p339 = pneg %p39
      %p340 = scmp.lt.s32.totalorder %s21, 1
      %s341 = scalar_select %p340, %s21, 1
      %s342 = smul.addr %s341, 8
      %s343 = scalar_lea.vmem %s1, %s342
      %p344 = pneg %p68
      %p345 = pneg %p65
      %p346 = pneg %p89
      %p347 = pneg %p86
      %p348 = pneg %p110
      %p349 = pneg %p107
      %p350 = pneg %p131
      %p351 = pneg %p128
      %p352 = pneg %p152
      %p353 = pneg %p149
      %p354 = pneg %p173
      %p355 = pneg %p170
      %p356 = scmp.lt.s32.totalorder %s21, 1
      %s357 = scalar_select %p356, %s21, 1
      %s358 = scalar_lea.vmem %s7, %s357
      %p359 = pneg %p199
      %p360 = pneg %p196
      %p361 = pneg %p220
      %p362 = pneg %p217
      %p363 = pneg %p241
      %p364 = pneg %p238
      %p365 = pneg %p267
      %p366 = pneg %p264
      %p367 = scmp.lt.s32.totalorder %s21, 1
      %s368 = scalar_select %p367, %s21, 1
      %s369 = smul.addr %s368, 8
      %s370 = scalar_lea.vmem %s10, %s369
      %p371 = scmp.lt.s32.totalorder %s21, 1
      %s372 = scalar_select %p371, %s21, 1
      %s373 = smul.addr %s372, 8
      %s374 = scalar_lea.vmem %s0, %s373
      %p375 = scmp.lt.s32.totalorder %s21, 1
      %s376 = scalar_select %p375, %s21, 1
      %s377 = smul.addr %s376, 8
      %s378 = scalar_lea.vmem %s1, %s377
      %p379 = scmp.lt.s32.totalorder %s21, 1
      %s380 = scalar_select %p379, %s21, 1
      %s381 = scalar_lea.vmem %s7, %s380
      %p382 = scmp.lt.s32.totalorder %s21, 1
      %s383 = scalar_select %p382, %s21, 1
      %s384 = smul.addr %s383, 8
      %s385 = scalar_lea.vmem %s10, %s384
      %v387 = vld [vmem:[%s374] sm:$0x3f]
      %v388 = vld [vmem:[%s2] sm:$0xf]
      %v389 = vld [vmem:[%s2 + $0x4] sm:$0xf]
      %v390 = vld [vmem:[%s2 + $0x8] sm:$0xf]
      %v391 = vld [vmem:[%s2 + $0xc] sm:$0xf]
      %v392 = vld [vmem:[%s3] sm:$0x1]
      %v393 = vpack.c.bf16 %v387, %v387
      %v395 = vlaneseq
      %v396 = vshrl.u32 %v395, 7
      %v397 = vsub.s32 0, %v396
      %v398 = vrot.slane %v392, %v397
      %v404 = vunpack.c.l.b16 %v388
      %v405 = vunpack.c.l.b16 %v389
      %v406 = vunpack.c.l.b16 %v390
      %v407 = vunpack.c.l.b16 %v391
      %v408 = vpack.c.b16 %v405, %v404
      %v409 = vpack.c.b16 %v407, %v406
      %vm412 = vcmask 261120
      %v414 = vsel %vm412, %v393, 0
      %416 = vmatprep.subr.bf16.mxu0 0
      %417 = vmatpush1.bf16.msra.mxu0 0
      %418 = vmatprep.subr.bf16.mxu0 0
      %419 = vmatpush1.bf16.msra.mxu0 0
      %420 = vmatprep.subr.bf16.mxu0 0
      %421 = vmatpush1.bf16.msra.mxu0 0
      %422 = vmatprep.subr.bf16.mxu0 0
      %423 = vmatpush1.bf16.msra.mxu0 0
      %424 = vmatprep.subr.bf16.mxu0 0
      %425 = vmatpush1.bf16.msra.mxu0 0
      %426 = vmatprep.subr.bf16.mxu0 0
      %427 = vmatpush1.bf16.msra.mxu0 0
      %428 = vmatprep.subr.bf16.mxu0 0
      %429 = vmatpush1.bf16.msra.mxu0 %v409
      %430 = vmatprep.subr.bf16.mxu0 0
      %431 = vmatpush1.bf16.msra.mxu0 %v408
      %432 = vmatprep.subr.bf16.mxu0 0
      %433 = vmatpush2.bf16.msra.mxu0 0
      %434 = vmatprep.subr.bf16.mxu0 0
      %435 = vmatpush2.bf16.msra.mxu0 0
      %436 = vmatprep.subr.bf16.mxu0 0
      %437 = vmatpush2.bf16.msra.mxu0 0
      %438 = vmatprep.subr.bf16.mxu0 0
      %439 = vmatpush2.bf16.msra.mxu0 0
      %440 = vmatprep.subr.bf16.mxu0 0
      %441 = vmatpush2.bf16.msra.mxu0 0
      %442 = vmatprep.subr.bf16.mxu0 0
      %443 = vmatpush2.bf16.msra.mxu0 0
      %444 = vmatprep.subr.bf16.mxu0 0
      %445 = vmatpush2.bf16.msra.mxu0 0
      %446 = vmatprep.subr.bf16.mxu0 0
      %447 = vmatpush2.bf16.msra.mxu0 0
      %448 = vmatprep.mubr.bf16.mxu0 0
      %449 = vmatmul.mubr.bf16.gmra.mxu0 %v414
      %v450 = vpop.f32.mrf.mxu0
      %v451 = vadd.f32 %v398, %v450
      %v452 = vpop.f32.mrf.mxu0
      %v453 = vpop.f32.mrf.mxu0
      %v454 = vpop.f32.mrf.mxu0
      %455 = vdwg.mxu0
      %v456 = vld [vmem:[%s6] sm:$0x3f]
      %v457 = vld [vmem:[%s381] sm:$0x1]
      %v459 = vlaneseq
      %v460 = vshrl.u32 %v459, 7
      %v461 = vsub.s32 0, %v460
      %v462 = vrot.slane %v457, %v461
      %v464 = vadd.f32 %v456, %v462
      %v465 = vmul.f32 %v451, 0.35355338
      %v466 = vpack.c.bf16 %v465, %v465
      %v467 = vpack.c.bf16 %v451, %v451
      %469 = vrot.lane.b32.xlu0 %v467, 96
      %v470 = vpop.permute.xlu0 %469
      %vm471 = vcmask 64512
      %v473 = vsel %vm471, %v466, 0
      %v476 = vsel %vm471, %v470, 0
      %478 = vmatprep.subr.bf16.mxu0 0
      %479 = vmatpush1.bf16.xpose.msra.mxu0 0
      %480 = vmatprep.subr.bf16.mxu0 0
      %481 = vmatpush1.bf16.xpose.msra.mxu0 0
      %482 = vmatprep.subr.bf16.mxu0 0
      %483 = vmatpush1.bf16.xpose.msra.mxu0 0
      %484 = vmatprep.subr.bf16.mxu0 0
      %485 = vmatpush1.bf16.xpose.msra.mxu0 0
      %486 = vmatprep.subr.bf16.mxu0 0
      %487 = vmatpush1.bf16.xpose.msra.mxu0 0
      %488 = vmatprep.subr.bf16.mxu0 0
      %489 = vmatpush1.bf16.xpose.msra.mxu0 0
      %490 = vmatprep.subr.bf16.mxu0 0
      %491 = vmatpush1.bf16.xpose.msra.mxu0 0
      %492 = vmatprep.subr.bf16.mxu0 0
      %493 = vmatpush1.bf16.xpose.msra.mxu0 %v476
      %494 = vmatprep.subr.bf16.mxu0 0
      %495 = vmatpush2.bf16.xpose.msra.mxu0 0
      %496 = vmatprep.subr.bf16.mxu0 0
      %497 = vmatpush2.bf16.xpose.msra.mxu0 0
      %498 = vmatprep.subr.bf16.mxu0 0
      %499 = vmatpush2.bf16.xpose.msra.mxu0 0
      %500 = vmatprep.subr.bf16.mxu0 0
      %501 = vmatpush2.bf16.xpose.msra.mxu0 0
      %502 = vmatprep.subr.bf16.mxu0 0
      %503 = vmatpush2.bf16.xpose.msra.mxu0 0
      %504 = vmatprep.subr.bf16.mxu0 0
      %505 = vmatpush2.bf16.xpose.msra.mxu0 0
      %506 = vmatprep.subr.bf16.mxu0 0
      %507 = vmatpush2.bf16.xpose.msra.mxu0 0
      %508 = vmatprep.subr.bf16.mxu0 0
      %509 = vmatpush2.bf16.xpose.msra.mxu0 0
      %510 = vmatprep.mubr.bf16.mxu0 0
      %511 = vmatmul.mubr.bf16.gmra.mxu0 %v473
      %v512 = vpop.f32.mrf.mxu0
      %v513 = vadd.f32 %v464, %v512
      %v514 = vpop.f32.mrf.mxu0
      %v515 = vpop.f32.mrf.mxu0
      %v516 = vpop.f32.mrf.mxu0
      %517 = vdwg.mxu0
      %vm518 = vcmask 46080
      %v519 = vsel %vm518, %v513, -inf
      %520 = vmax.xlane.f32.xlu0 %v519
      %v521 = vpop.xlane.xlu0 %520
      %v522 = vsub.f32 %v513, %v521
      %v523 = vmul.f32 %v522, 1.442695
      %v524 = vpow.pop %v523
      %v525 = vsel %vm518, %v524, 0.0
      %526 = vadd.xlane.f32.xlu0 %v525
      %v527 = vpop.xlane.xlu0 %526
      %v528 = vrcp.pop %v527
      %v529 = vmul.f32 %v524, %v528
      %v530 = vpack.c.bf16 %v529, %v529
      %531 = vrot.lane.b32.xlu0 %v467, 64
      %v532 = vpop.permute.xlu0 %531
      %vm533 = vcmask 48128
      %v535 = vsel %vm533, %v530, 0
      %vm537 = vcmask 1042432
      %v539 = vsel %vm537, %v532, 0
      %541 = vmatprep.subr.bf16.mxu0 0
      %542 = vmatpush1.bf16.msra.mxu0 0
      %543 = vmatprep.subr.bf16.mxu0 0
      %544 = vmatpush1.bf16.msra.mxu0 0
      %545 = vmatprep.subr.bf16.mxu0 0
      %546 = vmatpush1.bf16.msra.mxu0 0
      %547 = vmatprep.subr.bf16.mxu0 0
      %548 = vmatpush1.bf16.msra.mxu0 0
      %549 = vmatprep.subr.bf16.mxu0 0
      %550 = vmatpush1.bf16.msra.mxu0 0
      %551 = vmatprep.subr.bf16.mxu0 0
      %552 = vmatpush1.bf16.msra.mxu0 0
      %553 = vmatprep.subr.bf16.mxu0 0
      %554 = vmatpush1.bf16.msra.mxu0 0
      %555 = vmatprep.subr.bf16.mxu0 0
      %556 = vmatpush1.bf16.msra.mxu0 %v539
      %557 = vmatprep.subr.bf16.mxu0 0
      %558 = vmatpush2.bf16.msra.mxu0 0
      %559 = vmatprep.subr.bf16.mxu0 0
      %560 = vmatpush2.bf16.msra.mxu0 0
      %561 = vmatprep.subr.bf16.mxu0 0
      %562 = vmatpush2.bf16.msra.mxu0 0
      %563 = vmatprep.subr.bf16.mxu0 0
      %564 = vmatpush2.bf16.msra.mxu0 0
      %565 = vmatprep.subr.bf16.mxu0 0
      %566 = vmatpush2.bf16.msra.mxu0 0
      %567 = vmatprep.subr.bf16.mxu0 0
      %568 = vmatpush2.bf16.msra.mxu0 0
      %569 = vmatprep.subr.bf16.mxu0 0
      %570 = vmatpush2.bf16.msra.mxu0 0
      %571 = vmatprep.subr.bf16.mxu0 0
      %572 = vmatpush2.bf16.msra.mxu0 0
      %573 = vmatprep.mubr.bf16.mxu0 0
      %574 = vmatmul.mubr.bf16.gmra.mxu0 %v535
      %v575 = vpop.f32.mrf.mxu0
      %v576 = vadd.f32 0.0, %v575
      %v577 = vpop.f32.mrf.mxu0
      %v578 = vpop.f32.mrf.mxu0
      %v579 = vpop.f32.mrf.mxu0
      %580 = vdwg.mxu0
      %vm581 = vcmask 62464
      %582 = vst.msk [vmem:[#allocation2] sm:$0x3f] %vm581, %v576
      %584 = vrot.lane.b32.xlu0 %v466, 120
      %v585 = vpop.permute.xlu0 %584
      %586 = vrot.lane.b32.xlu0 %v467, 88
      %v587 = vpop.permute.xlu0 %586
      %v589 = vsel %vm471, %v585, 0
      %v592 = vsel %vm471, %v587, 0
      %594 = vmatprep.subr.bf16.mxu0 0
      %595 = vmatpush1.bf16.xpose.msra.mxu0 0
      %596 = vmatprep.subr.bf16.mxu0 0
      %597 = vmatpush1.bf16.xpose.msra.mxu0 0
      %598 = vmatprep.subr.bf16.mxu0 0
      %599 = vmatpush1.bf16.xpose.msra.mxu0 0
      %600 = vmatprep.subr.bf16.mxu0 0
      %601 = vmatpush1.bf16.xpose.msra.mxu0 0
      %602 = vmatprep.subr.bf16.mxu0 0
      %603 = vmatpush1.bf16.xpose.msra.mxu0 0
      %604 = vmatprep.subr.bf16.mxu0 0
      %605 = vmatpush1.bf16.xpose.msra.mxu0 0
      %606 = vmatprep.subr.bf16.mxu0 0
      %607 = vmatpush1.bf16.xpose.msra.mxu0 0
      %608 = vmatprep.subr.bf16.mxu0 0
      %609 = vmatpush1.bf16.xpose.msra.mxu0 %v592
      %610 = vmatprep.subr.bf16.mxu0 0
      %611 = vmatpush2.bf16.xpose.msra.mxu0 0
      %612 = vmatprep.subr.bf16.mxu0 0
      %613 = vmatpush2.bf16.xpose.msra.mxu0 0
      %614 = vmatprep.subr.bf16.mxu0 0
      %615 = vmatpush2.bf16.xpose.msra.mxu0 0
      %616 = vmatprep.subr.bf16.mxu0 0
      %617 = vmatpush2.bf16.xpose.msra.mxu0 0
      %618 = vmatprep.subr.bf16.mxu0 0
      %619 = vmatpush2.bf16.xpose.msra.mxu0 0
      %620 = vmatprep.subr.bf16.mxu0 0
      %621 = vmatpush2.bf16.xpose.msra.mxu0 0
      %622 = vmatprep.subr.bf16.mxu0 0
      %623 = vmatpush2.bf16.xpose.msra.mxu0 0
      %624 = vmatprep.subr.bf16.mxu0 0
      %625 = vmatpush2.bf16.xpose.msra.mxu0 0
      %626 = vmatprep.mubr.bf16.mxu0 0
      %627 = vmatmul.mubr.bf16.gmra.mxu0 %v589
      %v628 = vpop.f32.mrf.mxu0
      %v629 = vadd.f32 %v464, %v628
      %v630 = vpop.f32.mrf.mxu0
      %v631 = vpop.f32.mrf.mxu0
      %v632 = vpop.f32.mrf.mxu0
      %633 = vdwg.mxu0
      %v634 = vsel %vm518, %v629, -inf
      %635 = vmax.xlane.f32.xlu0 %v634
      %v636 = vpop.xlane.xlu0 %635
      %v637 = vsub.f32 %v629, %v636
      %v638 = vmul.f32 %v637, 1.442695
      %v639 = vpow.pop %v638
      %v640 = vsel %vm518, %v639, 0.0
      %641 = vadd.xlane.f32.xlu0 %v640
      %v642 = vpop.xlane.xlu0 %641
      %v643 = vrcp.pop %v642
      %v644 = vmul.f32 %v639, %v643
      %v645 = vpack.c.bf16 %v644, %v644
      %646 = vrot.lane.b32.xlu0 %v467, 56
      %v647 = vpop.permute.xlu0 %646
      %v649 = vsel %vm533, %v645, 0
      %v652 = vsel %vm537, %v647, 0
      %654 = vmatprep.subr.bf16.mxu0 0
      %655 = vmatpush1.bf16.msra.mxu0 0
      %656 = vmatprep.subr.bf16.mxu0 0
      %657 = vmatpush1.bf16.msra.mxu0 0
      %658 = vmatprep.subr.bf16.mxu0 0
      %659 = vmatpush1.bf16.msra.mxu0 0
      %660 = vmatprep.subr.bf16.mxu0 0
      %661 = vmatpush1.bf16.msra.mxu0 0
      %662 = vmatprep.subr.bf16.mxu0 0
      %663 = vmatpush1.bf16.msra.mxu0 0
      %664 = vmatprep.subr.bf16.mxu0 0
      %665 = vmatpush1.bf16.msra.mxu0 0
      %666 = vmatprep.subr.bf16.mxu0 0
      %667 = vmatpush1.bf16.msra.mxu0 0
      %668 = vmatprep.subr.bf16.mxu0 0
      %669 = vmatpush1.bf16.msra.mxu0 %v652
      %670 = vmatprep.subr.bf16.mxu0 0
      %671 = vmatpush2.bf16.msra.mxu0 0
      %672 = vmatprep.subr.bf16.mxu0 0
      %673 = vmatpush2.bf16.msra.mxu0 0
      %674 = vmatprep.subr.bf16.mxu0 0
      %675 = vmatpush2.bf16.msra.mxu0 0
      %676 = vmatprep.subr.bf16.mxu0 0
      %677 = vmatpush2.bf16.msra.mxu0 0
      %678 = vmatprep.subr.bf16.mxu0 0
      %679 = vmatpush2.bf16.msra.mxu0 0
      %680 = vmatprep.subr.bf16.mxu0 0
      %681 = vmatpush2.bf16.msra.mxu0 0
      %682 = vmatprep.subr.bf16.mxu0 0
      %683 = vmatpush2.bf16.msra.mxu0 0
      %684 = vmatprep.subr.bf16.mxu0 0
      %685 = vmatpush2.bf16.msra.mxu0 0
      %686 = vmatprep.mubr.bf16.mxu0 0
      %687 = vmatmul.mubr.bf16.gmra.mxu0 %v649
      %v688 = vpop.f32.mrf.mxu0
      %v689 = vadd.f32 0.0, %v688
      %v690 = vpop.f32.mrf.mxu0
      %v691 = vpop.f32.mrf.mxu0
      %v692 = vpop.f32.mrf.mxu0
      %693 = vdwg.mxu0
      %695 = vrot.lane.b32.xlu0 %v689, 8
      %v696 = vpop.permute.xlu0 %695
      %vm698 = vcmask 128064
      %699 = vst.msk [vmem:[#allocation2] sm:$0x3f] %vm698, %v696
      %700 = vrot.lane.b32.xlu0 %v466, 112
      %v701 = vpop.permute.xlu0 %700
      %702 = vrot.lane.b32.xlu0 %v467, 80
      %v703 = vpop.permute.xlu0 %702
      %v705 = vsel %vm471, %v701, 0
      %v708 = vsel %vm471, %v703, 0
      %710 = vmatprep.subr.bf16.mxu0 0
      %711 = vmatpush1.bf16.xpose.msra.mxu0 0
      %712 = vmatprep.subr.bf16.mxu0 0
      %713 = vmatpush1.bf16.xpose.msra.mxu0 0
      %714 = vmatprep.subr.bf16.mxu0 0
      %715 = vmatpush1.bf16.xpose.msra.mxu0 0
      %716 = vmatprep.subr.bf16.mxu0 0
      %717 = vmatpush1.bf16.xpose.msra.mxu0 0
      %718 = vmatprep.subr.bf16.mxu0 0
      %719 = vmatpush1.bf16.xpose.msra.mxu0 0
      %720 = vmatprep.subr.bf16.mxu0 0
      %721 = vmatpush1.bf16.xpose.msra.mxu0 0
      %722 = vmatprep.subr.bf16.mxu0 0
      %723 = vmatpush1.bf16.xpose.msra.mxu0 0
      %724 = vmatprep.subr.bf16.mxu0 0
      %725 = vmatpush1.bf16.xpose.msra.mxu0 %v708
      %726 = vmatprep.subr.bf16.mxu0 0
      %727 = vmatpush2.bf16.xpose.msra.mxu0 0
      %728 = vmatprep.subr.bf16.mxu0 0
      %729 = vmatpush2.bf16.xpose.msra.mxu0 0
      %730 = vmatprep.subr.bf16.mxu0 0
      %731 = vmatpush2.bf16.xpose.msra.mxu0 0
      %732 = vmatprep.subr.bf16.mxu0 0
      %733 = vmatpush2.bf16.xpose.msra.mxu0 0
      %734 = vmatprep.subr.bf16.mxu0 0
      %735 = vmatpush2.bf16.xpose.msra.mxu0 0
      %736 = vmatprep.subr.bf16.mxu0 0
      %737 = vmatpush2.bf16.xpose.msra.mxu0 0
      %738 = vmatprep.subr.bf16.mxu0 0
      %739 = vmatpush2.bf16.xpose.msra.mxu0 0
      %740 = vmatprep.subr.bf16.mxu0 0
      %741 = vmatpush2.bf16.xpose.msra.mxu0 0
      %742 = vmatprep.mubr.bf16.mxu0 0
      %743 = vmatmul.mubr.bf16.gmra.mxu0 %v705
      %v744 = vpop.f32.mrf.mxu0
      %v745 = vadd.f32 %v464, %v744
      %v746 = vpop.f32.mrf.mxu0
      %v747 = vpop.f32.mrf.mxu0
      %v748 = vpop.f32.mrf.mxu0
      %749 = vdwg.mxu0
      %v750 = vsel %vm518, %v745, -inf
      %751 = vmax.xlane.f32.xlu0 %v750
      %v752 = vpop.xlane.xlu0 %751
      %v753 = vsub.f32 %v745, %v752
      %v754 = vmul.f32 %v753, 1.442695
      %v755 = vpow.pop %v754
      %v756 = vsel %vm518, %v755, 0.0
      %757 = vadd.xlane.f32.xlu0 %v756
      %v758 = vpop.xlane.xlu0 %757
      %v759 = vrcp.pop %v758
      %v760 = vmul.f32 %v755, %v759
      %v761 = vpack.c.bf16 %v760, %v760
      %762 = vrot.lane.b32.xlu0 %v467, 48
      %v763 = vpop.permute.xlu0 %762
      %v765 = vsel %vm533, %v761, 0
      %v768 = vsel %vm537, %v763, 0
      %770 = vmatprep.subr.bf16.mxu0 0
      %771 = vmatpush1.bf16.msra.mxu0 0
      %772 = vmatprep.subr.bf16.mxu0 0
      %773 = vmatpush1.bf16.msra.mxu0 0
      %774 = vmatprep.subr.bf16.mxu0 0
      %775 = vmatpush1.bf16.msra.mxu0 0
      %776 = vmatprep.subr.bf16.mxu0 0
      %777 = vmatpush1.bf16.msra.mxu0 0
      %778 = vmatprep.subr.bf16.mxu0 0
      %779 = vmatpush1.bf16.msra.mxu0 0
      %780 = vmatprep.subr.bf16.mxu0 0
      %781 = vmatpush1.bf16.msra.mxu0 0
      %782 = vmatprep.subr.bf16.mxu0 0
      %783 = vmatpush1.bf16.msra.mxu0 0
      %784 = vmatprep.subr.bf16.mxu0 0
      %785 = vmatpush1.bf16.msra.mxu0 %v768
      %786 = vmatprep.subr.bf16.mxu0 0
      %787 = vmatpush2.bf16.msra.mxu0 0
      %788 = vmatprep.subr.bf16.mxu0 0
      %789 = vmatpush2.bf16.msra.mxu0 0
      %790 = vmatprep.subr.bf16.mxu0 0
      %791 = vmatpush2.bf16.msra.mxu0 0
      %792 = vmatprep.subr.bf16.mxu0 0
      %793 = vmatpush2.bf16.msra.mxu0 0
      %794 = vmatprep.subr.bf16.mxu0 0
      %795 = vmatpush2.bf16.msra.mxu0 0
      %796 = vmatprep.subr.bf16.mxu0 0
      %797 = vmatpush2.bf16.msra.mxu0 0
      %798 = vmatprep.subr.bf16.mxu0 0
      %799 = vmatpush2.bf16.msra.mxu0 0
      %800 = vmatprep.subr.bf16.mxu0 0
      %801 = vmatpush2.bf16.msra.mxu0 0
      %802 = vmatprep.mubr.bf16.mxu0 0
      %803 = vmatmul.mubr.bf16.gmra.mxu0 %v765
      %v804 = vpop.f32.mrf.mxu0
      %v805 = vadd.f32 0.0, %v804
      %v806 = vpop.f32.mrf.mxu0
      %v807 = vpop.f32.mrf.mxu0
      %v808 = vpop.f32.mrf.mxu0
      %809 = vdwg.mxu0
      %811 = vrot.lane.b32.xlu0 %v805, 16
      %v812 = vpop.permute.xlu0 %811
      %vm814 = vcmask 193664
      %815 = vst.msk [vmem:[#allocation2] sm:$0x3f] %vm814, %v812
      %816 = vrot.lane.b32.xlu0 %v466, 104
      %v817 = vpop.permute.xlu0 %816
      %818 = vrot.lane.b32.xlu0 %v467, 72
      %v819 = vpop.permute.xlu0 %818
      %v821 = vsel %vm471, %v817, 0
      %v824 = vsel %vm471, %v819, 0
      %826 = vmatprep.subr.bf16.mxu0 0
      %827 = vmatpush1.bf16.xpose.msra.mxu0 0
      %828 = vmatprep.subr.bf16.mxu0 0
      %829 = vmatpush1.bf16.xpose.msra.mxu0 0
      %830 = vmatprep.subr.bf16.mxu0 0
      %831 = vmatpush1.bf16.xpose.msra.mxu0 0
      %832 = vmatprep.subr.bf16.mxu0 0
      %833 = vmatpush1.bf16.xpose.msra.mxu0 0
      %834 = vmatprep.subr.bf16.mxu0 0
      %835 = vmatpush1.bf16.xpose.msra.mxu0 0
      %836 = vmatprep.subr.bf16.mxu0 0
      %837 = vmatpush1.bf16.xpose.msra.mxu0 0
      %838 = vmatprep.subr.bf16.mxu0 0
      %839 = vmatpush1.bf16.xpose.msra.mxu0 0
      %840 = vmatprep.subr.bf16.mxu0 0
      %841 = vmatpush1.bf16.xpose.msra.mxu0 %v824
      %842 = vmatprep.subr.bf16.mxu0 0
      %843 = vmatpush2.bf16.xpose.msra.mxu0 0
      %844 = vmatprep.subr.bf16.mxu0 0
      %845 = vmatpush2.bf16.xpose.msra.mxu0 0
      %846 = vmatprep.subr.bf16.mxu0 0
      %847 = vmatpush2.bf16.xpose.msra.mxu0 0
      %848 = vmatprep.subr.bf16.mxu0 0
      %849 = vmatpush2.bf16.xpose.msra.mxu0 0
      %850 = vmatprep.subr.bf16.mxu0 0
      %851 = vmatpush2.bf16.xpose.msra.mxu0 0
      %852 = vmatprep.subr.bf16.mxu0 0
      %853 = vmatpush2.bf16.xpose.msra.mxu0 0
      %854 = vmatprep.subr.bf16.mxu0 0
      %855 = vmatpush2.bf16.xpose.msra.mxu0 0
      %856 = vmatprep.subr.bf16.mxu0 0
      %857 = vmatpush2.bf16.xpose.msra.mxu0 0
      %858 = vmatprep.mubr.bf16.mxu0 0
      %859 = vmatmul.mubr.bf16.gmra.mxu0 %v821
      %v860 = vpop.f32.mrf.mxu0
      %v861 = vadd.f32 %v464, %v860
      %v862 = vpop.f32.mrf.mxu0
      %v863 = vpop.f32.mrf.mxu0
      %v864 = vpop.f32.mrf.mxu0
      %865 = vdwg.mxu0
      %v866 = vsel %vm518, %v861, -inf
      %867 = vmax.xlane.f32.xlu0 %v866
      %v868 = vpop.xlane.xlu0 %867
      %v869 = vsub.f32 %v861, %v868
      %v870 = vmul.f32 %v869, 1.442695
      %v871 = vpow.pop %v870
      %v872 = vsel %vm518, %v871, 0.0
      %873 = vadd.xlane.f32.xlu0 %v872
      %v874 = vpop.xlane.xlu0 %873
      %v875 = vrcp.pop %v874
      %v876 = vmul.f32 %v871, %v875
      %v877 = vpack.c.bf16 %v876, %v876
      %878 = vrot.lane.b32.xlu0 %v467, 40
      %v879 = vpop.permute.xlu0 %878
      %v881 = vsel %vm533, %v877, 0
      %v884 = vsel %vm537, %v879, 0
      %886 = vmatprep.subr.bf16.mxu0 0
      %887 = vmatpush1.bf16.msra.mxu0 0
      %888 = vmatprep.subr.bf16.mxu0 0
      %889 = vmatpush1.bf16.msra.mxu0 0
      %890 = vmatprep.subr.bf16.mxu0 0
      %891 = vmatpush1.bf16.msra.mxu0 0
      %892 = vmatprep.subr.bf16.mxu0 0
      %893 = vmatpush1.bf16.msra.mxu0 0
      %894 = vmatprep.subr.bf16.mxu0 0
      %895 = vmatpush1.bf16.msra.mxu0 0
      %896 = vmatprep.subr.bf16.mxu0 0
      %897 = vmatpush1.bf16.msra.mxu0 0
      %898 = vmatprep.subr.bf16.mxu0 0
      %899 = vmatpush1.bf16.msra.mxu0 0
      %900 = vmatprep.subr.bf16.mxu0 0
      %901 = vmatpush1.bf16.msra.mxu0 %v884
      %902 = vmatprep.subr.bf16.mxu0 0
      %903 = vmatpush2.bf16.msra.mxu0 0
      %904 = vmatprep.subr.bf16.mxu0 0
      %905 = vmatpush2.bf16.msra.mxu0 0
      %906 = vmatprep.subr.bf16.mxu0 0
      %907 = vmatpush2.bf16.msra.mxu0 0
      %908 = vmatprep.subr.bf16.mxu0 0
      %909 = vmatpush2.bf16.msra.mxu0 0
      %910 = vmatprep.subr.bf16.mxu0 0
      %911 = vmatpush2.bf16.msra.mxu0 0
      %912 = vmatprep.subr.bf16.mxu0 0
      %913 = vmatpush2.bf16.msra.mxu0 0
      %914 = vmatprep.subr.bf16.mxu0 0
      %915 = vmatpush2.bf16.msra.mxu0 0
      %916 = vmatprep.subr.bf16.mxu0 0
      %917 = vmatpush2.bf16.msra.mxu0 0
      %918 = vmatprep.mubr.bf16.mxu0 0
      %919 = vmatmul.mubr.bf16.gmra.mxu0 %v881
      %v920 = vpop.f32.mrf.mxu0
      %v921 = vadd.f32 0.0, %v920
      %v922 = vpop.f32.mrf.mxu0
      %v923 = vpop.f32.mrf.mxu0
      %v924 = vpop.f32.mrf.mxu0
      %925 = vdwg.mxu0
      %927 = vrot.lane.b32.xlu0 %v921, 24
      %v928 = vpop.permute.xlu0 %927
      %vm930 = vcmask 259264
      %931 = vst.msk [vmem:[#allocation2] sm:$0x3f] %vm930, %v928
      %v932 = vld [vmem:[%s4] sm:$0xf]
      %v933 = vld [vmem:[%s4 + $0x4] sm:$0xf]
      %v934 = vld [vmem:[%s4 + $0x8] sm:$0xf]
      %v935 = vld [vmem:[%s4 + $0xc] sm:$0xf]
      %v936 = vld [vmem:[#allocation2] sm:$0x3f]
      %v937 = vpack.c.bf16 %v936, %v936
      %v938 = vld [vmem:[%s5] sm:$0x1]
      %v940 = vlaneseq
      %v941 = vshrl.u32 %v940, 7
      %v942 = vsub.s32 0, %v941
      %v943 = vrot.slane %v938, %v942
      %v949 = vunpack.c.l.b16 %v932
      %v950 = vunpack.c.l.b16 %v933
      %v951 = vunpack.c.l.b16 %v934
      %v952 = vunpack.c.l.b16 %v935
      %v953 = vpack.c.b16 %v950, %v949
      %v954 = vpack.c.b16 %v952, %v951
      %v958 = vsel %vm412, %v937, 0
      %960 = vmatprep.subr.bf16.mxu0 0
      %961 = vmatpush1.bf16.msra.mxu0 0
      %962 = vmatprep.subr.bf16.mxu0 0
      %963 = vmatpush1.bf16.msra.mxu0 0
      %964 = vmatprep.subr.bf16.mxu0 0
      %965 = vmatpush1.bf16.msra.mxu0 0
      %966 = vmatprep.subr.bf16.mxu0 0
      %967 = vmatpush1.bf16.msra.mxu0 0
      %968 = vmatprep.subr.bf16.mxu0 0
      %969 = vmatpush1.bf16.msra.mxu0 0
      %970 = vmatprep.subr.bf16.mxu0 0
      %971 = vmatpush1.bf16.msra.mxu0 0
      %972 = vmatprep.subr.bf16.mxu0 0
      %973 = vmatpush1.bf16.msra.mxu0 %v954
      %974 = vmatprep.subr.bf16.mxu0 0
      %975 = vmatpush1.bf16.msra.mxu0 %v953
      %976 = vmatprep.subr.bf16.mxu0 0
      %977 = vmatpush2.bf16.msra.mxu0 0
      %978 = vmatprep.subr.bf16.mxu0 0
      %979 = vmatpush2.bf16.msra.mxu0 0
      %980 = vmatprep.subr.bf16.mxu0 0
      %981 = vmatpush2.bf16.msra.mxu0 0
      %982 = vmatprep.subr.bf16.mxu0 0
      %983 = vmatpush2.bf16.msra.mxu0 0
      %984 = vmatprep.subr.bf16.mxu0 0
      %985 = vmatpush2.bf16.msra.mxu0 0
      %986 = vmatprep.subr.bf16.mxu0 0
      %987 = vmatpush2.bf16.msra.mxu0 0
      %988 = vmatprep.subr.bf16.mxu0 0
      %989 = vmatpush2.bf16.msra.mxu0 0
      %990 = vmatprep.subr.bf16.mxu0 0
      %991 = vmatpush2.bf16.msra.mxu0 0
      %992 = vmatprep.mubr.bf16.mxu0 0
      %993 = vmatmul.mubr.bf16.gmra.mxu0 %v958
      %v994 = vpop.f32.mrf.mxu0
      %v995 = vadd.f32 %v943, %v994
      %v996 = vpop.f32.mrf.mxu0
      %v997 = vpop.f32.mrf.mxu0
      %v998 = vpop.f32.mrf.mxu0
      %999 = vdwg.mxu0
      %v1000 = vadd.f32 %v387, %v995
      %vm1001 = vcmask 259072
      %v1002 = vsel %vm1001, %v1000, 0.0
      %1003 = vadd.xlane.f32.xlu0 %v1002
      %v1004 = vpop.xlane.xlu0 %1003
      %v1005 = vrcp.pop 32.0
      %v1006 = vmul.f32 %v1004, %v1005
      %v1007 = vsub.f32 %v1000, %v1006
      %v1008 = vmul.f32 %v1007, %v1007
      %v1009 = vsel %vm1001, %v1008, 0.0
      %1010 = vadd.xlane.f32.xlu0 %v1009
      %v1011 = vpop.xlane.xlu0 %1010
      %v1012 = vmul.f32 %v1011, %v1005
      %v1013 = vadd.f32 %v1012, 1e-05
      %v1014 = vrsqrt.pop %v1013
      %v1015 = vmul.f32 %v1007, %v1014
      %v1016 = vld [vmem:[%s8] sm:$0x1]
      %v1018 = vlaneseq
      %v1019 = vshrl.u32 %v1018, 7
      %v1020 = vsub.s32 0, %v1019
      %v1021 = vrot.slane %v1016, %v1020
      %v1023 = vmul.f32 %v1015, %v1021
      %v1024 = vld [vmem:[%s9] sm:$0x1]
      %v1026 = vlaneseq
      %v1027 = vshrl.u32 %v1026, 7
      %v1028 = vsub.s32 0, %v1027
      %v1029 = vrot.slane %v1024, %v1028
      %v1031 = vadd.f32 %v1023, %v1029
      %1032 = vst.msk [vmem:[%s385] sm:$0x3f] %vm1001, %v1031
      %p1033 = scmp.lt.s32.totalorder %s21, 1
      %s1034 = scalar_select %p1033, %s21, 1
      %s1035 = smul.addr %s1034, 8
      %s1036 = scalar_lea.vmem %s10, %s1035
      // Predicated region
      $region61: #{fwd.17} parent=59 // pred_check
        %p1037 = pneg %p264
      $region62: #{fwd.17} parent=59 // pred_check_branch
        %1039 = sbr.rel (%p1037) target = $region64
      $region63: #{fwd.17} parent=59 // pred_region
        _
      $region64: #{fwd.17} parent=59 // pred_fallthru
        _
    $region60: #{fwd.17} parent=5 // pred_fallthru
      _
    %p1040 = scmp.le.s32.totalorder 2, %s16
    // Predicated region
    $region65: #{fwd.17} parent=5 // pred_check
      %p1041 = pneg %p1040
    $region66: #{fwd.17} parent=5 // pred_check_branch
      %1043 = sbr.rel (%p1041) target = $region68
    $region67: #{fwd.17} parent=5 // pred_region
      %s1044 = ssub.s32 %s16, 2
      // Predicated region
      $region69: #{fwd.17} parent=67 // pred_check
        %p1045 = pneg %p270
      $region70: #{fwd.17} parent=67 // pred_check_branch
        %1047 = sbr.rel (%p1045) target = $region72
      $region71: #{fwd.17} parent=67 // pred_region
        %p1048 = scmp.lt.s32.totalorder %s22, 1
        %s1049 = scalar_select %p1048, %s22, 1
        %s1050 = smul.addr %s1049, 8
        %s1051 = scalar_lea.vmem %s10, %s1050
      $region72: #{fwd.17} parent=67 // pred_fallthru
        _
    $region68: #{fwd.17} parent=5 // pred_fallthru
      _
  $region6: #{fwd.17} parent=0 // loop_footer
    %s20 = sadd.s32 1, %s16
  $region7: #{fwd.17} parent=0 // loop_footer_branch
    %15 = sbr.rel target = $region3
  $region8: #{fwd.17} parent=0 // loop_exit
    _

// kernel: fwd.19
$region0: #{fwd.19}
  #allocation0 [shape = 'u32[]', space=smem, size = 0x4, offset = 0x4, fixed_abs, tag = 'smem constant byte address 0x4 - core index']
  #allocation1 [shape = 'u32[144,128]{1,0:T(1,128)}', space=vmem, size = 0x12000, scoped, tag = 'internal scratch']
  %s0 = inlined_call_operand.vmem [shape: f32[12,32], index: 0, kind: input, shape index: {}]
  %s1 = inlined_call_operand.vmem [shape: bf16[32,64], index: 1, kind: input, shape index: {}]
  %s2 = inlined_call_operand.vmem [shape: f32[1,64], index: 2, kind: input, shape index: {}]
  %s3 = inlined_call_operand.vmem [shape: bf16[64,32], index: 3, kind: input, shape index: {}]
  %s4 = inlined_call_operand.vmem [shape: f32[1,32], index: 4, kind: input, shape index: {}]
  %s5 = inlined_call_operand.vmem [shape: f32[1,32], index: 5, kind: input, shape index: {}]
  %s6 = inlined_call_operand.vmem [shape: f32[1,32], index: 6, kind: input, shape index: {}]
  %s7 = inlined_call_operand.vmem [shape: f32[12,32], index: 7, kind: output, shape index: {}]
  %s8 = sld [smem:[#allocation0]]
  $region38: #{fwd.19} parent=0
    _
  %s10 = ssub.s32 1, %s8
  %s11 = scalar_select 0, %s10, %s8
  // Predicated region
  $region2: #{fwd.19} parent=0 // pred_check
    _
  $region3: #{fwd.19} parent=0 // pred_check_branch
    %13 = sbr.rel (0) target = $region5
  $region4: #{fwd.19} parent=0 // pred_region
    _
  $region5: #{fwd.19} parent=0 // pred_fallthru
    _
  // Predicated region
  $region6: #{fwd.19} parent=0 // pred_check
    _
  $region7: #{fwd.19} parent=0 // pred_check_branch
    %15 = sbr.rel (0) target = $region9
  $region8: #{fwd.19} parent=0 // pred_region
    _
  $region9: #{fwd.19} parent=0 // pred_fallthru
    _
  // Predicated region
  $region10: #{fwd.19} parent=0 // pred_check
    _
  $region11: #{fwd.19} parent=0 // pred_check_branch
    %17 = sbr.rel (0) target = $region13
  $region12: #{fwd.19} parent=0 // pred_region
    _
  $region13: #{fwd.19} parent=0 // pred_fallthru
    _
  // Predicated region
  $region14: #{fwd.19} parent=0 // pred_check
    _
  $region15: #{fwd.19} parent=0 // pred_check_branch
    %19 = sbr.rel (0) target = $region17
  $region16: #{fwd.19} parent=0 // pred_region
    _
  $region17: #{fwd.19} parent=0 // pred_fallthru
    _
  // Predicated region
  $region18: #{fwd.19} parent=0 // pred_check
    _
  $region19: #{fwd.19} parent=0 // pred_check_branch
    %21 = sbr.rel (0) target = $region21
  $region20: #{fwd.19} parent=0 // pred_region
    _
  $region21: #{fwd.19} parent=0 // pred_fallthru
    _
  // Predicated region
  $region22: #{fwd.19} parent=0 // pred_check
    _
  $region23: #{fwd.19} parent=0 // pred_check_branch
    %23 = sbr.rel (0) target = $region25
  $region24: #{fwd.19} parent=0 // pred_region
    _
  $region25: #{fwd.19} parent=0 // pred_fallthru
    _
  // Predicated region
  $region26: #{fwd.19} parent=0 // pred_check
    _
  $region27: #{fwd.19} parent=0 // pred_check_branch
    %25 = sbr.rel (0) target = $region29
  $region28: #{fwd.19} parent=0 // pred_region
    _
  $region29: #{fwd.19} parent=0 // pred_fallthru
    _
  %v27 = vld [vmem:[%s0] sm:$0xff]
  %v28 = vld [vmem:[%s0 + $0x8] sm:$0xf]
  %v29 = vld [vmem:[%s1] sm:$0xf]
  %v30 = vld [vmem:[%s1 + $0x4] sm:$0xf]
  %v31 = vld [vmem:[%s1 + $0x8] sm:$0xf]
  %v32 = vld [vmem:[%s1 + $0xc] sm:$0xf]
  %v33 = vpack.c.bf16 %v28, %v27
  %v34 = vld [vmem:[%s2] sm:$0x1]
  %v36 = vlaneseq
  %v37 = vshrl.u32 %v36, 7
  %v38 = vsub.s32 0, %v37
  %v39 = vrot.slane %v34, %v38
  %v45 = vunpack.c.l.b16 %v29
  %v46 = vunpack.c.l.b16 %v30
  %v47 = vunpack.c.l.b16 %v31
  %v48 = vunpack.c.l.b16 %v32
  %v49 = vpack.c.b16 %v46, %v45
  %v50 = vpack.c.b16 %v48, %v47
  %vm53 = vcmask 261120
  %v55 = vsel %vm53, %v33, 0
  %57 = vmatprep.subr.bf16.mxu0 0
  %58 = vmatpush1.bf16.msra.mxu0 0
  %59 = vmatprep.subr.bf16.mxu0 0
  %60 = vmatpush1.bf16.msra.mxu0 0
  %61 = vmatprep.subr.bf16.mxu0 0
  %62 = vmatpush1.bf16.msra.mxu0 0
  %63 = vmatprep.subr.bf16.mxu0 0
  %64 = vmatpush1.bf16.msra.mxu0 0
  %65 = vmatprep.subr.bf16.mxu0 0
  %66 = vmatpush1.bf16.msra.mxu0 0
  %67 = vmatprep.subr.bf16.mxu0 0
  %68 = vmatpush1.bf16.msra.mxu0 0
  %69 = vmatprep.subr.bf16.mxu0 0
  %70 = vmatpush1.bf16.msra.mxu0 %v50
  %71 = vmatprep.subr.bf16.mxu0 0
  %72 = vmatpush1.bf16.msra.mxu0 %v49
  %73 = vmatprep.subr.bf16.mxu0 0
  %74 = vmatpush2.bf16.msra.mxu0 0
  %75 = vmatprep.subr.bf16.mxu0 0
  %76 = vmatpush2.bf16.msra.mxu0 0
  %77 = vmatprep.subr.bf16.mxu0 0
  %78 = vmatpush2.bf16.msra.mxu0 0
  %79 = vmatprep.subr.bf16.mxu0 0
  %80 = vmatpush2.bf16.msra.mxu0 0
  %81 = vmatprep.subr.bf16.mxu0 0
  %82 = vmatpush2.bf16.msra.mxu0 0
  %83 = vmatprep.subr.bf16.mxu0 0
  %84 = vmatpush2.bf16.msra.mxu0 0
  %85 = vmatprep.subr.bf16.mxu0 0
  %86 = vmatpush2.bf16.msra.mxu0 0
  %87 = vmatprep.subr.bf16.mxu0 0
  %88 = vmatpush2.bf16.msra.mxu0 0
  %89 = vmatprep.mubr.bf16.mxu0 0
  %90 = vmatmul.mubr.bf16.gmra.mxu0 %v55
  %v91 = vpop.f32.mrf.mxu0
  %v92 = vadd.f32 %v39, %v91
  %v93 = vpop.f32.mrf.mxu0
  %v94 = vpop.f32.mrf.mxu0
  %v95 = vadd.f32 %v39, %v94
  %v96 = vpop.f32.mrf.mxu0
  %97 = vdwg.mxu0
  %v98 = vmax.f32 %v92, 0.0
  %v99 = vmax.f32 %v95, 0.0
  %v100 = vld [vmem:[%s3] sm:$0xf]
  %v101 = vld [vmem:[%s3 + $0x4] sm:$0xf]
  %v102 = vld [vmem:[%s3 + $0x8] sm:$0xf]
  %v103 = vld [vmem:[%s3 + $0xc] sm:$0xf]
  %v104 = vld [vmem:[%s3 + $0x10] sm:$0xf]
  %v105 = vld [vmem:[%s3 + $0x14] sm:$0xf]
  %v106 = vld [vmem:[%s3 + $0x18] sm:$0xf]
  %v107 = vld [vmem:[%s3 + $0x1c] sm:$0xf]
  %v108 = vpack.c.bf16 %v99, %v98
  %v109 = vld [vmem:[%s4] sm:$0x1]
  %v111 = vlaneseq
  %v112 = vshrl.u32 %v111, 7
  %v113 = vsub.s32 0, %v112
  %v114 = vrot.slane %v109, %v113
  %v124 = vunpack.c.l.b16 %v100
  %v125 = vunpack.c.l.b16 %v101
  %v126 = vunpack.c.l.b16 %v102
  %v127 = vunpack.c.l.b16 %v103
  %v128 = vunpack.c.l.b16 %v104
  %v129 = vunpack.c.l.b16 %v105
  %v130 = vunpack.c.l.b16 %v106
  %v131 = vunpack.c.l.b16 %v107
  %v132 = vpack.c.b16 %v125, %v124
  %v133 = vpack.c.b16 %v127, %v126
  %v134 = vpack.c.b16 %v129, %v128
  %v135 = vpack.c.b16 %v131, %v130
  %vm140 = vcmask 523264
  %v142 = vsel %vm140, %v108, 0
  %144 = vmatprep.subr.bf16.mxu0 0
  %145 = vmatpush1.bf16.msra.mxu0 0
  %146 = vmatprep.subr.bf16.mxu0 0
  %147 = vmatpush1.bf16.msra.mxu0 0
  %148 = vmatprep.subr.bf16.mxu0 0
  %149 = vmatpush1.bf16.msra.mxu0 0
  %150 = vmatprep.subr.bf16.mxu0 0
  %151 = vmatpush1.bf16.msra.mxu0 0
  %152 = vmatprep.subr.bf16.mxu0 0
  %153 = vmatpush1.bf16.msra.mxu0 %v135
  %154 = vmatprep.subr.bf16.mxu0 0
  %155 = vmatpush1.bf16.msra.mxu0 %v134
  %156 = vmatprep.subr.bf16.mxu0 0
  %157 = vmatpush1.bf16.msra.mxu0 %v133
  %158 = vmatprep.subr.bf16.mxu0 0
  %159 = vmatpush1.bf16.msra.mxu0 %v132
  %160 = vmatprep.subr.bf16.mxu0 0
  %161 = vmatpush2.bf16.msra.mxu0 0
  %162 = vmatprep.subr.bf16.mxu0 0
  %163 = vmatpush2.bf16.msra.mxu0 0
  %164 = vmatprep.subr.bf16.mxu0 0
  %165 = vmatpush2.bf16.msra.mxu0 0
  %166 = vmatprep.subr.bf16.mxu0 0
  %167 = vmatpush2.bf16.msra.mxu0 0
  %168 = vmatprep.subr.bf16.mxu0 0
  %169 = vmatpush2.bf16.msra.mxu0 0
  %170 = vmatprep.subr.bf16.mxu0 0
  %171 = vmatpush2.bf16.msra.mxu0 0
  %172 = vmatprep.subr.bf16.mxu0 0
  %173 = vmatpush2.bf16.msra.mxu0 0
  %174 = vmatprep.subr.bf16.mxu0 0
  %175 = vmatpush2.bf16.msra.mxu0 0
  %176 = vmatprep.mubr.bf16.mxu0 0
  %177 = vmatmul.mubr.bf16.gmra.mxu0 %v142
  %v178 = vpop.f32.mrf.mxu0
  %v179 = vadd.f32 %v114, %v178
  %v180 = vpop.f32.mrf.mxu0
  %v181 = vpop.f32.mrf.mxu0
  %v182 = vadd.f32 %v114, %v181
  %v183 = vpop.f32.mrf.mxu0
  %184 = vdwg.mxu0
  %v185 = vadd.f32 %v27, %v179
  %v186 = vadd.f32 %v28, %v182
  %v187 = vsel %vm53, %v185, 0.0
  %188 = vadd.xlane.f32.xlu0 %v187
  %v189 = vpop.xlane.xlu0 %188
  %vm190 = vcmask 257024
  %v191 = vsel %vm190, %v186, 0.0
  %192 = vadd.xlane.f32.xlu0 %v191
  %v193 = vpop.xlane.xlu0 %192
  %v194 = vrcp.pop 32.0
  %v195 = vmul.f32 %v189, %v194
  %v196 = vmul.f32 %v193, %v194
  %v197 = vsub.f32 %v185, %v195
  %v198 = vsub.f32 %v186, %v196
  %v199 = vmul.f32 %v197, %v197
  %v200 = vmul.f32 %v198, %v198
  %v201 = vsel %vm53, %v199, 0.0
  %202 = vadd.xlane.f32.xlu0 %v201
  %v203 = vpop.xlane.xlu0 %202
  %v204 = vsel %vm190, %v200, 0.0
  %205 = vadd.xlane.f32.xlu0 %v204
  %v206 = vpop.xlane.xlu0 %205
  %v207 = vmul.f32 %v203, %v194
  %v208 = vmul.f32 %v206, %v194
  %v209 = vadd.f32 %v207, 1e-05
  %v210 = vadd.f32 %v208, 1e-05
  %v211 = vrsqrt.pop %v209
  %v212 = vrsqrt.pop %v210
  %v213 = vmul.f32 %v197, %v211
  %v214 = vmul.f32 %v198, %v212
  %v215 = vld [vmem:[%s5] sm:$0x1]
  %v217 = vlaneseq
  %v218 = vshrl.u32 %v217, 7
  %v219 = vsub.s32 0, %v218
  %v220 = vrot.slane %v215, %v219
  %v222 = vmul.f32 %v213, %v220
  %v223 = vmul.f32 %v214, %v220
  %v224 = vld [vmem:[%s6] sm:$0x1]
  %v226 = vlaneseq
  %v227 = vshrl.u32 %v226, 7
  %v228 = vsub.s32 0, %v227
  %v229 = vrot.slane %v224, %v228
  %v231 = vadd.f32 %v222, %v229
  %v232 = vadd.f32 %v223, %v229
  %233 = vst.msk [vmem:[%s7] sm:$0xff] %vm53, %v231
  %234 = vst.msk [vmem:[%s7 + $0x8] sm:$0xf] %vm190, %v232
  // Predicated region
  $region30: #{fwd.19} parent=0 // pred_check
    _
  $region31: #{fwd.19} parent=0 // pred_check_branch
    %236 = sbr.rel (0) target = $region33
  $region32: #{fwd.19} parent=0 // pred_region
    _
  $region33: #{fwd.19} parent=0 // pred_fallthru
    _
  // Predicated region
  $region34: #{fwd.19} parent=0 // pred_check
    _
  $region35: #{fwd.19} parent=0 // pred_check_branch
    %238 = sbr.rel (0) target = $region37
  $region36: #{fwd.19} parent=0 // pred_region
    _
  $region37: #{fwd.19} parent=0 // pred_fallthru
    _

// kernel: fwd.23
$region0: #{fwd.23}
  #allocation0 [shape = 'u32[]', space=smem, size = 0x4, offset = 0x4, fixed_abs, tag = 'smem constant byte address 0x4 - core index']
  #allocation1 [shape = 'u32[144,128]{1,0:T(1,128)}', space=vmem, size = 0x12000, scoped, tag = 'internal scratch']
  %s0 = inlined_call_operand.vmem [shape: f32[12,32], index: 0, kind: input, shape index: {}]
  %s1 = inlined_call_operand.vmem [shape: f32[1,32], index: 1, kind: input, shape index: {}]
  %s2 = inlined_call_operand.vmem [shape: f32[1,32], index: 2, kind: input, shape index: {}]
  %s3 = inlined_call_operand.vmem [shape: bf16[32,128], index: 3, kind: input, shape index: {}]
  %s4 = inlined_call_operand.vmem [shape: f32[1,128], index: 4, kind: input, shape index: {}]
  %s5 = inlined_call_operand.vmem [shape: f32[12,128], index: 5, kind: output, shape index: {}]
  %s6 = sld [smem:[#allocation0]]
  $region30: #{fwd.23} parent=0
    _
  %s8 = ssub.s32 1, %s6
  %s9 = scalar_select 0, %s8, %s6
  // Predicated region
  $region2: #{fwd.23} parent=0 // pred_check
    _
  $region3: #{fwd.23} parent=0 // pred_check_branch
    %11 = sbr.rel (0) target = $region5
  $region4: #{fwd.23} parent=0 // pred_region
    _
  $region5: #{fwd.23} parent=0 // pred_fallthru
    _
  // Predicated region
  $region6: #{fwd.23} parent=0 // pred_check
    _
  $region7: #{fwd.23} parent=0 // pred_check_branch
    %13 = sbr.rel (0) target = $region9
  $region8: #{fwd.23} parent=0 // pred_region
    _
  $region9: #{fwd.23} parent=0 // pred_fallthru
    _
  // Predicated region
  $region10: #{fwd.23} parent=0 // pred_check
    _
  $region11: #{fwd.23} parent=0 // pred_check_branch
    %15 = sbr.rel (0) target = $region13
  $region12: #{fwd.23} parent=0 // pred_region
    _
  $region13: #{fwd.23} parent=0 // pred_fallthru
    _
  // Predicated region
  $region14: #{fwd.23} parent=0 // pred_check
    _
  $region15: #{fwd.23} parent=0 // pred_check_branch
    %17 = sbr.rel (0) target = $region17
  $region16: #{fwd.23} parent=0 // pred_region
    _
  $region17: #{fwd.23} parent=0 // pred_fallthru
    _
  // Predicated region
  $region18: #{fwd.23} parent=0 // pred_check
    _
  $region19: #{fwd.23} parent=0 // pred_check_branch
    %19 = sbr.rel (0) target = $region21
  $region20: #{fwd.23} parent=0 // pred_region
    _
  $region21: #{fwd.23} parent=0 // pred_fallthru
    _
  %v21 = vld [vmem:[%s0] sm:$0xff]
  %v22 = vld [vmem:[%s0 + $0x8] sm:$0xf]
  %vm23 = vcmask 261120
  %v24 = vsel %vm23, %v21, 0.0
  %25 = vadd.xlane.f32.xlu0 %v24
  %v26 = vpop.xlane.xlu0 %25
  %vm27 = vcmask 257024
  %v28 = vsel %vm27, %v22, 0.0
  %29 = vadd.xlane.f32.xlu0 %v28
  %v30 = vpop.xlane.xlu0 %29
  %v31 = vrcp.pop 32.0
  %v32 = vmul.f32 %v26, %v31
  %v33 = vmul.f32 %v30, %v31
  %v34 = vsub.f32 %v21, %v32
  %v35 = vsub.f32 %v22, %v33
  %v36 = vmul.f32 %v34, %v34
  %v37 = vmul.f32 %v35, %v35
  %v38 = vsel %vm23, %v36, 0.0
  %39 = vadd.xlane.f32.xlu0 %v38
  %v40 = vpop.xlane.xlu0 %39
  %v41 = vsel %vm27, %v37, 0.0
  %42 = vadd.xlane.f32.xlu0 %v41
  %v43 = vpop.xlane.xlu0 %42
  %v44 = vmul.f32 %v40, %v31
  %v45 = vmul.f32 %v43, %v31
  %v46 = vadd.f32 %v44, 1e-05
  %v47 = vadd.f32 %v45, 1e-05
  %v48 = vrsqrt.pop %v46
  %v49 = vrsqrt.pop %v47
  %v50 = vmul.f32 %v34, %v48
  %v51 = vmul.f32 %v35, %v49
  %v52 = vld [vmem:[%s1] sm:$0x1]
  %v54 = vlaneseq
  %v55 = vshrl.u32 %v54, 7
  %v56 = vsub.s32 0, %v55
  %v57 = vrot.slane %v52, %v56
  %v59 = vmul.f32 %v50, %v57
  %v60 = vmul.f32 %v51, %v57
  %v61 = vld [vmem:[%s2] sm:$0x1]
  %v63 = vlaneseq
  %v64 = vshrl.u32 %v63, 7
  %v65 = vsub.s32 0, %v64
  %v66 = vrot.slane %v61, %v65
  %v68 = vadd.f32 %v59, %v66
  %v69 = vadd.f32 %v60, %v66
  %v70 = vld [vmem:[%s3] sm:$0xf]
  %v71 = vld [vmem:[%s3 + $0x4] sm:$0xf]
  %v72 = vld [vmem:[%s3 + $0x8] sm:$0xf]
  %v73 = vld [vmem:[%s3 + $0xc] sm:$0xf]
  %v74 = vpack.c.bf16 %v69, %v68
  %v75 = vld [vmem:[%s4] sm:$0x1]
  %v77 = vlaneseq
  %v78 = vshrl.u32 %v77, 7
  %v79 = vsub.s32 0, %v78
  %v80 = vrot.slane %v75, %v79
  %v86 = vunpack.c.l.b16 %v70
  %v87 = vunpack.c.l.b16 %v71
  %v88 = vunpack.c.l.b16 %v72
  %v89 = vunpack.c.l.b16 %v73
  %v90 = vpack.c.b16 %v87, %v86
  %v91 = vpack.c.b16 %v89, %v88
  %v95 = vsel %vm23, %v74, 0
  %97 = vmatprep.subr.bf16.mxu0 0
  %98 = vmatpush1.bf16.msra.mxu0 0
  %99 = vmatprep.subr.bf16.mxu0 0
  %100 = vmatpush1.bf16.msra.mxu0 0
  %101 = vmatprep.subr.bf16.mxu0 0
  %102 = vmatpush1.bf16.msra.mxu0 0
  %103 = vmatprep.subr.bf16.mxu0 0
  %104 = vmatpush1.bf16.msra.mxu0 0
  %105 = vmatprep.subr.bf16.mxu0 0
  %106 = vmatpush1.bf16.msra.mxu0 0
  %107 = vmatprep.subr.bf16.mxu0 0
  %108 = vmatpush1.bf16.msra.mxu0 0
  %109 = vmatprep.subr.bf16.mxu0 0
  %110 = vmatpush1.bf16.msra.mxu0 %v91
  %111 = vmatprep.subr.bf16.mxu0 0
  %112 = vmatpush1.bf16.msra.mxu0 %v90
  %113 = vmatprep.subr.bf16.mxu0 0
  %114 = vmatpush2.bf16.msra.mxu0 0
  %115 = vmatprep.subr.bf16.mxu0 0
  %116 = vmatpush2.bf16.msra.mxu0 0
  %117 = vmatprep.subr.bf16.mxu0 0
  %118 = vmatpush2.bf16.msra.mxu0 0
  %119 = vmatprep.subr.bf16.mxu0 0
  %120 = vmatpush2.bf16.msra.mxu0 0
  %121 = vmatprep.subr.bf16.mxu0 0
  %122 = vmatpush2.bf16.msra.mxu0 0
  %123 = vmatprep.subr.bf16.mxu0 0
  %124 = vmatpush2.bf16.msra.mxu0 0
  %125 = vmatprep.subr.bf16.mxu0 0
  %126 = vmatpush2.bf16.msra.mxu0 0
  %127 = vmatprep.subr.bf16.mxu0 0
  %128 = vmatpush2.bf16.msra.mxu0 0
  %129 = vmatprep.mubr.bf16.mxu0 0
  %130 = vmatmul.mubr.bf16.gmra.mxu0 %v95
  %v131 = vpop.f32.mrf.mxu0
  %v132 = vadd.f32 %v80, %v131
  %v133 = vpop.f32.mrf.mxu0
  %v134 = vpop.f32.mrf.mxu0
  %v135 = vadd.f32 %v80, %v134
  %v136 = vpop.f32.mrf.mxu0
  %137 = vdwg.mxu0
  %138 = vst [vmem:[%s5] sm:$0xff] %v132
  %139 = vst [vmem:[%s5 + $0x8] sm:$0xf] %v135
  // Predicated region
  $region22: #{fwd.23} parent=0 // pred_check
    _
  $region23: #{fwd.23} parent=0 // pred_check_branch
    %141 = sbr.rel (0) target = $region25
  $region24: #{fwd.23} parent=0 // pred_region
    _
  $region25: #{fwd.23} parent=0 // pred_fallthru
    _
  // Predicated region
  $region26: #{fwd.23} parent=0 // pred_check
    _
  $region27: #{fwd.23} parent=0 // pred_check_branch
    %143 = sbr.rel (0) target = $region29
  $region28: #{fwd.23} parent=0 // pred_region
    _
  $region29: #{fwd.23} parent=0 // pred_fallthru
    _

// kernel: fwd.18
$region0: #{fwd.18}
  #allocation0 [shape = 'u32[]', space=smem, size = 0x4, offset = 0x4, fixed_abs, tag = 'smem constant byte address 0x4 - core index']
  #allocation1 [shape = 'u32[144,128]{1,0:T(1,128)}', space=vmem, size = 0x12000, scoped, tag = 'internal scratch']
  #allocation2 [shape = 'f32[6,32]{1,0:T(8,128)}', space=vmem, size = 0x1000, scoped, tag = 'scratch operand']
  %s0 = inlined_call_operand.vmem [shape: f32[2,6,32], index: 0, kind: input, shape index: {}]
  %s1 = inlined_call_operand.vmem [shape: f32[2,8,32], index: 1, kind: input, shape index: {}]
  %s2 = inlined_call_operand.vmem [shape: bf16[32,96], index: 2, kind: input, shape index: {}]
  %s3 = inlined_call_operand.vmem [shape: f32[1,96], index: 3, kind: input, shape index: {}]
  %s4 = inlined_call_operand.vmem [shape: bf16[32,32], index: 4, kind: input, shape index: {}]
  %s5 = inlined_call_operand.vmem [shape: f32[1,32], index: 5, kind: input, shape index: {}]
  %s6 = inlined_call_operand.vmem [shape: f32[6,8], index: 6, kind: input, shape index: {}]
  %s7 = inlined_call_operand.vmem [shape: f32[2,1,8], index: 7, kind: input, shape index: {}]
  %s8 = inlined_call_operand.vmem [shape: f32[1,32], index: 8, kind: input, shape index: {}]
  %s9 = inlined_call_operand.vmem [shape: f32[1,32], index: 9, kind: input, shape index: {}]
  %s10 = inlined_call_operand.vmem [shape: f32[2,6,32], index: 10, kind: output, shape index: {}]
  %s11 = sld [smem:[#allocation0]]
  $region73: #{fwd.18} parent=0
    _
  %s13 = ssub.s32 1, %s11
  %s14 = scalar_select 0, %s13, %s11
  loop: start=0, step=1, limit=4
  $region2: #{fwd.18} parent=0 // loop_pre_header
    _
  $region3: #{fwd.18} parent=0 // loop_header
    %s16 = sphi 0, %s20
    %p17 = scmp.ge.s32.totalorder %s16, 4
    %s26 = sphi 0, %s28
    %s29 = sphi 0, %s26
    %s30 = sphi 0, %s29
    %s46 = sphi 0, %s30
    %s52 = sphi 0, %s54
    %s55 = sphi 0, %s52
    %s56 = sphi 0, %s55
    %s72 = sphi 0, %s56
    %s76 = sphi 0, %s76
    %s78 = sphi 0, %s76
    %s79 = sphi 0, %s78
    %s93 = sphi 0, %s79
    %s97 = sphi 0, %s97
    %s99 = sphi 0, %s97
    %s100 = sphi 0, %s99
    %s114 = sphi 0, %s100
    %s118 = sphi 0, %s118
    %s120 = sphi 0, %s118
    %s121 = sphi 0, %s120
    %s135 = sphi 0, %s121
    %s139 = sphi 0, %s139
    %s141 = sphi 0, %s139
    %s142 = sphi 0, %s141
    %s156 = sphi 0, %s142
    %s160 = sphi 0, %s160
    %s162 = sphi 0, %s160
    %s163 = sphi 0, %s162
    %s177 = sphi 0, %s163
    %s183 = sphi 0, %s185
    %s186 = sphi 0, %s183
    %s187 = sphi 0, %s186
    %s203 = sphi 0, %s187
    %s207 = sphi 0, %s207
    %s209 = sphi 0, %s207
    %s210 = sphi 0, %s209
    %s224 = sphi 0, %s210
    %s228 = sphi 0, %s228
    %s230 = sphi 0, %s228
    %s231 = sphi 0, %s230
    %s245 = sphi 0, %s231
    %s251 = sphi 0, %s253
    %s254 = sphi 0, %s251
    %s255 = sphi 0, %s254
    %s271 = sphi 0, %s255
  $region4: #{fwd.18} parent=0 // loop_header_branch
    %19 = sbr.rel (%p17) target = $region8
  $region5: #{fwd.18} parent=0 // loop_body
    %s21 = ssub.s32 %s16, 1
    %s22 = ssub.s32 %s16, 2
    %s23 = sadd.s32 %s16, 1
    %s24 = ssub.s32 %s16, %s23
    %p25 = scmp.eq.s32.totalorder %s24, 0
    %s27 = sadd.s32 %s26, 1
    %s28 = scalar_select %p25, %s26, %s27
    %p31 = pneg %p25
    %p32 = scmp.eq.s32.totalorder %s16, 1
    %p33 = por %p31, %p32
    %p34 = scmp.ne.s32.totalorder %s26, %s29
    %p35 = scmp.eq.s32.totalorder %s16, 0
    %p36 = por %p34, %p35
    %p37 = scmp.ne.s32.totalorder %s26, %s29
    %p38 = scmp.eq.s32.totalorder %s21, 1
    %p39 = por %p37, %p38
    %p40 = scmp.ne.s32.totalorder %s29, %s30
    %p41 = scmp.eq.s32.totalorder %s21, 0
    %p42 = por %p40, %p41
    %p43 = scmp.ne.s32.totalorder %s29, %s30
    %p44 = scmp.eq.s32.totalorder %s22, 1
    %p45 = por %p43, %p44
    %p47 = scmp.ne.s32.totalorder %s30, %s46
    %p48 = scmp.eq.s32.totalorder %s22, 0
    %p49 = por %p47, %p48
    %s50 = ssub.s32 %s16, %s23
    %p51 = scmp.eq.s32.totalorder %s50, 0
    %s53 = sadd.s32 %s52, 1
    %s54 = scalar_select %p51, %s52, %s53
    %p57 = pneg %p51
    %p58 = scmp.eq.s32.totalorder %s16, 1
    %p59 = por %p57, %p58
    %p60 = scmp.ne.s32.totalorder %s52, %s55
    %p61 = scmp.eq.s32.totalorder %s16, 0
    %p62 = por %p60, %p61
    %p63 = scmp.ne.s32.totalorder %s52, %s55
    %p64 = scmp.eq.s32.totalorder %s21, 1
    %p65 = por %p63, %p64
    %p66 = scmp.ne.s32.totalorder %s55, %s56
    %p67 = scmp.eq.s32.totalorder %s21, 0
    %p68 = por %p66, %p67
    %p69 = scmp.ne.s32.totalorder %s55, %s56
    %p70 = scmp.eq.s32.totalorder %s22, 1
    %p71 = por %p69, %p70
    %p73 = scmp.ne.s32.totalorder %s56, %s72
    %p74 = scmp.eq.s32.totalorder %s22, 0
    %p75 = por %p73, %p74
    %s77 = sadd.s32 %s76, 1
    %p80 = scmp.eq.s32.totalorder %s16, 1
    %p81 = scmp.ne.s32.totalorder %s76, %s78
    %p82 = scmp.eq.s32.totalorder %s16, 0
    %p83 = por %p81, %p82
    %p84 = scmp.ne.s32.totalorder %s76, %s78
    %p85 = scmp.eq.s32.totalorder %s21, 1
    %p86 = por %p84, %p85
    %p87 = scmp.ne.s32.totalorder %s78, %s79
    %p88 = scmp.eq.s32.totalorder %s21, 0
    %p89 = por %p87, %p88
    %p90 = scmp.ne.s32.totalorder %s78, %s79
    %p91 = scmp.eq.s32.totalorder %s22, 1
    %p92 = por %p90, %p91
    %p94 = scmp.ne.s32.totalorder %s79, %s93
    %p95 = scmp.eq.s32.totalorder %s22, 0
    %p96 = por %p94, %p95
    %s98 = sadd.s32 %s97, 1
    %p101 = scmp.eq.s32.totalorder %s16, 1
    %p102 = scmp.ne.s32.totalorder %s97, %s99
    %p103 = scmp.eq.s32.totalorder %s16, 0
    %p104 = por %p102, %p103
    %p105 = scmp.ne.s32.totalorder %s97, %s99
    %p106 = scmp.eq.s32.totalorder %s21, 1
    %p107 = por %p105, %p106
    %p108 = scmp.ne.s32.totalorder %s99, %s100
    %p109 = scmp.eq.s32.totalorder %s21, 0
    %p110 = por %p108, %p109
    %p111 = scmp.ne.s32.totalorder %s99, %s100
    %p112 = scmp.eq.s32.totalorder %s22, 1
    %p113 = por %p111, %p112
    %p115 = scmp.ne.s32.totalorder %s100, %s114
    %p116 = scmp.eq.s32.totalorder %s22, 0
    %p117 = por %p115, %p116
    %s119 = sadd.s32 %s118, 1
    %p122 = scmp.eq.s32.totalorder %s16, 1
    %p123 = scmp.ne.s32.totalorder %s118, %s120
    %p124 = scmp.eq.s32.totalorder %s16, 0
    %p125 = por %p123, %p124
    %p126 = scmp.ne.s32.totalorder %s118, %s120
    %p127 = scmp.eq.s32.totalorder %s21, 1
    %p128 = por %p126, %p127
    %p129 = scmp.ne.s32.totalorder %s120, %s121
    %p130 = scmp.eq.s32.totalorder %s21, 0
    %p131 = por %p129, %p130
    %p132 = scmp.ne.s32.totalorder %s120, %s121
    %p133 = scmp.eq.s32.totalorder %s22, 1
    %p134 = por %p132, %p133
    %p136 = scmp.ne.s32.totalorder %s121, %s135
    %p137 = scmp.eq.s32.totalorder %s22, 0
    %p138 = por %p136, %p137
    %s140 = sadd.s32 %s139, 1
    %p143 = scmp.eq.s32.totalorder %s16, 1
    %p144 = scmp.ne.s32.totalorder %s139, %s141
    %p145 = scmp.eq.s32.totalorder %s16, 0
    %p146 = por %p144, %p145
    %p147 = scmp.ne.s32.totalorder %s139, %s141
    %p148 = scmp.eq.s32.totalorder %s21, 1
    %p149 = por %p147, %p148
    %p150 = scmp.ne.s32.totalorder %s141, %s142
    %p151 = scmp.eq.s32.totalorder %s21, 0
    %p152 = por %p150, %p151
    %p153 = scmp.ne.s32.totalorder %s141, %s142
    %p154 = scmp.eq.s32.totalorder %s22, 1
    %p155 = por %p153, %p154
    %p157 = scmp.ne.s32.totalorder %s142, %s156
    %p158 = scmp.eq.s32.totalorder %s22, 0
    %p159 = por %p157, %p158
    %s161 = sadd.s32 %s160, 1
    %p164 = scmp.eq.s32.totalorder %s16, 1
    %p165 = scmp.ne.s32.totalorder %s160, %s162
    %p166 = scmp.eq.s32.totalorder %s16, 0
    %p167 = por %p165, %p166
    %p168 = scmp.ne.s32.totalorder %s160, %s162
    %p169 = scmp.eq.s32.totalorder %s21, 1
    %p170 = por %p168, %p169
    %p171 = scmp.ne.s32.totalorder %s162, %s163
    %p172 = scmp.eq.s32.totalorder %s21, 0
    %p173 = por %p171, %p172
    %p174 = scmp.ne.s32.totalorder %s162, %s163
    %p175 = scmp.eq.s32.totalorder %s22, 1
    %p176 = por %p174, %p175
    %p178 = scmp.ne.s32.totalorder %s163, %s177
    %p179 = scmp.eq.s32.totalorder %s22, 0
    %p180 = por %p178, %p179
    %s181 = ssub.s32 %s16, %s23
    %p182 = scmp.eq.s32.totalorder %s181, 0
    %s184 = sadd.s32 %s183, 1
    %s185 = scalar_select %p182, %s183, %s184
    %p188 = pneg %p182
    %p189 = scmp.eq.s32.totalorder %s16, 1
    %p190 = por %p188, %p189
    %p191 = scmp.ne.s32.totalorder %s183, %s186
    %p192 = scmp.eq.s32.totalorder %s16, 0
    %p193 = por %p191, %p192
    %p194 = scmp.ne.s32.totalorder %s183, %s186
    %p195 = scmp.eq.s32.totalorder %s21, 1
    %p196 = por %p194, %p195
    %p197 = scmp.ne.s32.totalorder %s186, %s187
    %p198 = scmp.eq.s32.totalorder %s21, 0
    %p199 = por %p197, %p198
    %p200 = scmp.ne.s32.totalorder %s186, %s187
    %p201 = scmp.eq.s32.totalorder %s22, 1
    %p202 = por %p200, %p201
    %p204 = scmp.ne.s32.totalorder %s187, %s203
    %p205 = scmp.eq.s32.totalorder %s22, 0
    %p206 = por %p204, %p205
    %s208 = sadd.s32 %s207, 1
    %p211 = scmp.eq.s32.totalorder %s16, 1
    %p212 = scmp.ne.s32.totalorder %s207, %s209
    %p213 = scmp.eq.s32.totalorder %s16, 0
    %p214 = por %p212, %p213
    %p215 = scmp.ne.s32.totalorder %s207, %s209
    %p216 = scmp.eq.s32.totalorder %s21, 1
    %p217 = por %p215, %p216
    %p218 = scmp.ne.s32.totalorder %s209, %s210
    %p219 = scmp.eq.s32.totalorder %s21, 0
    %p220 = por %p218, %p219
    %p221 = scmp.ne.s32.totalorder %s209, %s210
    %p222 = scmp.eq.s32.totalorder %s22, 1
    %p223 = por %p221, %p222
    %p225 = scmp.ne.s32.totalorder %s210, %s224
    %p226 = scmp.eq.s32.totalorder %s22, 0
    %p227 = por %p225, %p226
    %s229 = sadd.s32 %s228, 1
    %p232 = scmp.eq.s32.totalorder %s16, 1
    %p233 = scmp.ne.s32.totalorder %s228, %s230
    %p234 = scmp.eq.s32.totalorder %s16, 0
    %p235 = por %p233, %p234
    %p236 = scmp.ne.s32.totalorder %s228, %s230
    %p237 = scmp.eq.s32.totalorder %s21, 1
    %p238 = por %p236, %p237
    %p239 = scmp.ne.s32.totalorder %s230, %s231
    %p240 = scmp.eq.s32.totalorder %s21, 0
    %p241 = por %p239, %p240
    %p242 = scmp.ne.s32.totalorder %s230, %s231
    %p243 = scmp.eq.s32.totalorder %s22, 1
    %p244 = por %p242, %p243
    %p246 = scmp.ne.s32.totalorder %s231, %s245
    %p247 = scmp.eq.s32.totalorder %s22, 0
    %p248 = por %p246, %p247
    %s249 = ssub.s32 %s16, %s23
    %p250 = scmp.eq.s32.totalorder %s249, 0
    %s252 = sadd.s32 %s251, 1
    %s253 = scalar_select %p250, %s251, %s252
    %p256 = pneg %p250
    %p257 = scmp.eq.s32.totalorder %s16, 1
    %p258 = por %p256, %p257
    %p259 = scmp.ne.s32.totalorder %s251, %s254
    %p260 = scmp.eq.s32.totalorder %s16, 0
    %p261 = por %p259, %p260
    %p262 = scmp.ne.s32.totalorder %s251, %s254
    %p263 = scmp.eq.s32.totalorder %s21, 1
    %p264 = por %p262, %p263
    %p265 = scmp.ne.s32.totalorder %s254, %s255
    %p266 = scmp.eq.s32.totalorder %s21, 0
    %p267 = por %p265, %p266
    %p268 = scmp.ne.s32.totalorder %s254, %s255
    %p269 = scmp.eq.s32.totalorder %s22, 1
    %p270 = por %p268, %p269
    %p272 = scmp.ne.s32.totalorder %s255, %s271
    %p273 = scmp.eq.s32.totalorder %s22, 0
    %p274 = por %p272, %p273
    %p275 = scmp.le.s32.totalorder 1, %s16
    %p276 = scmp.lt.s32.totalorder %s16, 3
    %p277 = pnand %p275, %p276
    %p278 = pneg %p277
    // Predicated region
    $region9: #{fwd.18} parent=5 // pred_check
      _
    $region10: #{fwd.18} parent=5 // pred_check_branch
      %280 = sbr.rel (%p277) target = $region12
    $region11: #{fwd.18} parent=5 // pred_region
      %s281 = ssub.s32 %s16, 1
      // Predicated region
      $region13: #{fwd.18} parent=11 // pred_check
        %p282 = pneg %p89
      $region14: #{fwd.18} parent=11 // pred_check_branch
        %284 = sbr.rel (%p282) target = $region16
      $region15: #{fwd.18} parent=11 // pred_region
        _
      $region16: #{fwd.18} parent=11 // pred_fallthru
        _
      // Predicated region
      $region17: #{fwd.18} parent=11 // pred_check
        %p285 = pneg %p110
      $region18: #{fwd.18} parent=11 // pred_check_branch
        %287 = sbr.rel (%p285) target = $region20
      $region19: #{fwd.18} parent=11 // pred_region
        _
      $region20: #{fwd.18} parent=11 // pred_fallthru
        _
      // Predicated region
      $region21: #{fwd.18} parent=11 // pred_check
        %p288 = pneg %p131
      $region22: #{fwd.18} parent=11 // pred_check_branch
        %290 = sbr.rel (%p288) target = $region24
      $region23: #{fwd.18} parent=11 // pred_region
        _
      $region24: #{fwd.18} parent=11 // pred_fallthru
        _
      // Predicated region
      $region25: #{fwd.18} parent=11 // pred_check
        %p291 = pneg %p152
      $region26: #{fwd.18} parent=11 // pred_check_branch
        %293 = sbr.rel (%p291) target = $region28
      $region27: #{fwd.18} parent=11 // pred_region
        _
      $region28: #{fwd.18} parent=11 // pred_fallthru
        _
      // Predicated region
      $region29: #{fwd.18} parent=11 // pred_check
        %p294 = pneg %p173
      $region30: #{fwd.18} parent=11 // pred_check_branch
        %296 = sbr.rel (%p294) target = $region32
      $region31: #{fwd.18} parent=11 // pred_region
        _
      $region32: #{fwd.18} parent=11 // pred_fallthru
        _
      // Predicated region
      $region33: #{fwd.18} parent=11 // pred_check
        %p297 = pneg %p220
      $region34: #{fwd.18} parent=11 // pred_check_branch
        %299 = sbr.rel (%p297) target = $region36
      $region35: #{fwd.18} parent=11 // pred_region
        _
      $region36: #{fwd.18} parent=11 // pred_fallthru
        _
      // Predicated region
      $region37: #{fwd.18} parent=11 // pred_check
        %p300 = pneg %p241
      $region38: #{fwd.18} parent=11 // pred_check_branch
        %302 = sbr.rel (%p300) target = $region40
      $region39: #{fwd.18} parent=11 // pred_region
        _
      $region40: #{fwd.18} parent=11 // pred_fallthru
        _
    $region12: #{fwd.18} parent=5 // pred_fallthru
      _
    %p303 = scmp.lt.s32.totalorder %s16, 2
    // Predicated region
    $region41: #{fwd.18} parent=5 // pred_check
      %p304 = pneg %p303
    $region42: #{fwd.18} parent=5 // pred_check_branch
      %306 = sbr.rel (%p304) target = $region44
    $region43: #{fwd.18} parent=5 // pred_region
      // Predicated region
      $region45: #{fwd.18} parent=43 // pred_check
        %p307 = pneg %p36
      $region46: #{fwd.18} parent=43 // pred_check_branch
        %309 = sbr.rel (%p307) target = $region48
      $region47: #{fwd.18} parent=43 // pred_region
        %p310 = scmp.lt.s32.totalorder %s16, 1
        %s311 = scalar_select %p310, %s16, 1
        %s312 = smul.addr %s311, 8
        %s313 = scalar_lea.vmem %s0, %s312
      $region48: #{fwd.18} parent=43 // pred_fallthru
        _
      // Predicated region
      $region49: #{fwd.18} parent=43 // pred_check
        %p314 = pneg %p62
      $region50: #{fwd.18} parent=43 // pred_check_branch
        %316 = sbr.rel (%p314) target = $region52
      $region51: #{fwd.18} parent=43 // pred_region
        %p317 = scmp.lt.s32.totalorder %s16, 1
        %s318 = scalar_select %p317, %s16, 1
        %s319 = smul.addr %s318, 8
        %s320 = scalar_lea.vmem %s1, %s319
      $region52: #{fwd.18} parent=43 // pred_fallthru
        _
      // Predicated region
      $region53: #{fwd.18} parent=43 // pred_check
        %p321 = pneg %p193
      $region54: #{fwd.18} parent=43 // pred_check_branch
        %323 = sbr.rel (%p321) target = $region56
      $region55: #{fwd.18} parent=43 // pred_region
        %p324 = scmp.lt.s32.totalorder %s16, 1
        %s325 = scalar_select %p324, %s16, 1
        %s326 = scalar_lea.vmem %s7, %s325
      $region56: #{fwd.18} parent=43 // pred_fallthru
        _
    $region44: #{fwd.18} parent=5 // pred_fallthru
      _
    %p327 = scmp.le.s32.totalorder 1, %s16
    %p328 = scmp.lt.s32.totalorder %s16, 3
    %p329 = pnand %p327, %p328
    %p330 = pneg %p329
    // Predicated region
    $region57: #{fwd.18} parent=5 // pred_check
      _
    $region58: #{fwd.18} parent=5 // pred_check_branch
      %332 = sbr.rel (%p329) target = $region60
    $region59: #{fwd.18} parent=5 // pred_region
      %s333 = ssub.s32 %s16, 1
      %p334 = scmp.lt.s32.totalorder %s21, 1
      %s335 = scalar_select %p334, %s21, 1
      %s336 = smul.addr %s335, 8
      %s337 = scalar_lea.vmem %s0, %s336
      %p338 = pneg %p42
      %p339 = pneg %p39
      %p340 = scmp.lt.s32.totalorder %s21, 1
      %s341 = scalar_select %p340, %s21, 1
      %s342 = smul.addr %s341, 8
      %s343 = scalar_lea.vmem %s1, %s342
      %p344 = pneg %p68
      %p345 = pneg %p65
      %p346 = pneg %p89
      %p347 = pneg %p86
      %p348 = pneg %p110
      %p349 = pneg %p107
      %p350 = pneg %p131
      %p351 = pneg %p128
      %p352 = pneg %p152
      %p353 = pneg %p149
      %p354 = pneg %p173
      %p355 = pneg %p170
      %p356 = scmp.lt.s32.totalorder %s21, 1
      %s357 = scalar_select %p356, %s21, 1
      %s358 = scalar_lea.vmem %s7, %s357
      %p359 = pneg %p199
      %p360 = pneg %p196
      %p361 = pneg %p220
      %p362 = pneg %p217
      %p363 = pneg %p241
      %p364 = pneg %p238
      %p365 = pneg %p267
      %p366 = pneg %p264
      %p367 = scmp.lt.s32.totalorder %s21, 1
      %s368 = scalar_select %p367, %s21, 1
      %s369 = smul.addr %s368, 8
      %s370 = scalar_lea.vmem %s10, %s369
      %p371 = scmp.lt.s32.totalorder %s21, 1
      %s372 = scalar_select %p371, %s21, 1
      %s373 = smul.addr %s372, 8
      %s374 = scalar_lea.vmem %s0, %s373
      %p375 = scmp.lt.s32.totalorder %s21, 1
      %s376 = scalar_select %p375, %s21, 1
      %s377 = smul.addr %s376, 8
      %s378 = scalar_lea.vmem %s1, %s377
      %p379 = scmp.lt.s32.totalorder %s21, 1
      %s380 = scalar_select %p379, %s21, 1
      %s381 = scalar_lea.vmem %s7, %s380
      %p382 = scmp.lt.s32.totalorder %s21, 1
      %s383 = scalar_select %p382, %s21, 1
      %s384 = smul.addr %s383, 8
      %s385 = scalar_lea.vmem %s10, %s384
      %v387 = vld [vmem:[%s374] sm:$0x3f]
      %v388 = vld [vmem:[%s2] sm:$0xf]
      %v389 = vld [vmem:[%s2 + $0x4] sm:$0xf]
      %v390 = vld [vmem:[%s2 + $0x8] sm:$0xf]
      %v391 = vld [vmem:[%s2 + $0xc] sm:$0xf]
      %v392 = vld [vmem:[%s3] sm:$0x1]
      %v393 = vld [vmem:[%s378] sm:$0xff]
      %v394 = vpack.c.bf16 %v387, %v387
      %v396 = vlaneseq
      %v397 = vshrl.u32 %v396, 7
      %v398 = vsub.s32 0, %v397
      %v399 = vrot.slane %v392, %v398
      %v405 = vunpack.c.l.b16 %v388
      %v406 = vunpack.c.l.b16 %v389
      %v407 = vunpack.c.l.b16 %v390
      %v408 = vunpack.c.l.b16 %v391
      %v409 = vpack.c.b16 %v406, %v405
      %v410 = vpack.c.b16 %v408, %v407
      %vm413 = vcmask 261120
      %v415 = vsel %vm413, %v394, 0
      %417 = vmatprep.subr.bf16.mxu0 0
      %418 = vmatpush1.bf16.msra.mxu0 0
      %419 = vmatprep.subr.bf16.mxu0 0
      %420 = vmatpush1.bf16.msra.mxu0 0
      %421 = vmatprep.subr.bf16.mxu0 0
      %422 = vmatpush1.bf16.msra.mxu0 0
      %423 = vmatprep.subr.bf16.mxu0 0
      %424 = vmatpush1.bf16.msra.mxu0 0
      %425 = vmatprep.subr.bf16.mxu0 0
      %426 = vmatpush1.bf16.msra.mxu0 0
      %427 = vmatprep.subr.bf16.mxu0 0
      %428 = vmatpush1.bf16.msra.mxu0 0
      %429 = vmatprep.subr.bf16.mxu0 0
      %430 = vmatpush1.bf16.msra.mxu0 %v410
      %431 = vmatprep.subr.bf16.mxu0 0
      %432 = vmatpush1.bf16.msra.mxu0 %v409
      %433 = vmatprep.subr.bf16.mxu0 0
      %434 = vmatpush2.bf16.msra.mxu0 0
      %435 = vmatprep.subr.bf16.mxu0 0
      %436 = vmatpush2.bf16.msra.mxu0 0
      %437 = vmatprep.subr.bf16.mxu0 0
      %438 = vmatpush2.bf16.msra.mxu0 0
      %439 = vmatprep.subr.bf16.mxu0 0
      %440 = vmatpush2.bf16.msra.mxu0 0
      %441 = vmatprep.subr.bf16.mxu0 0
      %442 = vmatpush2.bf16.msra.mxu0 0
      %443 = vmatprep.subr.bf16.mxu0 0
      %444 = vmatpush2.bf16.msra.mxu0 0
      %445 = vmatprep.subr.bf16.mxu0 0
      %446 = vmatpush2.bf16.msra.mxu0 0
      %447 = vmatprep.subr.bf16.mxu0 0
      %448 = vmatpush2.bf16.msra.mxu0 0
      %449 = vmatprep.mubr.bf16.mxu0 0
      %450 = vmatmul.mubr.bf16.gmra.mxu0 %v415
      %v451 = vpop.f32.mrf.mxu0
      %v452 = vadd.f32 %v399, %v451
      %v453 = vpop.f32.mrf.mxu0
      %v454 = vpop.f32.mrf.mxu0
      %v455 = vpop.f32.mrf.mxu0
      %456 = vdwg.mxu0
      %v457 = vpack.c.bf16 %v393, %v393
      %458 = vrot.lane.b32.xlu0 %v409, 96
      %v459 = vpop.permute.xlu0 %458
      %460 = vrot.lane.b32.xlu0 %v410, 96
      %v461 = vpop.permute.xlu0 %460
      %464 = vrot.lane.b32.xlu0 %v399, 96
      %v465 = vpop.permute.xlu0 %464
      %v468 = vsel %vm413, %v457, 0
      %470 = vmatprep.subr.bf16.mxu0 0
      %471 = vmatpush1.bf16.msra.mxu0 0
      %472 = vmatprep.subr.bf16.mxu0 0
      %473 = vmatpush1.bf16.msra.mxu0 0
      %474 = vmatprep.subr.bf16.mxu0 0
      %475 = vmatpush1.bf16.msra.mxu0 0
      %476 = vmatprep.subr.bf16.mxu0 0
      %477 = vmatpush1.bf16.msra.mxu0 0
      %478 = vmatprep.subr.bf16.mxu0 0
      %479 = vmatpush1.bf16.msra.mxu0 0
      %480 = vmatprep.subr.bf16.mxu0 0
      %481 = vmatpush1.bf16.msra.mxu0 0
      %482 = vmatprep.subr.bf16.mxu0 0
      %483 = vmatpush1.bf16.msra.mxu0 %v461
      %484 = vmatprep.subr.bf16.mxu0 0
      %485 = vmatpush1.bf16.msra.mxu0 %v459
      %486 = vmatprep.subr.bf16.mxu0 0
      %487 = vmatpush2.bf16.msra.mxu0 0
      %488 = vmatprep.subr.bf16.mxu0 0
      %489 = vmatpush2.bf16.msra.mxu0 0
      %490 = vmatprep.subr.bf16.mxu0 0
      %491 = vmatpush2.bf16.msra.mxu0 0
      %492 = vmatprep.subr.bf16.mxu0 0
      %493 = vmatpush2.bf16.msra.mxu0 0
      %494 = vmatprep.subr.bf16.mxu0 0
      %495 = vmatpush2.bf16.msra.mxu0 0
      %496 = vmatprep.subr.bf16.mxu0 0
      %497 = vmatpush2.bf16.msra.mxu0 0
      %498 = vmatprep.subr.bf16.mxu0 0
      %499 = vmatpush2.bf16.msra.mxu0 0
      %500 = vmatprep.subr.bf16.mxu0 0
      %501 = vmatpush2.bf16.msra.mxu0 0
      %502 = vmatprep.mubr.bf16.mxu0 0
      %503 = vmatmul.mubr.bf16.gmra.mxu0 %v468
      %v504 = vpop.f32.mrf.mxu0
      %v505 = vadd.f32 %v465, %v504
      %v506 = vpop.f32.mrf.mxu0
      %v507 = vpop.f32.mrf.mxu0
      %v508 = vpop.f32.mrf.mxu0
      %509 = vdwg.mxu0
      %v510 = vld [vmem:[%s6] sm:$0x3f]
      %v511 = vld [vmem:[%s381] sm:$0x1]
      %v513 = vlaneseq
      %v514 = vshrl.u32 %v513, 7
      %v515 = vsub.s32 0, %v514
      %v516 = vrot.slane %v511, %v515
      %v518 = vadd.f32 %v510, %v516
      %v519 = vmul.f32 %v452, 0.35355338
      %v520 = vpack.c.bf16 %v519, %v519
      %v521 = vpack.c.bf16 %v505, %v505
      %vm522 = vcmask 64512
      %v524 = vsel %vm522, %v520, 0
      %v527 = vsel %vm522, %v521, 0
      %529 = vmatprep.subr.bf16.mxu0 0
      %530 = vmatpush1.bf16.xpose.msra.mxu0 0
      %531 = vmatprep.subr.bf16.mxu0 0
      %532 = vmatpush1.bf16.xpose.msra.mxu0 0
      %533 = vmatprep.subr.bf16.mxu0 0
      %534 = vmatpush1.bf16.xpose.msra.mxu0 0
      %535 = vmatprep.subr.bf16.mxu0 0
      %536 = vmatpush1.bf16.xpose.msra.mxu0 0
      %537 = vmatprep.subr.bf16.mxu0 0
      %538 = vmatpush1.bf16.xpose.msra.mxu0 0
      %539 = vmatprep.subr.bf16.mxu0 0
      %540 = vmatpush1.bf16.xpose.msra.mxu0 0
      %541 = vmatprep.subr.bf16.mxu0 0
      %542 = vmatpush1.bf16.xpose.msra.mxu0 0
      %543 = vmatprep.subr.bf16.mxu0 0
      %544 = vmatpush1.bf16.xpose.msra.mxu0 %v527
      %545 = vmatprep.subr.bf16.mxu0 0
      %546 = vmatpush2.bf16.xpose.msra.mxu0 0
      %547 = vmatprep.subr.bf16.mxu0 0
      %548 = vmatpush2.bf16.xpose.msra.mxu0 0
      %549 = vmatprep.subr.bf16.mxu0 0
      %550 = vmatpush2.bf16.xpose.msra.mxu0 0
      %551 = vmatprep.subr.bf16.mxu0 0
      %552 = vmatpush2.bf16.xpose.msra.mxu0 0
      %553 = vmatprep.subr.bf16.mxu0 0
      %554 = vmatpush2.bf16.xpose.msra.mxu0 0
      %555 = vmatprep.subr.bf16.mxu0 0
      %556 = vmatpush2.bf16.xpose.msra.mxu0 0
      %557 = vmatprep.subr.bf16.mxu0 0
      %558 = vmatpush2.bf16.xpose.msra.mxu0 0
      %559 = vmatprep.subr.bf16.mxu0 0
      %560 = vmatpush2.bf16.xpose.msra.mxu0 0
      %561 = vmatprep.mubr.bf16.mxu0 0
      %562 = vmatmul.mubr.bf16.gmra.mxu0 %v524
      %v563 = vpop.f32.mrf.mxu0
      %v564 = vadd.f32 %v518, %v563
      %v565 = vpop.f32.mrf.mxu0
      %v566 = vpop.f32.mrf.mxu0
      %v567 = vpop.f32.mrf.mxu0
      %568 = vdwg.mxu0
      %vm569 = vcmask 62464
      %v570 = vsel %vm569, %v564, -inf
      %571 = vmax.xlane.f32.xlu0 %v570
      %v572 = vpop.xlane.xlu0 %571
      %v573 = vsub.f32 %v564, %v572
      %v574 = vmul.f32 %v573, 1.442695
      %v575 = vpow.pop %v574
      %v576 = vsel %vm569, %v575, 0.0
      %577 = vadd.xlane.f32.xlu0 %v576
      %v578 = vpop.xlane.xlu0 %577
      %v579 = vrcp.pop %v578
      %v580 = vmul.f32 %v575, %v579
      %v581 = vpack.c.bf16 %v580, %v580
      %583 = vrot.lane.b32.xlu0 %v521, 96
      %v584 = vpop.permute.xlu0 %583
      %v586 = vsel %vm522, %v581, 0
      %vm588 = vcmask 1043456
      %v590 = vsel %vm588, %v584, 0
      %592 = vmatprep.subr.bf16.mxu0 0
      %593 = vmatpush1.bf16.msra.mxu0 0
      %594 = vmatprep.subr.bf16.mxu0 0
      %595 = vmatpush1.bf16.msra.mxu0 0
      %596 = vmatprep.subr.bf16.mxu0 0
      %597 = vmatpush1.bf16.msra.mxu0 0
      %598 = vmatprep.subr.bf16.mxu0 0
      %599 = vmatpush1.bf16.msra.mxu0 0
      %600 = vmatprep.subr.bf16.mxu0 0
      %601 = vmatpush1.bf16.msra.mxu0 0
      %602 = vmatprep.subr.bf16.mxu0 0
      %603 = vmatpush1.bf16.msra.mxu0 0
      %604 = vmatprep.subr.bf16.mxu0 0
      %605 = vmatpush1.bf16.msra.mxu0 0
      %606 = vmatprep.subr.bf16.mxu0 0
      %607 = vmatpush1.bf16.msra.mxu0 %v590
      %608 = vmatprep.subr.bf16.mxu0 0
      %609 = vmatpush2.bf16.msra.mxu0 0
      %610 = vmatprep.subr.bf16.mxu0 0
      %611 = vmatpush2.bf16.msra.mxu0 0
      %612 = vmatprep.subr.bf16.mxu0 0
      %613 = vmatpush2.bf16.msra.mxu0 0
      %614 = vmatprep.subr.bf16.mxu0 0
      %615 = vmatpush2.bf16.msra.mxu0 0
      %616 = vmatprep.subr.bf16.mxu0 0
      %617 = vmatpush2.bf16.msra.mxu0 0
      %618 = vmatprep.subr.bf16.mxu0 0
      %619 = vmatpush2.bf16.msra.mxu0 0
      %620 = vmatprep.subr.bf16.mxu0 0
      %621 = vmatpush2.bf16.msra.mxu0 0
      %622 = vmatprep.subr.bf16.mxu0 0
      %623 = vmatpush2.bf16.msra.mxu0 0
      %624 = vmatprep.mubr.bf16.mxu0 0
      %625 = vmatmul.mubr.bf16.gmra.mxu0 %v586
      %v626 = vpop.f32.mrf.mxu0
      %v627 = vadd.f32 0.0, %v626
      %v628 = vpop.f32.mrf.mxu0
      %v629 = vpop.f32.mrf.mxu0
      %v630 = vpop.f32.mrf.mxu0
      %631 = vdwg.mxu0
      %632 = vst.msk [vmem:[#allocation2] sm:$0x3f] %vm569, %v627
      %634 = vrot.lane.b32.xlu0 %v520, 120
      %v635 = vpop.permute.xlu0 %634
      %636 = vrot.lane.b32.xlu0 %v521, 120
      %v637 = vpop.permute.xlu0 %636
      %v639 = vsel %vm522, %v635, 0
      %v642 = vsel %vm522, %v637, 0
      %644 = vmatprep.subr.bf16.mxu0 0
      %645 = vmatpush1.bf16.xpose.msra.mxu0 0
      %646 = vmatprep.subr.bf16.mxu0 0
      %647 = vmatpush1.bf16.xpose.msra.mxu0 0
      %648 = vmatprep.subr.bf16.mxu0 0
      %649 = vmatpush1.bf16.xpose.msra.mxu0 0
      %650 = vmatprep.subr.bf16.mxu0 0
      %651 = vmatpush1.bf16.xpose.msra.mxu0 0
      %652 = vmatprep.subr.bf16.mxu0 0
      %653 = vmatpush1.bf16.xpose.msra.mxu0 0
      %654 = vmatprep.subr.bf16.mxu0 0
      %655 = vmatpush1.bf16.xpose.msra.mxu0 0
      %656 = vmatprep.subr.bf16.mxu0 0
      %657 = vmatpush1.bf16.xpose.msra.mxu0 0
      %658 = vmatprep.subr.bf16.mxu0 0
      %659 = vmatpush1.bf16.xpose.msra.mxu0 %v642
      %660 = vmatprep.subr.bf16.mxu0 0
      %661 = vmatpush2.bf16.xpose.msra.mxu0 0
      %662 = vmatprep.subr.bf16.mxu0 0
      %663 = vmatpush2.bf16.xpose.msra.mxu0 0
      %664 = vmatprep.subr.bf16.mxu0 0
      %665 = vmatpush2.bf16.xpose.msra.mxu0 0
      %666 = vmatprep.subr.bf16.mxu0 0
      %667 = vmatpush2.bf16.xpose.msra.mxu0 0
      %668 = vmatprep.subr.bf16.mxu0 0
      %669 = vmatpush2.bf16.xpose.msra.mxu0 0
      %670 = vmatprep.subr.bf16.mxu0 0
      %671 = vmatpush2.bf16.xpose.msra.mxu0 0
      %672 = vmatprep.subr.bf16.mxu0 0
      %673 = vmatpush2.bf16.xpose.msra.mxu0 0
      %674 = vmatprep.subr.bf16.mxu0 0
      %675 = vmatpush2.bf16.xpose.msra.mxu0 0
      %676 = vmatprep.mubr.bf16.mxu0 0
      %677 = vmatmul.mubr.bf16.gmra.mxu0 %v639
      %v678 = vpop.f32.mrf.mxu0
      %v679 = vadd.f32 %v518, %v678
      %v680 = vpop.f32.mrf.mxu0
      %v681 = vpop.f32.mrf.mxu0
      %v682 = vpop.f32.mrf.mxu0
      %683 = vdwg.mxu0
      %v684 = vsel %vm569, %v679, -inf
      %685 = vmax.xlane.f32.xlu0 %v684
      %v686 = vpop.xlane.xlu0 %685
      %v687 = vsub.f32 %v679, %v686
      %v688 = vmul.f32 %v687, 1.442695
      %v689 = vpow.pop %v688
      %v690 = vsel %vm569, %v689, 0.0
      %691 = vadd.xlane.f32.xlu0 %v690
      %v692 = vpop.xlane.xlu0 %691
      %v693 = vrcp.pop %v692
      %v694 = vmul.f32 %v689, %v693
      %v695 = vpack.c.bf16 %v694, %v694
      %696 = vrot.lane.b32.xlu0 %v521, 88
      %v697 = vpop.permute.xlu0 %696
      %v699 = vsel %vm522, %v695, 0
      %v702 = vsel %vm588, %v697, 0
      %704 = vmatprep.subr.bf16.mxu0 0
      %705 = vmatpush1.bf16.msra.mxu0 0
      %706 = vmatprep.subr.bf16.mxu0 0
      %707 = vmatpush1.bf16.msra.mxu0 0
      %708 = vmatprep.subr.bf16.mxu0 0
      %709 = vmatpush1.bf16.msra.mxu0 0
      %710 = vmatprep.subr.bf16.mxu0 0
      %711 = vmatpush1.bf16.msra.mxu0 0
      %712 = vmatprep.subr.bf16.mxu0 0
      %713 = vmatpush1.bf16.msra.mxu0 0
      %714 = vmatprep.subr.bf16.mxu0 0
      %715 = vmatpush1.bf16.msra.mxu0 0
      %716 = vmatprep.subr.bf16.mxu0 0
      %717 = vmatpush1.bf16.msra.mxu0 0
      %718 = vmatprep.subr.bf16.mxu0 0
      %719 = vmatpush1.bf16.msra.mxu0 %v702
      %720 = vmatprep.subr.bf16.mxu0 0
      %721 = vmatpush2.bf16.msra.mxu0 0
      %722 = vmatprep.subr.bf16.mxu0 0
      %723 = vmatpush2.bf16.msra.mxu0 0
      %724 = vmatprep.subr.bf16.mxu0 0
      %725 = vmatpush2.bf16.msra.mxu0 0
      %726 = vmatprep.subr.bf16.mxu0 0
      %727 = vmatpush2.bf16.msra.mxu0 0
      %728 = vmatprep.subr.bf16.mxu0 0
      %729 = vmatpush2.bf16.msra.mxu0 0
      %730 = vmatprep.subr.bf16.mxu0 0
      %731 = vmatpush2.bf16.msra.mxu0 0
      %732 = vmatprep.subr.bf16.mxu0 0
      %733 = vmatpush2.bf16.msra.mxu0 0
      %734 = vmatprep.subr.bf16.mxu0 0
      %735 = vmatpush2.bf16.msra.mxu0 0
      %736 = vmatprep.mubr.bf16.mxu0 0
      %737 = vmatmul.mubr.bf16.gmra.mxu0 %v699
      %v738 = vpop.f32.mrf.mxu0
      %v739 = vadd.f32 0.0, %v738
      %v740 = vpop.f32.mrf.mxu0
      %v741 = vpop.f32.mrf.mxu0
      %v742 = vpop.f32.mrf.mxu0
      %743 = vdwg.mxu0
      %745 = vrot.lane.b32.xlu0 %v739, 8
      %v746 = vpop.permute.xlu0 %745
      %vm748 = vcmask 128064
      %749 = vst.msk [vmem:[#allocation2] sm:$0x3f] %vm748, %v746
      %750 = vrot.lane.b32.xlu0 %v520, 112
      %v751 = vpop.permute.xlu0 %750
      %752 = vrot.lane.b32.xlu0 %v521, 112
      %v753 = vpop.permute.xlu0 %752
      %v755 = vsel %vm522, %v751, 0
      %v758 = vsel %vm522, %v753, 0
      %760 = vmatprep.subr.bf16.mxu0 0
      %761 = vmatpush1.bf16.xpose.msra.mxu0 0
      %762 = vmatprep.subr.bf16.mxu0 0
      %763 = vmatpush1.bf16.xpose.msra.mxu0 0
      %764 = vmatprep.subr.bf16.mxu0 0
      %765 = vmatpush1.bf16.xpose.msra.mxu0 0
      %766 = vmatprep.subr.bf16.mxu0 0
      %767 = vmatpush1.bf16.xpose.msra.mxu0 0
      %768 = vmatprep.subr.bf16.mxu0 0
      %769 = vmatpush1.bf16.xpose.msra.mxu0 0
      %770 = vmatprep.subr.bf16.mxu0 0
      %771 = vmatpush1.bf16.xpose.msra.mxu0 0
      %772 = vmatprep.subr.bf16.mxu0 0
      %773 = vmatpush1.bf16.xpose.msra.mxu0 0
      %774 = vmatprep.subr.bf16.mxu0 0
      %775 = vmatpush1.bf16.xpose.msra.mxu0 %v758
      %776 = vmatprep.subr.bf16.mxu0 0
      %777 = vmatpush2.bf16.xpose.msra.mxu0 0
      %778 = vmatprep.subr.bf16.mxu0 0
      %779 = vmatpush2.bf16.xpose.msra.mxu0 0
      %780 = vmatprep.subr.bf16.mxu0 0
      %781 = vmatpush2.bf16.xpose.msra.mxu0 0
      %782 = vmatprep.subr.bf16.mxu0 0
      %783 = vmatpush2.bf16.xpose.msra.mxu0 0
      %784 = vmatprep.subr.bf16.mxu0 0
      %785 = vmatpush2.bf16.xpose.msra.mxu0 0
      %786 = vmatprep.subr.bf16.mxu0 0
      %787 = vmatpush2.bf16.xpose.msra.mxu0 0
      %788 = vmatprep.subr.bf16.mxu0 0
      %789 = vmatpush2.bf16.xpose.msra.mxu0 0
      %790 = vmatprep.subr.bf16.mxu0 0
      %791 = vmatpush2.bf16.xpose.msra.mxu0 0
      %792 = vmatprep.mubr.bf16.mxu0 0
      %793 = vmatmul.mubr.bf16.gmra.mxu0 %v755
      %v794 = vpop.f32.mrf.mxu0
      %v795 = vadd.f32 %v518, %v794
      %v796 = vpop.f32.mrf.mxu0
      %v797 = vpop.f32.mrf.mxu0
      %v798 = vpop.f32.mrf.mxu0
      %799 = vdwg.mxu0
      %v800 = vsel %vm569, %v795, -inf
      %801 = vmax.xlane.f32.xlu0 %v800
      %v802 = vpop.xlane.xlu0 %801
      %v803 = vsub.f32 %v795, %v802
      %v804 = vmul.f32 %v803, 1.442695
      %v805 = vpow.pop %v804
      %v806 = vsel %vm569, %v805, 0.0
      %807 = vadd.xlane.f32.xlu0 %v806
      %v808 = vpop.xlane.xlu0 %807
      %v809 = vrcp.pop %v808
      %v810 = vmul.f32 %v805, %v809
      %v811 = vpack.c.bf16 %v810, %v810
      %812 = vrot.lane.b32.xlu0 %v521, 80
      %v813 = vpop.permute.xlu0 %812
      %v815 = vsel %vm522, %v811, 0
      %v818 = vsel %vm588, %v813, 0
      %820 = vmatprep.subr.bf16.mxu0 0
      %821 = vmatpush1.bf16.msra.mxu0 0
      %822 = vmatprep.subr.bf16.mxu0 0
      %823 = vmatpush1.bf16.msra.mxu0 0
      %824 = vmatprep.subr.bf16.mxu0 0
      %825 = vmatpush1.bf16.msra.mxu0 0
      %826 = vmatprep.subr.bf16.mxu0 0
      %827 = vmatpush1.bf16.msra.mxu0 0
      %828 = vmatprep.subr.bf16.mxu0 0
      %829 = vmatpush1.bf16.msra.mxu0 0
      %830 = vmatprep.subr.bf16.mxu0 0
      %831 = vmatpush1.bf16.msra.mxu0 0
      %832 = vmatprep.subr.bf16.mxu0 0
      %833 = vmatpush1.bf16.msra.mxu0 0
      %834 = vmatprep.subr.bf16.mxu0 0
      %835 = vmatpush1.bf16.msra.mxu0 %v818
      %836 = vmatprep.subr.bf16.mxu0 0
      %837 = vmatpush2.bf16.msra.mxu0 0
      %838 = vmatprep.subr.bf16.mxu0 0
      %839 = vmatpush2.bf16.msra.mxu0 0
      %840 = vmatprep.subr.bf16.mxu0 0
      %841 = vmatpush2.bf16.msra.mxu0 0
      %842 = vmatprep.subr.bf16.mxu0 0
      %843 = vmatpush2.bf16.msra.mxu0 0
      %844 = vmatprep.subr.bf16.mxu0 0
      %845 = vmatpush2.bf16.msra.mxu0 0
      %846 = vmatprep.subr.bf16.mxu0 0
      %847 = vmatpush2.bf16.msra.mxu0 0
      %848 = vmatprep.subr.bf16.mxu0 0
      %849 = vmatpush2.bf16.msra.mxu0 0
      %850 = vmatprep.subr.bf16.mxu0 0
      %851 = vmatpush2.bf16.msra.mxu0 0
      %852 = vmatprep.mubr.bf16.mxu0 0
      %853 = vmatmul.mubr.bf16.gmra.mxu0 %v815
      %v854 = vpop.f32.mrf.mxu0
      %v855 = vadd.f32 0.0, %v854
      %v856 = vpop.f32.mrf.mxu0
      %v857 = vpop.f32.mrf.mxu0
      %v858 = vpop.f32.mrf.mxu0
      %859 = vdwg.mxu0
      %861 = vrot.lane.b32.xlu0 %v855, 16
      %v862 = vpop.permute.xlu0 %861
      %vm864 = vcmask 193664
      %865 = vst.msk [vmem:[#allocation2] sm:$0x3f] %vm864, %v862
      %866 = vrot.lane.b32.xlu0 %v520, 104
      %v867 = vpop.permute.xlu0 %866
      %868 = vrot.lane.b32.xlu0 %v521, 104
      %v869 = vpop.permute.xlu0 %868
      %v871 = vsel %vm522, %v867, 0
      %v874 = vsel %vm522, %v869, 0
      %876 = vmatprep.subr.bf16.mxu0 0
      %877 = vmatpush1.bf16.xpose.msra.mxu0 0
      %878 = vmatprep.subr.bf16.mxu0 0
      %879 = vmatpush1.bf16.xpose.msra.mxu0 0
      %880 = vmatprep.subr.bf16.mxu0 0
      %881 = vmatpush1.bf16.xpose.msra.mxu0 0
      %882 = vmatprep.subr.bf16.mxu0 0
      %883 = vmatpush1.bf16.xpose.msra.mxu0 0
      %884 = vmatprep.subr.bf16.mxu0 0
      %885 = vmatpush1.bf16.xpose.msra.mxu0 0
      %886 = vmatprep.subr.bf16.mxu0 0
      %887 = vmatpush1.bf16.xpose.msra.mxu0 0
      %888 = vmatprep.subr.bf16.mxu0 0
      %889 = vmatpush1.bf16.xpose.msra.mxu0 0
      %890 = vmatprep.subr.bf16.mxu0 0
      %891 = vmatpush1.bf16.xpose.msra.mxu0 %v874
      %892 = vmatprep.subr.bf16.mxu0 0
      %893 = vmatpush2.bf16.xpose.msra.mxu0 0
      %894 = vmatprep.subr.bf16.mxu0 0
      %895 = vmatpush2.bf16.xpose.msra.mxu0 0
      %896 = vmatprep.subr.bf16.mxu0 0
      %897 = vmatpush2.bf16.xpose.msra.mxu0 0
      %898 = vmatprep.subr.bf16.mxu0 0
      %899 = vmatpush2.bf16.xpose.msra.mxu0 0
      %900 = vmatprep.subr.bf16.mxu0 0
      %901 = vmatpush2.bf16.xpose.msra.mxu0 0
      %902 = vmatprep.subr.bf16.mxu0 0
      %903 = vmatpush2.bf16.xpose.msra.mxu0 0
      %904 = vmatprep.subr.bf16.mxu0 0
      %905 = vmatpush2.bf16.xpose.msra.mxu0 0
      %906 = vmatprep.subr.bf16.mxu0 0
      %907 = vmatpush2.bf16.xpose.msra.mxu0 0
      %908 = vmatprep.mubr.bf16.mxu0 0
      %909 = vmatmul.mubr.bf16.gmra.mxu0 %v871
      %v910 = vpop.f32.mrf.mxu0
      %v911 = vadd.f32 %v518, %v910
      %v912 = vpop.f32.mrf.mxu0
      %v913 = vpop.f32.mrf.mxu0
      %v914 = vpop.f32.mrf.mxu0
      %915 = vdwg.mxu0
      %v916 = vsel %vm569, %v911, -inf
      %917 = vmax.xlane.f32.xlu0 %v916
      %v918 = vpop.xlane.xlu0 %917
      %v919 = vsub.f32 %v911, %v918
      %v920 = vmul.f32 %v919, 1.442695
      %v921 = vpow.pop %v920
      %v922 = vsel %vm569, %v921, 0.0
      %923 = vadd.xlane.f32.xlu0 %v922
      %v924 = vpop.xlane.xlu0 %923
      %v925 = vrcp.pop %v924
      %v926 = vmul.f32 %v921, %v925
      %v927 = vpack.c.bf16 %v926, %v926
      %928 = vrot.lane.b32.xlu0 %v521, 72
      %v929 = vpop.permute.xlu0 %928
      %v931 = vsel %vm522, %v927, 0
      %v934 = vsel %vm588, %v929, 0
      %936 = vmatprep.subr.bf16.mxu0 0
      %937 = vmatpush1.bf16.msra.mxu0 0
      %938 = vmatprep.subr.bf16.mxu0 0
      %939 = vmatpush1.bf16.msra.mxu0 0
      %940 = vmatprep.subr.bf16.mxu0 0
      %941 = vmatpush1.bf16.msra.mxu0 0
      %942 = vmatprep.subr.bf16.mxu0 0
      %943 = vmatpush1.bf16.msra.mxu0 0
      %944 = vmatprep.subr.bf16.mxu0 0
      %945 = vmatpush1.bf16.msra.mxu0 0
      %946 = vmatprep.subr.bf16.mxu0 0
      %947 = vmatpush1.bf16.msra.mxu0 0
      %948 = vmatprep.subr.bf16.mxu0 0
      %949 = vmatpush1.bf16.msra.mxu0 0
      %950 = vmatprep.subr.bf16.mxu0 0
      %951 = vmatpush1.bf16.msra.mxu0 %v934
      %952 = vmatprep.subr.bf16.mxu0 0
      %953 = vmatpush2.bf16.msra.mxu0 0
      %954 = vmatprep.subr.bf16.mxu0 0
      %955 = vmatpush2.bf16.msra.mxu0 0
      %956 = vmatprep.subr.bf16.mxu0 0
      %957 = vmatpush2.bf16.msra.mxu0 0
      %958 = vmatprep.subr.bf16.mxu0 0
      %959 = vmatpush2.bf16.msra.mxu0 0
      %960 = vmatprep.subr.bf16.mxu0 0
      %961 = vmatpush2.bf16.msra.mxu0 0
      %962 = vmatprep.subr.bf16.mxu0 0
      %963 = vmatpush2.bf16.msra.mxu0 0
      %964 = vmatprep.subr.bf16.mxu0 0
      %965 = vmatpush2.bf16.msra.mxu0 0
      %966 = vmatprep.subr.bf16.mxu0 0
      %967 = vmatpush2.bf16.msra.mxu0 0
      %968 = vmatprep.mubr.bf16.mxu0 0
      %969 = vmatmul.mubr.bf16.gmra.mxu0 %v931
      %v970 = vpop.f32.mrf.mxu0
      %v971 = vadd.f32 0.0, %v970
      %v972 = vpop.f32.mrf.mxu0
      %v973 = vpop.f32.mrf.mxu0
      %v974 = vpop.f32.mrf.mxu0
      %975 = vdwg.mxu0
      %977 = vrot.lane.b32.xlu0 %v971, 24
      %v978 = vpop.permute.xlu0 %977
      %vm980 = vcmask 259264
      %981 = vst.msk [vmem:[#allocation2] sm:$0x3f] %vm980, %v978
      %v982 = vld [vmem:[%s4] sm:$0xf]
      %v983 = vld [vmem:[%s4 + $0x4] sm:$0xf]
      %v984 = vld [vmem:[%s4 + $0x8] sm:$0xf]
      %v985 = vld [vmem:[%s4 + $0xc] sm:$0xf]
      %v986 = vld [vmem:[#allocation2] sm:$0x3f]
      %v987 = vpack.c.bf16 %v986, %v986
      %v988 = vld [vmem:[%s5] sm:$0x1]
      %v990 = vlaneseq
      %v991 = vshrl.u32 %v990, 7
      %v992 = vsub.s32 0, %v991
      %v993 = vrot.slane %v988, %v992
      %v999 = vunpack.c.l.b16 %v982
      %v1000 = vunpack.c.l.b16 %v983
      %v1001 = vunpack.c.l.b16 %v984
      %v1002 = vunpack.c.l.b16 %v985
      %v1003 = vpack.c.b16 %v1000, %v999
      %v1004 = vpack.c.b16 %v1002, %v1001
      %v1008 = vsel %vm413, %v987, 0
      %1010 = vmatprep.subr.bf16.mxu0 0
      %1011 = vmatpush1.bf16.msra.mxu0 0
      %1012 = vmatprep.subr.bf16.mxu0 0
      %1013 = vmatpush1.bf16.msra.mxu0 0
      %1014 = vmatprep.subr.bf16.mxu0 0
      %1015 = vmatpush1.bf16.msra.mxu0 0
      %1016 = vmatprep.subr.bf16.mxu0 0
      %1017 = vmatpush1.bf16.msra.mxu0 0
      %1018 = vmatprep.subr.bf16.mxu0 0
      %1019 = vmatpush1.bf16.msra.mxu0 0
      %1020 = vmatprep.subr.bf16.mxu0 0
      %1021 = vmatpush1.bf16.msra.mxu0 0
      %1022 = vmatprep.subr.bf16.mxu0 0
      %1023 = vmatpush1.bf16.msra.mxu0 %v1004
      %1024 = vmatprep.subr.bf16.mxu0 0
      %1025 = vmatpush1.bf16.msra.mxu0 %v1003
      %1026 = vmatprep.subr.bf16.mxu0 0
      %1027 = vmatpush2.bf16.msra.mxu0 0
      %1028 = vmatprep.subr.bf16.mxu0 0
      %1029 = vmatpush2.bf16.msra.mxu0 0
      %1030 = vmatprep.subr.bf16.mxu0 0
      %1031 = vmatpush2.bf16.msra.mxu0 0
      %1032 = vmatprep.subr.bf16.mxu0 0
      %1033 = vmatpush2.bf16.msra.mxu0 0
      %1034 = vmatprep.subr.bf16.mxu0 0
      %1035 = vmatpush2.bf16.msra.mxu0 0
      %1036 = vmatprep.subr.bf16.mxu0 0
      %1037 = vmatpush2.bf16.msra.mxu0 0
      %1038 = vmatprep.subr.bf16.mxu0 0
      %1039 = vmatpush2.bf16.msra.mxu0 0
      %1040 = vmatprep.subr.bf16.mxu0 0
      %1041 = vmatpush2.bf16.msra.mxu0 0
      %1042 = vmatprep.mubr.bf16.mxu0 0
      %1043 = vmatmul.mubr.bf16.gmra.mxu0 %v1008
      %v1044 = vpop.f32.mrf.mxu0
      %v1045 = vadd.f32 %v993, %v1044
      %v1046 = vpop.f32.mrf.mxu0
      %v1047 = vpop.f32.mrf.mxu0
      %v1048 = vpop.f32.mrf.mxu0
      %1049 = vdwg.mxu0
      %v1050 = vadd.f32 %v387, %v1045
      %vm1051 = vcmask 259072
      %v1052 = vsel %vm1051, %v1050, 0.0
      %1053 = vadd.xlane.f32.xlu0 %v1052
      %v1054 = vpop.xlane.xlu0 %1053
      %v1055 = vrcp.pop 32.0
      %v1056 = vmul.f32 %v1054, %v1055
      %v1057 = vsub.f32 %v1050, %v1056
      %v1058 = vmul.f32 %v1057, %v1057
      %v1059 = vsel %vm1051, %v1058, 0.0
      %1060 = vadd.xlane.f32.xlu0 %v1059
      %v1061 = vpop.xlane.xlu0 %1060
      %v1062 = vmul.f32 %v1061, %v1055
      %v1063 = vadd.f32 %v1062, 1e-05
      %v1064 = vrsqrt.pop %v1063
      %v1065 = vmul.f32 %v1057, %v1064
      %v1066 = vld [vmem:[%s8] sm:$0x1]
      %v1068 = vlaneseq
      %v1069 = vshrl.u32 %v1068, 7
      %v1070 = vsub.s32 0, %v1069
      %v1071 = vrot.slane %v1066, %v1070
      %v1073 = vmul.f32 %v1065, %v1071
      %v1074 = vld [vmem:[%s9] sm:$0x1]
      %v1076 = vlaneseq
      %v1077 = vshrl.u32 %v1076, 7
      %v1078 = vsub.s32 0, %v1077
      %v1079 = vrot.slane %v1074, %v1078
      %v1081 = vadd.f32 %v1073, %v1079
      %1082 = vst.msk [vmem:[%s385] sm:$0x3f] %vm1051, %v1081
      %p1083 = scmp.lt.s32.totalorder %s21, 1
      %s1084 = scalar_select %p1083, %s21, 1
      %s1085 = smul.addr %s1084, 8
      %s1086 = scalar_lea.vmem %s10, %s1085
      // Predicated region
      $region61: #{fwd.18} parent=59 // pred_check
        %p1087 = pneg %p264
      $region62: #{fwd.18} parent=59 // pred_check_branch
        %1089 = sbr.rel (%p1087) target = $region64
      $region63: #{fwd.18} parent=59 // pred_region
        _
      $region64: #{fwd.18} parent=59 // pred_fallthru
        _
    $region60: #{fwd.18} parent=5 // pred_fallthru
      _
    %p1090 = scmp.le.s32.totalorder 2, %s16
    // Predicated region
    $region65: #{fwd.18} parent=5 // pred_check
      %p1091 = pneg %p1090
    $region66: #{fwd.18} parent=5 // pred_check_branch
      %1093 = sbr.rel (%p1091) target = $region68
    $region67: #{fwd.18} parent=5 // pred_region
      %s1094 = ssub.s32 %s16, 2
      // Predicated region
      $region69: #{fwd.18} parent=67 // pred_check
        %p1095 = pneg %p270
      $region70: #{fwd.18} parent=67 // pred_check_branch
        %1097 = sbr.rel (%p1095) target = $region72
      $region71: #{fwd.18} parent=67 // pred_region
        %p1098 = scmp.lt.s32.totalorder %s22, 1
        %s1099 = scalar_select %p1098, %s22, 1
        %s1100 = smul.addr %s1099, 8
        %s1101 = scalar_lea.vmem %s10, %s1100
      $region72: #{fwd.18} parent=67 // pred_fallthru
        _
    $region68: #{fwd.18} parent=5 // pred_fallthru
      _
  $region6: #{fwd.18} parent=0 // loop_footer
    %s20 = sadd.s32 1, %s16
  $region7: #{fwd.18} parent=0 // loop_footer_branch
    %15 = sbr.rel target = $region3
  $region8: #{fwd.18} parent=0 // loop_exit
    _

</llo_original>
